<compile_context>
chip_gen: v5e
topology: v5e:2x2
jax: 0.10.0
libtpu: 0.0.40
codegen_flags: <defaults>
</compile_context>

<pallas_src>
import numpy as np
import jax
import jax.numpy as jnp
from jax.experimental import pallas as pl
from jax.experimental.pallas import tpu as pltpu

jax.config.update("jax_default_matmul_precision", "highest")

B, N, E, T, C, U, L = 2, 8, 32, 8, 4, 32, 8
IU, JU = np.triu_indices(E, k=1)          # strictly-upper-triangular pair order
P = IU.size                               # E*(E-1)/2 cross pairs (same order as PyTorch loops)


# --------------------------------------------------------------------------- #
# Fused forward kernel                                                         #
# --------------------------------------------------------------------------- #
def utpm_kernel(x_ref, wq_ref, bq_ref,
                w5a_ref, w5b_ref, b5_ref,
                si_ref, sjg_ref, a_lin_ref, a_cross_ref, c_ref,
                out_ref):
    x3 = x_ref[...]                                    # (B, N, E)
    x2d = x3.reshape(B * N, E)

    # ---- attention pooling, both heads at once (fc1->fc2 / fc3->fc4 folded) ----
    logits = jnp.dot(x2d, wq_ref[...], preferred_element_type=jnp.float32) + bq_ref[...]
    scores = jnp.exp(logits).reshape(B, N, 2)          # torch.exp(fc2/fc4 output)

    absum = jnp.sum(jnp.abs(x3), axis=2, keepdims=True)           # (B, N, 1)
    pad = jnp.float32(-2.0 ** 32 + 1)
    masked = jnp.where(absum == 0.0, pad, scores)                 # (B, N, 2)

    masked_t = jnp.swapaxes(masked, 1, 2)                         # (B, 2, N)  N on lanes
    m = jnp.max(masked_t, axis=2, keepdims=True)                  # lane reduce
    e = jnp.exp(masked_t - m)
    wgt = e / jnp.sum(e, axis=2, keepdims=True)                   # (B, 2, N) softmax over N

    # weighted pooling of the field embeddings (flash-style batched einsum)
    q = jnp.einsum('bhn,bne->bhe', wgt, x3,
                   preferred_element_type=jnp.float32)            # (B, 2, E)
    q1 = q[:, 0, :]                                               # (B, E)
    q2 = q[:, 1, :]                                               # (B, E)

    # ---- fc5 on concat([q1, q2]) as split-weight matmuls ----
    h5 = (jnp.dot(q1, w5a_ref[...], preferred_element_type=jnp.float32)
          + jnp.dot(q2, w5b_ref[...], preferred_element_type=jnp.float32)
          + b5_ref[...])                                          # (B, E)

    # ---- linear head: fc6 -> fc8 -> label matmul, all folded into a_lin / c ----
    out = jnp.dot(h5, a_lin_ref[...], preferred_element_type=jnp.float32) + c_ref[...]

    # ---- quadratic (CrossFeature) head in sparse pair form ----
    # cross[b, p] = h5[b, i_p] * h5[b, j_p] * <v_{i_p}, v_{j_p}>
    # Si selects column i_p; Sjg selects column j_p with the gram value folded in.
    hi = jnp.dot(h5, si_ref[...], preferred_element_type=jnp.float32)    # (B, P)
    hj = jnp.dot(h5, sjg_ref[...], preferred_element_type=jnp.float32)   # (B, P)
    cross = hi * hj                                                      # (B, P)
    # fc7 -> fc8 -> label matmul folded into the narrow (P, L) weight a_cross.
    out = out + jnp.dot(cross, a_cross_ref[...], preferred_element_type=jnp.float32)

    out_ref[...] = out                                            # (B, L)


# --------------------------------------------------------------------------- #
# One-time (batch-independent) parameter preparation — hoisted out of forward  #
# --------------------------------------------------------------------------- #
def prepare_inputs(p, label_embedding):
    labT = label_embedding.T                                                   # (U, L)

    # Folded attention projections: logits = x @ (W1.T @ W2.T) + b1 @ W2.T (both heads).
    wq = jnp.concatenate([p["w1t"] @ p["w2t"], p["w3t"] @ p["w4t"]], axis=1)   # (E, 2)
    bq = jnp.concatenate([p["b1"] @ p["w2t"], p["b3"] @ p["w4t"]], axis=1)     # (1, 2)

    # fc5 split weights: concat([q1, q2]) @ W5 == q1 @ W5a + q2 @ W5b.
    w5a, w5b = p["w5t"][:E], p["w5t"][E:]

    # fc6/fc7 -> fc8 -> label matmul are all linear, so fold into narrow weights.
    w8a, w8b = p["w8t"][:E], p["w8t"][E:]
    a_lin = p["w6t"] @ (w8a @ labT)                                            # (E, L)
    a_cross = p["w7t"] @ (w8b @ labT)                                          # (P, L)
    c_out = (p["b6"] @ w8a + p["b7"] @ w8b + p["b8"]) @ labT                   # (1, L)

    # Precomputed gram + pair-selection matrices (gram folded into the j-selector).
    # TODO(synk): at real scale (E=300, P~45k) dense (E,P) selectors are ~54 MB each;
    # K-tile the pair axis and generate outer-product blocks on the fly instead.
    gram = p["v"] @ p["v"].T                                                   # (E, E)
    gram_pairs = gram[IU, JU]                                                  # (P,)
    si_np = np.zeros((E, P), np.float32)
    sj_np = np.zeros((E, P), np.float32)
    si_np[IU, np.arange(P)] = 1.0
    sj_np[JU, np.arange(P)] = 1.0
    si = jnp.asarray(si_np)
    sjg = jnp.asarray(sj_np) * gram_pairs[None, :]

    return dict(wq=wq, bq=bq, w5a=w5a, w5b=w5b, b5=p["b5"],
                si=si, sjg=sjg, a_lin=a_lin, a_cross=a_cross, c_out=c_out)


# --------------------------------------------------------------------------- #
# Wrapper — single fused pallas_call, fully VMEM-resident at toy scale          #
# --------------------------------------------------------------------------- #
def utpm_forward(x, prep):
    ins = (x, prep["wq"], prep["bq"],
           prep["w5a"], prep["w5b"], prep["b5"],
           prep["si"], prep["sjg"], prep["a_lin"], prep["a_cross"], prep["c_out"])
    return pl.pallas_call(
        utpm_kernel,
        out_shape=jax.ShapeDtypeStruct((B, L), jnp.float32),
        in_specs=[pl.BlockSpec(memory_space=pltpu.MemorySpace.VMEM) for _ in ins],
        out_specs=pl.BlockSpec(memory_space=pltpu.MemorySpace.VMEM),
    )(*ins)


# --------------------------------------------------------------------------- #
# Deterministic parameter init (torch.nn.Linear-style uniform; v ~ U[0,1))     #
# --------------------------------------------------------------------------- #
def init_params(key):
    ks = jax.random.split(key, 15)

    def lin(kw, kb, fin, fout, bias=True):
        bound = 1.0 / (fin ** 0.5)
        w = jax.random.uniform(kw, (fin, fout), jnp.float32, -bound, bound)
        b = (jax.random.uniform(kb, (1, fout), jnp.float32, -bound, bound)
             if bias else None)
        return w, b

    w1t, b1 = lin(ks[0], ks[1], E, T)
    w2t, _ = lin(ks[2], ks[2], T, 1, bias=False)
    w3t, b3 = lin(ks[3], ks[4], E, T)
    w4t, _ = lin(ks[5], ks[5], T, 1, bias=False)
    w5t, b5 = lin(ks[6], ks[7], 2 * E, E)
    w6t, b6 = lin(ks[8], ks[9], E, E)
    w7t, b7 = lin(ks[10], ks[11], P, E)
    w8t, b8 = lin(ks[12], ks[13], 2 * E, U)
    v = jax.random.uniform(ks[14], (E, C), jnp.float32)   # torch.rand(E, C)
    return dict(w1t=w1t, b1=b1, w2t=w2t, w3t=w3t, b3=b3, w4t=w4t,
                w5t=w5t, b5=b5, w6t=w6t, b6=b6, w7t=w7t, b7=b7,
                w8t=w8t, b8=b8, v=v)


# --------------------------------------------------------------------------- #
# Pure-JAX reference (mirrors the PyTorch forward, no folding)                  #
# --------------------------------------------------------------------------- #
def utpm_reference(x, lab, p):
    def attend(wt, b, w2t):
        h = jnp.einsum("bne,et->bnt", x, wt) + b[0]
        s = jnp.exp(jnp.einsum("bnt,to->bno", h, w2t))                    # (B, N, 1)
        sgn = jnp.sign(jnp.sum(jnp.abs(x), axis=2))[:, :, None]
        masked = jnp.where(sgn == 0, jnp.float32(-2.0 ** 32 + 1), s)
        w = jax.nn.softmax(masked, axis=1)
        return jnp.einsum("bne,bno->be", x, w)

    q1 = attend(p["w1t"], p["b1"], p["w2t"])
    q2 = attend(p["w3t"], p["b3"], p["w4t"])
    h5 = jnp.concatenate([q1, q2], axis=1) @ p["w5t"] + p["b5"][0]
    fc6 = h5 @ p["w6t"] + p["b6"][0]
    gram = p["v"] @ p["v"].T
    cross = h5[:, IU] * h5[:, JU] * gram[IU, JU][None, :]                 # (B, P)
    fc7 = cross @ p["w7t"] + p["b7"][0]
    fc8 = jnp.concatenate([fc6, fc7], axis=1) @ p["w8t"] + p["b8"][0]
    return fc8 @ lab.T                                                    # (B, L)


if __name__ == "__main__":
    key = jax.random.PRNGKey(0)
    kx, kl, kp = jax.random.split(key, 3)
    x = jax.random.normal(kx, (B, N, E), jnp.float32)
    label_embedding = jax.random.normal(kl, (L, U), jnp.float32)
    params = init_params(kp)

    prep = prepare_inputs(params, label_embedding)     # one-time, batch-independent
    out = jax.block_until_ready(utpm_forward(x, prep))
    assert out.shape == (B, L), out.shape

    ref = utpm_reference(x, label_embedding, params)
    if not bool(jnp.allclose(out, ref, rtol=2e-2, atol=2e-2)):
        raise AssertionError(f"mismatch: max abs err = {jnp.max(jnp.abs(out - ref))}")

    print("KERNEL_OK")
</pallas_src>

<mosaic_0001>
module attributes {stable_mosaic.version = 11 : i64} {
  func.func @utpm_kernel(%arg0: memref<2x8x32xf32, #tpu.memory_space<vmem>>, %arg1: memref<32x2xf32, #tpu.memory_space<vmem>>, %arg2: memref<1x2xf32, #tpu.memory_space<vmem>>, %arg3: memref<32x32xf32, #tpu.memory_space<vmem>>, %arg4: memref<32x32xf32, #tpu.memory_space<vmem>>, %arg5: memref<1x32xf32, #tpu.memory_space<vmem>>, %arg6: memref<32x496xf32, #tpu.memory_space<vmem>>, %arg7: memref<32x496xf32, #tpu.memory_space<vmem>>, %arg8: memref<32x8xf32, #tpu.memory_space<vmem>>, %arg9: memref<496x8xf32, #tpu.memory_space<vmem>>, %arg10: memref<1x8xf32, #tpu.memory_space<vmem>>, %arg11: memref<2x8xf32, #tpu.memory_space<vmem>>) attributes {dimension_semantics = [], scalar_prefetch = 0 : i64, scratch_operands = 0 : i64, tpu.core_type = #tpu.core_type<tc>} {
    %c0 = arith.constant 0 : index
    %c0_0 = arith.constant 0 : index
    %c0_1 = arith.constant 0 : index
    %0 = vector.load %arg0[%c0, %c0_0, %c0_1] : memref<2x8x32xf32, #tpu.memory_space<vmem>>, vector<2x8x32xf32>
    %1 = vector.shape_cast %0 : vector<2x8x32xf32> to vector<16x32xf32>
    %c0_2 = arith.constant 0 : index
    %c0_3 = arith.constant 0 : index
    %2 = vector.load %arg1[%c0_2, %c0_3] : memref<32x2xf32, #tpu.memory_space<vmem>>, vector<32x2xf32>
    %cst = arith.constant dense<0.000000e+00> : vector<16x2xf32>
    %3 = tpu.matmul %1, %2, %cst {dimension_numbers = #tpu.dot_dimension_numbers<[1], [0], [0], [1], [0, 0, 1, 1], [], []>, precision = #tpu.contract_precision<fp32>} : vector<16x32xf32>, vector<32x2xf32>, vector<16x2xf32> -> vector<16x2xf32>
    %c0_4 = arith.constant 0 : index
    %c0_5 = arith.constant 0 : index
    %4 = vector.load %arg2[%c0_4, %c0_5] : memref<1x2xf32, #tpu.memory_space<vmem>>, vector<1x2xf32>
    %5 = vector.broadcast %4 : vector<1x2xf32> to vector<16x2xf32>
    %6 = arith.addf %3, %5 : vector<16x2xf32>
    %7 = math.exp %6 : vector<16x2xf32>
    %8 = vector.shape_cast %7 : vector<16x2xf32> to vector<2x8x2xf32>
    %9 = math.absf %0 : vector<2x8x32xf32>
    %cst_6 = arith.constant dense<0.000000e+00> : vector<2x8xf32>
    %10 = vector.multi_reduction <add>, %9, %cst_6 [2] : vector<2x8x32xf32> to vector<2x8xf32>
    %11 = vector.shape_cast %10 : vector<2x8xf32> to vector<2x8x1xf32>
    %cst_7 = arith.constant 0.000000e+00 : f32
    %12 = vector.broadcast %cst_7 : f32 to vector<2x8x1xf32>
    %13 = arith.cmpf oeq, %11, %12 : vector<2x8x1xf32>
    %cst_8 = arith.constant -4.2949673E+9 : f32
    %14 = vector.shape_cast %13 : vector<2x8x1xi1> to vector<2x8x1xi1>
    %15 = vector.broadcast %14 : vector<2x8x1xi1> to vector<2x8x2xi1>
    %16 = vector.broadcast %cst_8 : f32 to vector<2x8x2xf32>
    %17 = arith.select %15, %16, %8 : vector<2x8x2xi1>, vector<2x8x2xf32>
    %18 = tpu.transpose %17, [0, 2, 1] : vector<2x8x2xf32> -> vector<2x2x8xf32>
    %cst_9 = arith.constant dense<0xFF800000> : vector<2x2xf32>
    %19 = vector.multi_reduction <maximumf>, %18, %cst_9 [2] : vector<2x2x8xf32> to vector<2x2xf32>
    %20 = vector.shape_cast %19 : vector<2x2xf32> to vector<2x2x1xf32>
    %21 = vector.broadcast %20 : vector<2x2x1xf32> to vector<2x2x8xf32>
    %22 = arith.subf %18, %21 : vector<2x2x8xf32>
    %23 = math.exp %22 : vector<2x2x8xf32>
    %cst_10 = arith.constant dense<0.000000e+00> : vector<2x2xf32>
    %24 = vector.multi_reduction <add>, %23, %cst_10 [2] : vector<2x2x8xf32> to vector<2x2xf32>
    %25 = vector.shape_cast %24 : vector<2x2xf32> to vector<2x2x1xf32>
    %26 = vector.broadcast %25 : vector<2x2x1xf32> to vector<2x2x8xf32>
    %27 = arith.divf %23, %26 : vector<2x2x8xf32>
    "tpu.trace_start"() <{level = 10 : i32, message = "bhn,bne->bhe"}> : () -> ()
    %cst_11 = arith.constant dense<0.000000e+00> : vector<2x2x32xf32>
    %28 = tpu.matmul %27, %0, %cst_11 {dimension_numbers = #tpu.dot_dimension_numbers<[2], [1], [1], [2], [0, 0, 0, 1, 1, 2], [0], [0]>, precision = #tpu.contract_precision<fp32>} : vector<2x2x8xf32>, vector<2x8x32xf32>, vector<2x2x32xf32> -> vector<2x2x32xf32>
    "tpu.trace_stop"() : () -> ()
    %29 = vector.extract_strided_slice %28 {offsets = [0, 0, 0], sizes = [2, 1, 32], strides = [1, 1, 1]} : vector<2x2x32xf32> to vector<2x1x32xf32>
    %30 = vector.shape_cast %29 : vector<2x1x32xf32> to vector<2x32xf32>
    %31 = vector.extract_strided_slice %28 {offsets = [0, 1, 0], sizes = [2, 1, 32], strides = [1, 1, 1]} : vector<2x2x32xf32> to vector<2x1x32xf32>
    %32 = vector.shape_cast %31 : vector<2x1x32xf32> to vector<2x32xf32>
    %c0_12 = arith.constant 0 : index
    %c0_13 = arith.constant 0 : index
    %33 = vector.load %arg3[%c0_12, %c0_13] : memref<32x32xf32, #tpu.memory_space<vmem>>, vector<32x32xf32>
    %cst_14 = arith.constant dense<0.000000e+00> : vector<2x32xf32>
    %34 = tpu.matmul %30, %33, %cst_14 {dimension_numbers = #tpu.dot_dimension_numbers<[1], [0], [0], [1], [0, 0, 1, 1], [], []>, precision = #tpu.contract_precision<fp32>} : vector<2x32xf32>, vector<32x32xf32>, vector<2x32xf32> -> vector<2x32xf32>
    %c0_15 = arith.constant 0 : index
    %c0_16 = arith.constant 0 : index
    %35 = vector.load %arg4[%c0_15, %c0_16] : memref<32x32xf32, #tpu.memory_space<vmem>>, vector<32x32xf32>
    %cst_17 = arith.constant dense<0.000000e+00> : vector<2x32xf32>
    %36 = tpu.matmul %32, %35, %cst_17 {dimension_numbers = #tpu.dot_dimension_numbers<[1], [0], [0], [1], [0, 0, 1, 1], [], []>, precision = #tpu.contract_precision<fp32>} : vector<2x32xf32>, vector<32x32xf32>, vector<2x32xf32> -> vector<2x32xf32>
    %37 = arith.addf %34, %36 : vector<2x32xf32>
    %c0_18 = arith.constant 0 : index
    %c0_19 = arith.constant 0 : index
    %38 = vector.load %arg5[%c0_18, %c0_19] : memref<1x32xf32, #tpu.memory_space<vmem>>, vector<1x32xf32>
    %39 = vector.broadcast %38 : vector<1x32xf32> to vector<2x32xf32>
    %40 = arith.addf %37, %39 : vector<2x32xf32>
    %c0_20 = arith.constant 0 : index
    %c0_21 = arith.constant 0 : index
    %41 = vector.load %arg8[%c0_20, %c0_21] : memref<32x8xf32, #tpu.memory_space<vmem>>, vector<32x8xf32>
    %cst_22 = arith.constant dense<0.000000e+00> : vector<2x8xf32>
    %42 = tpu.matmul %40, %41, %cst_22 {dimension_numbers = #tpu.dot_dimension_numbers<[1], [0], [0], [1], [0, 0, 1, 1], [], []>, precision = #tpu.contract_precision<fp32>} : vector<2x32xf32>, vector<32x8xf32>, vector<2x8xf32> -> vector<2x8xf32>
    %c0_23 = arith.constant 0 : index
    %c0_24 = arith.constant 0 : index
    %43 = vector.load %arg10[%c0_23, %c0_24] : memref<1x8xf32, #tpu.memory_space<vmem>>, vector<1x8xf32>
    %44 = vector.broadcast %43 : vector<1x8xf32> to vector<2x8xf32>
    %45 = arith.addf %42, %44 : vector<2x8xf32>
    %c0_25 = arith.constant 0 : index
    %c0_26 = arith.constant 0 : index
    %46 = vector.load %arg6[%c0_25, %c0_26] : memref<32x496xf32, #tpu.memory_space<vmem>>, vector<32x496xf32>
    %cst_27 = arith.constant dense<0.000000e+00> : vector<2x496xf32>
    %47 = tpu.matmul %40, %46, %cst_27 {dimension_numbers = #tpu.dot_dimension_numbers<[1], [0], [0], [1], [0, 0, 1, 1], [], []>, precision = #tpu.contract_precision<fp32>} : vector<2x32xf32>, vector<32x496xf32>, vector<2x496xf32> -> vector<2x496xf32>
    %c0_28 = arith.constant 0 : index
    %c0_29 = arith.constant 0 : index
    %48 = vector.load %arg7[%c0_28, %c0_29] : memref<32x496xf32, #tpu.memory_space<vmem>>, vector<32x496xf32>
    %cst_30 = arith.constant dense<0.000000e+00> : vector<2x496xf32>
    %49 = tpu.matmul %40, %48, %cst_30 {dimension_numbers = #tpu.dot_dimension_numbers<[1], [0], [0], [1], [0, 0, 1, 1], [], []>, precision = #tpu.contract_precision<fp32>} : vector<2x32xf32>, vector<32x496xf32>, vector<2x496xf32> -> vector<2x496xf32>
    %50 = arith.mulf %47, %49 : vector<2x496xf32>
    %c0_31 = arith.constant 0 : index
    %c0_32 = arith.constant 0 : index
    %51 = vector.load %arg9[%c0_31, %c0_32] : memref<496x8xf32, #tpu.memory_space<vmem>>, vector<496x8xf32>
    %cst_33 = arith.constant dense<0.000000e+00> : vector<2x8xf32>
    %52 = tpu.matmul %50, %51, %cst_33 {dimension_numbers = #tpu.dot_dimension_numbers<[1], [0], [0], [1], [0, 0, 1, 1], [], []>, precision = #tpu.contract_precision<fp32>} : vector<2x496xf32>, vector<496x8xf32>, vector<2x8xf32> -> vector<2x8xf32>
    %53 = arith.addf %45, %52 : vector<2x8xf32>
    %c0_34 = arith.constant 0 : index
    %c0_35 = arith.constant 0 : index
    %54 = vector.load %arg11[%c0_34, %c0_35] : memref<2x8xf32, #tpu.memory_space<vmem>>, vector<2x8xf32>
    tpu.vector_store %arg11[%c0_34, %c0_35], %53 {strides = array<i32>} : memref<2x8xf32, #tpu.memory_space<vmem>>, vector<2x8xf32>,
    return
  }
}

</mosaic_0001>

<llo_original>
// kernel: tpu_custom_call.1
$region0: #{tpu_custom_call.1}
  #allocation0 [shape = 'u32[]', space=smem, size = 0x4, offset = 0x4, fixed_abs, tag = 'smem constant byte address 0x4 - core index']
  #allocation1 [shape = 'u32[72,128]{1,0:T(1,128)}', space=vmem, size = 0x9000, scoped, tag = 'internal scratch']
  %s0 = inlined_call_operand.vmem [shape: f32[2,8,32], index: 0, kind: input, shape index: {}]
  %s1 = inlined_call_operand.vmem [shape: f32[32,2], index: 1, kind: input, shape index: {}]
  %s2 = inlined_call_operand.vmem [shape: f32[1,2], index: 2, kind: input, shape index: {}]
  %s3 = inlined_call_operand.vmem [shape: f32[32,32], index: 3, kind: input, shape index: {}]
  %s4 = inlined_call_operand.vmem [shape: f32[32,32], index: 4, kind: input, shape index: {}]
  %s5 = inlined_call_operand.vmem [shape: f32[1,32], index: 5, kind: input, shape index: {}]
  %s6 = inlined_call_operand.vmem [shape: f32[32,496], index: 6, kind: input, shape index: {}]
  %s7 = inlined_call_operand.vmem [shape: f32[32,496], index: 7, kind: input, shape index: {}]
  %s8 = inlined_call_operand.vmem [shape: f32[32,8], index: 8, kind: input, shape index: {}]
  %s9 = inlined_call_operand.vmem [shape: f32[496,8], index: 9, kind: input, shape index: {}]
  %s10 = inlined_call_operand.vmem [shape: f32[1,8], index: 10, kind: input, shape index: {}]
  %s11 = inlined_call_operand.hbm [shape: f32[2,8], index: 11, kind: output, shape index: {}]
  %s12 = sld [smem:[#allocation0]]
  $region54: #{tpu_custom_call.1} parent=0
    _
  %s14 = ssub.s32 1, %s12
  %s15 = scalar_select 0, %s14, %s12
  $region1: #{tpu_custom_call.1} parent=0
    #allocation2 [shape = 'u8[1024]{0}', space=vmem, size = 0x400, scoped, tag = 'output window, operand 0, single buffered']
    #allocation3 [shape = 's32[1]{0}', space=sflag, size = 0x4, scoped, tag = 'scoped memory for tpu_custom_call.1']
    %16 = vsyncpa [#allocation3], 0
    // Predicated region
    $region2: #{tpu_custom_call.1} parent=1 // pred_check
      _
    $region3: #{tpu_custom_call.1} parent=1 // pred_check_branch
      %18 = sbr.rel (0) target = $region5
    $region4: #{tpu_custom_call.1} parent=1 // pred_region
      _
    $region5: #{tpu_custom_call.1} parent=1 // pred_fallthru
      _
    // Predicated region
    $region6: #{tpu_custom_call.1} parent=1 // pred_check
      _
    $region7: #{tpu_custom_call.1} parent=1 // pred_check_branch
      %20 = sbr.rel (0) target = $region9
    $region8: #{tpu_custom_call.1} parent=1 // pred_region
      _
    $region9: #{tpu_custom_call.1} parent=1 // pred_fallthru
      _
    // Predicated region
    $region10: #{tpu_custom_call.1} parent=1 // pred_check
      _
    $region11: #{tpu_custom_call.1} parent=1 // pred_check_branch
      %22 = sbr.rel (0) target = $region13
    $region12: #{tpu_custom_call.1} parent=1 // pred_region
      _
    $region13: #{tpu_custom_call.1} parent=1 // pred_fallthru
      _
    // Predicated region
    $region14: #{tpu_custom_call.1} parent=1 // pred_check
      _
    $region15: #{tpu_custom_call.1} parent=1 // pred_check_branch
      %24 = sbr.rel (0) target = $region17
    $region16: #{tpu_custom_call.1} parent=1 // pred_region
      _
    $region17: #{tpu_custom_call.1} parent=1 // pred_fallthru
      _
    // Predicated region
    $region18: #{tpu_custom_call.1} parent=1 // pred_check
      _
    $region19: #{tpu_custom_call.1} parent=1 // pred_check_branch
      %26 = sbr.rel (0) target = $region21
    $region20: #{tpu_custom_call.1} parent=1 // pred_region
      _
    $region21: #{tpu_custom_call.1} parent=1 // pred_fallthru
      _
    // Predicated region
    $region22: #{tpu_custom_call.1} parent=1 // pred_check
      _
    $region23: #{tpu_custom_call.1} parent=1 // pred_check_branch
      %28 = sbr.rel (0) target = $region25
    $region24: #{tpu_custom_call.1} parent=1 // pred_region
      _
    $region25: #{tpu_custom_call.1} parent=1 // pred_fallthru
      _
    // Predicated region
    $region26: #{tpu_custom_call.1} parent=1 // pred_check
      _
    $region27: #{tpu_custom_call.1} parent=1 // pred_check_branch
      %30 = sbr.rel (0) target = $region29
    $region28: #{tpu_custom_call.1} parent=1 // pred_region
      _
    $region29: #{tpu_custom_call.1} parent=1 // pred_fallthru
      _
    // Predicated region
    $region30: #{tpu_custom_call.1} parent=1 // pred_check
      _
    $region31: #{tpu_custom_call.1} parent=1 // pred_check_branch
      %32 = sbr.rel (0) target = $region33
    $region32: #{tpu_custom_call.1} parent=1 // pred_region
      _
    $region33: #{tpu_custom_call.1} parent=1 // pred_fallthru
      _
    // Predicated region
    $region34: #{tpu_custom_call.1} parent=1 // pred_check
      _
    $region35: #{tpu_custom_call.1} parent=1 // pred_check_branch
      %34 = sbr.rel (0) target = $region37
    $region36: #{tpu_custom_call.1} parent=1 // pred_region
      _
    $region37: #{tpu_custom_call.1} parent=1 // pred_fallthru
      _
    // Predicated region
    $region38: #{tpu_custom_call.1} parent=1 // pred_check
      _
    $region39: #{tpu_custom_call.1} parent=1 // pred_check_branch
      %36 = sbr.rel (0) target = $region41
    $region40: #{tpu_custom_call.1} parent=1 // pred_region
      _
    $region41: #{tpu_custom_call.1} parent=1 // pred_fallthru
      _
    // Predicated region
    $region42: #{tpu_custom_call.1} parent=1 // pred_check
      _
    $region43: #{tpu_custom_call.1} parent=1 // pred_check_branch
      %38 = sbr.rel (0) target = $region45
    $region44: #{tpu_custom_call.1} parent=1 // pred_region
      _
    $region45: #{tpu_custom_call.1} parent=1 // pred_fallthru
      _
    %v39 = vld [vmem:[%s0] sm:$0xff]
    %v40 = vld [vmem:[%s0 + $0x8] sm:$0xff]
    %v41 = vld [vmem:[%s1] sm:$0xff]
    %v42 = vld [vmem:[%s1 + $0x8] sm:$0xff]
    %v43 = vld [vmem:[%s1 + $0x10] sm:$0xff]
    %v44 = vld [vmem:[%s1 + $0x18] sm:$0xff]
    %v45 = vld [vmem:[%s2] sm:$0x1]
    %v47 = vperm.slane %v45, 0
    %vm49 = vcmask 261120
    %v51 = vsel %vm49, %v39, 0
    %v54 = vsel %vm49, %v40, 0
    %56 = vmatpush.msra.mxu0 0.0
    %57 = vmatpush.msra.mxu0 0.0
    %58 = vmatpush.msra.mxu0 0.0
    %59 = vmatpush.msra.mxu0 0.0
    %60 = vmatpush.msra.mxu0 0.0
    %61 = vmatpush.msra.mxu0 0.0
    %62 = vmatpush.msra.mxu0 0.0
    %63 = vmatpush.msra.mxu0 0.0
    %64 = vmatpush.msra.mxu0 0.0
    %65 = vmatpush.msra.mxu0 0.0
    %66 = vmatpush.msra.mxu0 0.0
    %67 = vmatpush.msra.mxu0 0.0
    %v68 = vand.u32 %v44, 4294901760
    %69 = vmatpush.msra.mxu0 %v68
    %v70 = vand.u32 %v43, 4294901760
    %71 = vmatpush.msra.mxu0 %v70
    %v72 = vand.u32 %v42, 4294901760
    %73 = vmatpush.msra.mxu0 %v72
    %v74 = vand.u32 %v41, 4294901760
    %75 = vmatpush.msra.mxu0 %v74
    %v76 = vand.u32 %v51, 4294901760
    %v77 = vsub.f32 %v51, %v76
    %v78 = vand.u32 %v77, 4294901760
    %v79 = vsub.f32 %v77, %v78
    %v80 = vand.u32 %v79, 4294901760
    %81 = vmatmul.f32.gmra.mxu0 %v80
    %v82 = vpop.f32.mrf.mxu0
    %v83 = vadd.f32 %v47, %v82
    %v84 = vand.u32 %v54, 4294901760
    %v85 = vsub.f32 %v54, %v84
    %v86 = vand.u32 %v85, 4294901760
    %v87 = vsub.f32 %v85, %v86
    %v88 = vand.u32 %v87, 4294901760
    %89 = vmatmul.f32.gmra.mxu0 %v88
    %v90 = vpop.f32.mrf.mxu0
    %v91 = vadd.f32 %v47, %v90
    %92 = vdwg.mxu0
    %93 = vmatpush.msra.mxu0 0.0
    %94 = vmatpush.msra.mxu0 0.0
    %95 = vmatpush.msra.mxu0 0.0
    %96 = vmatpush.msra.mxu0 0.0
    %97 = vmatpush.msra.mxu0 0.0
    %98 = vmatpush.msra.mxu0 0.0
    %99 = vmatpush.msra.mxu0 0.0
    %100 = vmatpush.msra.mxu0 0.0
    %101 = vmatpush.msra.mxu0 0.0
    %102 = vmatpush.msra.mxu0 0.0
    %103 = vmatpush.msra.mxu0 0.0
    %104 = vmatpush.msra.mxu0 0.0
    %v105 = vand.u32 %v44, 4294901760
    %v106 = vsub.f32 %v44, %v105
    %v107 = vand.u32 %v106, 4294901760
    %v108 = vsub.f32 %v106, %v107
    %v109 = vand.u32 %v108, 4294901760
    %110 = vmatpush.msra.mxu0 %v109
    %v111 = vand.u32 %v43, 4294901760
    %v112 = vsub.f32 %v43, %v111
    %v113 = vand.u32 %v112, 4294901760
    %v114 = vsub.f32 %v112, %v113
    %v115 = vand.u32 %v114, 4294901760
    %116 = vmatpush.msra.mxu0 %v115
    %v117 = vand.u32 %v42, 4294901760
    %v118 = vsub.f32 %v42, %v117
    %v119 = vand.u32 %v118, 4294901760
    %v120 = vsub.f32 %v118, %v119
    %v121 = vand.u32 %v120, 4294901760
    %122 = vmatpush.msra.mxu0 %v121
    %v123 = vand.u32 %v41, 4294901760
    %v124 = vsub.f32 %v41, %v123
    %v125 = vand.u32 %v124, 4294901760
    %v126 = vsub.f32 %v124, %v125
    %v127 = vand.u32 %v126, 4294901760
    %128 = vmatpush.msra.mxu0 %v127
    %v129 = vand.u32 %v51, 4294901760
    %130 = vmatmul.f32.gmra.mxu0 %v129
    %v131 = vpop.f32.mrf.mxu0
    %v132 = vadd.f32 %v83, %v131
    %v133 = vand.u32 %v54, 4294901760
    %134 = vmatmul.f32.gmra.mxu0 %v133
    %v135 = vpop.f32.mrf.mxu0
    %v136 = vadd.f32 %v91, %v135
    %137 = vdwg.mxu0
    %138 = vmatpush.msra.mxu0 0.0
    %139 = vmatpush.msra.mxu0 0.0
    %140 = vmatpush.msra.mxu0 0.0
    %141 = vmatpush.msra.mxu0 0.0
    %142 = vmatpush.msra.mxu0 0.0
    %143 = vmatpush.msra.mxu0 0.0
    %144 = vmatpush.msra.mxu0 0.0
    %145 = vmatpush.msra.mxu0 0.0
    %146 = vmatpush.msra.mxu0 0.0
    %147 = vmatpush.msra.mxu0 0.0
    %148 = vmatpush.msra.mxu0 0.0
    %149 = vmatpush.msra.mxu0 0.0
    %v150 = vand.u32 %v44, 4294901760
    %v151 = vsub.f32 %v44, %v150
    %152 = vmatpush.msra.mxu0 %v151
    %v153 = vand.u32 %v43, 4294901760
    %v154 = vsub.f32 %v43, %v153
    %155 = vmatpush.msra.mxu0 %v154
    %v156 = vand.u32 %v42, 4294901760
    %v157 = vsub.f32 %v42, %v156
    %158 = vmatpush.msra.mxu0 %v157
    %v159 = vand.u32 %v41, 4294901760
    %v160 = vsub.f32 %v41, %v159
    %161 = vmatpush.msra.mxu0 %v160
    %v162 = vand.u32 %v51, 4294901760
    %v163 = vsub.f32 %v51, %v162
    %164 = vmatmul.f32.gmra.mxu0 %v163
    %v165 = vpop.f32.mrf.mxu0
    %v166 = vadd.f32 %v132, %v165
    %v167 = vand.u32 %v54, 4294901760
    %v168 = vsub.f32 %v54, %v167
    %169 = vmatmul.f32.gmra.mxu0 %v168
    %v170 = vpop.f32.mrf.mxu0
    %v171 = vadd.f32 %v136, %v170
    %172 = vdwg.mxu0
    %173 = vmatpush.msra.mxu0 0.0
    %174 = vmatpush.msra.mxu0 0.0
    %175 = vmatpush.msra.mxu0 0.0
    %176 = vmatpush.msra.mxu0 0.0
    %177 = vmatpush.msra.mxu0 0.0
    %178 = vmatpush.msra.mxu0 0.0
    %179 = vmatpush.msra.mxu0 0.0
    %180 = vmatpush.msra.mxu0 0.0
    %181 = vmatpush.msra.mxu0 0.0
    %182 = vmatpush.msra.mxu0 0.0
    %183 = vmatpush.msra.mxu0 0.0
    %184 = vmatpush.msra.mxu0 0.0
    %v185 = vand.u32 %v44, 4294901760
    %186 = vmatpush.msra.mxu0 %v185
    %v187 = vand.u32 %v43, 4294901760
    %188 = vmatpush.msra.mxu0 %v187
    %v189 = vand.u32 %v42, 4294901760
    %190 = vmatpush.msra.mxu0 %v189
    %v191 = vand.u32 %v41, 4294901760
    %192 = vmatpush.msra.mxu0 %v191
    %v193 = vand.u32 %v51, 4294901760
    %v194 = vsub.f32 %v51, %v193
    %v195 = vand.u32 %v194, 4294901760
    %196 = vmatmul.f32.gmra.mxu0 %v195
    %v197 = vpop.f32.mrf.mxu0
    %v198 = vadd.f32 %v166, %v197
    %v199 = vand.u32 %v54, 4294901760
    %v200 = vsub.f32 %v54, %v199
    %v201 = vand.u32 %v200, 4294901760
    %202 = vmatmul.f32.gmra.mxu0 %v201
    %v203 = vpop.f32.mrf.mxu0
    %v204 = vadd.f32 %v171, %v203
    %205 = vdwg.mxu0
    %206 = vmatpush.msra.mxu0 0.0
    %207 = vmatpush.msra.mxu0 0.0
    %208 = vmatpush.msra.mxu0 0.0
    %209 = vmatpush.msra.mxu0 0.0
    %210 = vmatpush.msra.mxu0 0.0
    %211 = vmatpush.msra.mxu0 0.0
    %212 = vmatpush.msra.mxu0 0.0
    %213 = vmatpush.msra.mxu0 0.0
    %214 = vmatpush.msra.mxu0 0.0
    %215 = vmatpush.msra.mxu0 0.0
    %216 = vmatpush.msra.mxu0 0.0
    %217 = vmatpush.msra.mxu0 0.0
    %v218 = vand.u32 %v44, 4294901760
    %v219 = vsub.f32 %v44, %v218
    %v220 = vand.u32 %v219, 4294901760
    %221 = vmatpush.msra.mxu0 %v220
    %v222 = vand.u32 %v43, 4294901760
    %v223 = vsub.f32 %v43, %v222
    %v224 = vand.u32 %v223, 4294901760
    %225 = vmatpush.msra.mxu0 %v224
    %v226 = vand.u32 %v42, 4294901760
    %v227 = vsub.f32 %v42, %v226
    %v228 = vand.u32 %v227, 4294901760
    %229 = vmatpush.msra.mxu0 %v228
    %v230 = vand.u32 %v41, 4294901760
    %v231 = vsub.f32 %v41, %v230
    %v232 = vand.u32 %v231, 4294901760
    %233 = vmatpush.msra.mxu0 %v232
    %v234 = vand.u32 %v51, 4294901760
    %235 = vmatmul.f32.gmra.mxu0 %v234
    %v236 = vpop.f32.mrf.mxu0
    %v237 = vadd.f32 %v198, %v236
    %v238 = vand.u32 %v54, 4294901760
    %239 = vmatmul.f32.gmra.mxu0 %v238
    %v240 = vpop.f32.mrf.mxu0
    %v241 = vadd.f32 %v204, %v240
    %242 = vdwg.mxu0
    %243 = vmatpush.msra.mxu0 0.0
    %244 = vmatpush.msra.mxu0 0.0
    %245 = vmatpush.msra.mxu0 0.0
    %246 = vmatpush.msra.mxu0 0.0
    %247 = vmatpush.msra.mxu0 0.0
    %248 = vmatpush.msra.mxu0 0.0
    %249 = vmatpush.msra.mxu0 0.0
    %250 = vmatpush.msra.mxu0 0.0
    %251 = vmatpush.msra.mxu0 0.0
    %252 = vmatpush.msra.mxu0 0.0
    %253 = vmatpush.msra.mxu0 0.0
    %254 = vmatpush.msra.mxu0 0.0
    %v255 = vand.u32 %v44, 4294901760
    %256 = vmatpush.msra.mxu0 %v255
    %v257 = vand.u32 %v43, 4294901760
    %258 = vmatpush.msra.mxu0 %v257
    %v259 = vand.u32 %v42, 4294901760
    %260 = vmatpush.msra.mxu0 %v259
    %v261 = vand.u32 %v41, 4294901760
    %262 = vmatpush.msra.mxu0 %v261
    %v263 = vand.u32 %v51, 4294901760
    %264 = vmatmul.f32.gmra.mxu0 %v263
    %v265 = vpop.f32.mrf.mxu0
    %v266 = vadd.f32 %v237, %v265
    %v267 = vand.u32 %v54, 4294901760
    %268 = vmatmul.f32.gmra.mxu0 %v267
    %v269 = vpop.f32.mrf.mxu0
    %v270 = vadd.f32 %v241, %v269
    %271 = vdwg.mxu0
    %v272 = vmul.f32 %v266, 1.442695
    %v273 = vpow.pop %v272
    %v274 = vmul.f32 %v270, 1.442695
    %v275 = vpow.pop %v274
    %v276 = vand.u32 2147483647, %v39
    %v277 = vand.u32 2147483647, %v40
    %v278 = vsel %vm49, %v276, 0.0
    %279 = vadd.xlane.f32.xlu0 %v278
    %v280 = vpop.xlane.xlu0 %279
    %v281 = vsel %vm49, %v277, 0.0
    %282 = vadd.xlane.f32.xlu0 %v281
    %v283 = vpop.xlane.xlu0 %282
    %vm284 = vcmp.eq.f32.partialorder %v280, 0.0
    %vm285 = vcmp.eq.f32.partialorder %v283, 0.0
    %v286 = vsel %vm284, 1, 0
    %v287 = vsel %vm285, 1, 0
    %vm288 = vcmp.eq.s32.totalorder %v286, 1
    %vm289 = vcmp.eq.s32.totalorder %v287, 1
    %v290 = vsel %vm288, -4.2949673e+09, %v273
    %v291 = vsel %vm289, -4.2949673e+09, %v275
    %292 = vxpose.xlu0.b32.start [1/16] %v290, 128
    %293 = vxpose.xlu0.b32.cont [2/16] 0.0, 128
    %294 = vxpose.xlu0.b32.cont [3/16] 0.0, 128
    %295 = vxpose.xlu0.b32.cont [4/16] 0.0, 128
    %296 = vxpose.xlu0.b32.cont [5/16] 0.0, 128
    %297 = vxpose.xlu0.b32.cont [6/16] 0.0, 128
    %298 = vxpose.xlu0.b32.cont [7/16] 0.0, 128
    %299 = vxpose.xlu0.b32.cont [8/16] 0.0, 128
    %300 = vxpose.xlu0.b32.cont [9/16] 0.0, 128
    %301 = vxpose.xlu0.b32.cont [10/16] 0.0, 128
    %302 = vxpose.xlu0.b32.cont [11/16] 0.0, 128
    %303 = vxpose.xlu0.b32.cont [12/16] 0.0, 128
    %304 = vxpose.xlu0.b32.cont [13/16] 0.0, 128
    %305 = vxpose.xlu0.b32.cont [14/16] 0.0, 128
    %306 = vxpose.xlu0.b32.cont [15/16] 0.0, 128
    %307 = vxpose.xlu0.b32.end [16/16] 0.0, 128
    %v308 = vpop.trf.xlu0
    %v309 = vpop.trf.xlu0
    %v310 = vpop.trf.xlu0
    %v311 = vpop.trf.xlu0
    %v312 = vpop.trf.xlu0
    %v313 = vpop.trf.xlu0
    %v314 = vpop.trf.xlu0
    %v315 = vpop.trf.xlu0
    %v316 = vpop.trf.xlu0
    %v317 = vpop.trf.xlu0
    %v318 = vpop.trf.xlu0
    %v319 = vpop.trf.xlu0
    %v320 = vpop.trf.xlu0
    %v321 = vpop.trf.xlu0
    %v322 = vpop.trf.xlu0
    %v323 = vpop.trf.xlu0
    %324 = vxpose.xlu0.b32.start [1/16] %v291, 128
    %325 = vxpose.xlu0.b32.cont [2/16] 0.0, 128
    %326 = vxpose.xlu0.b32.cont [3/16] 0.0, 128
    %327 = vxpose.xlu0.b32.cont [4/16] 0.0, 128
    %328 = vxpose.xlu0.b32.cont [5/16] 0.0, 128
    %329 = vxpose.xlu0.b32.cont [6/16] 0.0, 128
    %330 = vxpose.xlu0.b32.cont [7/16] 0.0, 128
    %331 = vxpose.xlu0.b32.cont [8/16] 0.0, 128
    %332 = vxpose.xlu0.b32.cont [9/16] 0.0, 128
    %333 = vxpose.xlu0.b32.cont [10/16] 0.0, 128
    %334 = vxpose.xlu0.b32.cont [11/16] 0.0, 128
    %335 = vxpose.xlu0.b32.cont [12/16] 0.0, 128
    %336 = vxpose.xlu0.b32.cont [13/16] 0.0, 128
    %337 = vxpose.xlu0.b32.cont [14/16] 0.0, 128
    %338 = vxpose.xlu0.b32.cont [15/16] 0.0, 128
    %339 = vxpose.xlu0.b32.end [16/16] 0.0, 128
    %v340 = vpop.trf.xlu0
    %v341 = vpop.trf.xlu0
    %v342 = vpop.trf.xlu0
    %v343 = vpop.trf.xlu0
    %v344 = vpop.trf.xlu0
    %v345 = vpop.trf.xlu0
    %v346 = vpop.trf.xlu0
    %v347 = vpop.trf.xlu0
    %v348 = vpop.trf.xlu0
    %v349 = vpop.trf.xlu0
    %v350 = vpop.trf.xlu0
    %v351 = vpop.trf.xlu0
    %v352 = vpop.trf.xlu0
    %v353 = vpop.trf.xlu0
    %v354 = vpop.trf.xlu0
    %v355 = vpop.trf.xlu0
    %vm356 = vcmask 58368
    %v357 = vsel %vm356, %v308, -inf
    %358 = vmax.xlane.f32.xlu0 %v357
    %v359 = vpop.xlane.xlu0 %358
    %v360 = vsel %vm356, %v340, -inf
    %361 = vmax.xlane.f32.xlu0 %v360
    %v362 = vpop.xlane.xlu0 %361
    %v363 = vsub.f32 %v308, %v359
    %v364 = vsub.f32 %v340, %v362
    %v365 = vmul.f32 %v363, 1.442695
    %v366 = vpow.pop %v365
    %v367 = vmul.f32 %v364, 1.442695
    %v368 = vpow.pop %v367
    %v369 = vsel %vm356, %v366, 0.0
    %370 = vadd.xlane.f32.xlu0 %v369
    %v371 = vpop.xlane.xlu0 %370
    %v372 = vsel %vm356, %v368, 0.0
    %373 = vadd.xlane.f32.xlu0 %v372
    %v374 = vpop.xlane.xlu0 %373
    %v375 = vrcp.pop %v371
    %v376 = vmul.f32 %v371, %v375
    %v377 = vsub.f32 1.0, %v376
    %v378 = vmul.f32 %v375, %v377
    %v379 = vadd.f32 %v375, %v378
    %vm380 = vweird.f32 %v371
    %vm381 = vweird.f32 %v375
    %vm382 = vmor %vm380, %vm381
    %v383 = vsel %vm382, %v375, %v379
    %v384 = vand.u32 2147483647, %v371
    %vm385 = vcmp.eq.f32.partialorder %v384, 8.507059e+37
    %v386 = vand.u32 %v371, 2147483648
    %v387 = vor.u32 1.1754944e-38, %v386
    %v388 = vsel %vm385, %v387, %v383
    %v389 = vmul.f32 %v366, %v388
    %v390 = vrcp.pop %v374
    %v391 = vmul.f32 %v374, %v390
    %v392 = vsub.f32 1.0, %v391
    %v393 = vmul.f32 %v390, %v392
    %v394 = vadd.f32 %v390, %v393
    %vm395 = vweird.f32 %v374
    %vm396 = vweird.f32 %v390
    %vm397 = vmor %vm395, %vm396
    %v398 = vsel %vm397, %v390, %v394
    %v399 = vand.u32 2147483647, %v374
    %vm400 = vcmp.eq.f32.partialorder %v399, 8.507059e+37
    %v401 = vand.u32 %v374, 2147483648
    %v402 = vor.u32 1.1754944e-38, %v401
    %v403 = vsel %vm400, %v402, %v398
    %v404 = vmul.f32 %v368, %v403
    %vm405 = vcmask 64512
    %v407 = vsel %vm405, %v389, 0
    %409 = vmatpush.msra.mxu0 0.0
    %410 = vmatpush.msra.mxu0 0.0
    %411 = vmatpush.msra.mxu0 0.0
    %412 = vmatpush.msra.mxu0 0.0
    %413 = vmatpush.msra.mxu0 0.0
    %414 = vmatpush.msra.mxu0 0.0
    %415 = vmatpush.msra.mxu0 0.0
    %416 = vmatpush.msra.mxu0 0.0
    %417 = vmatpush.msra.mxu0 0.0
    %418 = vmatpush.msra.mxu0 0.0
    %419 = vmatpush.msra.mxu0 0.0
    %420 = vmatpush.msra.mxu0 0.0
    %421 = vmatpush.msra.mxu0 0.0
    %422 = vmatpush.msra.mxu0 0.0
    %423 = vmatpush.msra.mxu0 0.0
    %v424 = vand.u32 %v39, 4294901760
    %425 = vmatpush.msra.mxu0 %v424
    %v426 = vand.u32 %v407, 4294901760
    %v427 = vsub.f32 %v407, %v426
    %v428 = vand.u32 %v427, 4294901760
    %v429 = vsub.f32 %v427, %v428
    %v430 = vand.u32 %v429, 4294901760
    %431 = vmatmul.f32.gmra.mxu0 %v430
    %v432 = vpop.f32.mrf.mxu0
    %v433 = vadd.f32 0.0, %v432
    %434 = vdwg.mxu0
    %435 = vmatpush.msra.mxu0 0.0
    %436 = vmatpush.msra.mxu0 0.0
    %437 = vmatpush.msra.mxu0 0.0
    %438 = vmatpush.msra.mxu0 0.0
    %439 = vmatpush.msra.mxu0 0.0
    %440 = vmatpush.msra.mxu0 0.0
    %441 = vmatpush.msra.mxu0 0.0
    %442 = vmatpush.msra.mxu0 0.0
    %443 = vmatpush.msra.mxu0 0.0
    %444 = vmatpush.msra.mxu0 0.0
    %445 = vmatpush.msra.mxu0 0.0
    %446 = vmatpush.msra.mxu0 0.0
    %447 = vmatpush.msra.mxu0 0.0
    %448 = vmatpush.msra.mxu0 0.0
    %449 = vmatpush.msra.mxu0 0.0
    %v450 = vand.u32 %v39, 4294901760
    %v451 = vsub.f32 %v39, %v450
    %v452 = vand.u32 %v451, 4294901760
    %v453 = vsub.f32 %v451, %v452
    %v454 = vand.u32 %v453, 4294901760
    %455 = vmatpush.msra.mxu0 %v454
    %v456 = vand.u32 %v407, 4294901760
    %457 = vmatmul.f32.gmra.mxu0 %v456
    %v458 = vpop.f32.mrf.mxu0
    %v459 = vadd.f32 %v433, %v458
    %460 = vdwg.mxu0
    %461 = vmatpush.msra.mxu0 0.0
    %462 = vmatpush.msra.mxu0 0.0
    %463 = vmatpush.msra.mxu0 0.0
    %464 = vmatpush.msra.mxu0 0.0
    %465 = vmatpush.msra.mxu0 0.0
    %466 = vmatpush.msra.mxu0 0.0
    %467 = vmatpush.msra.mxu0 0.0
    %468 = vmatpush.msra.mxu0 0.0
    %469 = vmatpush.msra.mxu0 0.0
    %470 = vmatpush.msra.mxu0 0.0
    %471 = vmatpush.msra.mxu0 0.0
    %472 = vmatpush.msra.mxu0 0.0
    %473 = vmatpush.msra.mxu0 0.0
    %474 = vmatpush.msra.mxu0 0.0
    %475 = vmatpush.msra.mxu0 0.0
    %v476 = vand.u32 %v39, 4294901760
    %v477 = vsub.f32 %v39, %v476
    %478 = vmatpush.msra.mxu0 %v477
    %v479 = vand.u32 %v407, 4294901760
    %v480 = vsub.f32 %v407, %v479
    %481 = vmatmul.f32.gmra.mxu0 %v480
    %v482 = vpop.f32.mrf.mxu0
    %v483 = vadd.f32 %v459, %v482
    %484 = vdwg.mxu0
    %485 = vmatpush.msra.mxu0 0.0
    %486 = vmatpush.msra.mxu0 0.0
    %487 = vmatpush.msra.mxu0 0.0
    %488 = vmatpush.msra.mxu0 0.0
    %489 = vmatpush.msra.mxu0 0.0
    %490 = vmatpush.msra.mxu0 0.0
    %491 = vmatpush.msra.mxu0 0.0
    %492 = vmatpush.msra.mxu0 0.0
    %493 = vmatpush.msra.mxu0 0.0
    %494 = vmatpush.msra.mxu0 0.0
    %495 = vmatpush.msra.mxu0 0.0
    %496 = vmatpush.msra.mxu0 0.0
    %497 = vmatpush.msra.mxu0 0.0
    %498 = vmatpush.msra.mxu0 0.0
    %499 = vmatpush.msra.mxu0 0.0
    %v500 = vand.u32 %v39, 4294901760
    %501 = vmatpush.msra.mxu0 %v500
    %v502 = vand.u32 %v407, 4294901760
    %v503 = vsub.f32 %v407, %v502
    %v504 = vand.u32 %v503, 4294901760
    %505 = vmatmul.f32.gmra.mxu0 %v504
    %v506 = vpop.f32.mrf.mxu0
    %v507 = vadd.f32 %v483, %v506
    %508 = vdwg.mxu0
    %509 = vmatpush.msra.mxu0 0.0
    %510 = vmatpush.msra.mxu0 0.0
    %511 = vmatpush.msra.mxu0 0.0
    %512 = vmatpush.msra.mxu0 0.0
    %513 = vmatpush.msra.mxu0 0.0
    %514 = vmatpush.msra.mxu0 0.0
    %515 = vmatpush.msra.mxu0 0.0
    %516 = vmatpush.msra.mxu0 0.0
    %517 = vmatpush.msra.mxu0 0.0
    %518 = vmatpush.msra.mxu0 0.0
    %519 = vmatpush.msra.mxu0 0.0
    %520 = vmatpush.msra.mxu0 0.0
    %521 = vmatpush.msra.mxu0 0.0
    %522 = vmatpush.msra.mxu0 0.0
    %523 = vmatpush.msra.mxu0 0.0
    %v524 = vand.u32 %v39, 4294901760
    %v525 = vsub.f32 %v39, %v524
    %v526 = vand.u32 %v525, 4294901760
    %527 = vmatpush.msra.mxu0 %v526
    %v528 = vand.u32 %v407, 4294901760
    %529 = vmatmul.f32.gmra.mxu0 %v528
    %v530 = vpop.f32.mrf.mxu0
    %v531 = vadd.f32 %v507, %v530
    %532 = vdwg.mxu0
    %533 = vmatpush.msra.mxu0 0.0
    %534 = vmatpush.msra.mxu0 0.0
    %535 = vmatpush.msra.mxu0 0.0
    %536 = vmatpush.msra.mxu0 0.0
    %537 = vmatpush.msra.mxu0 0.0
    %538 = vmatpush.msra.mxu0 0.0
    %539 = vmatpush.msra.mxu0 0.0
    %540 = vmatpush.msra.mxu0 0.0
    %541 = vmatpush.msra.mxu0 0.0
    %542 = vmatpush.msra.mxu0 0.0
    %543 = vmatpush.msra.mxu0 0.0
    %544 = vmatpush.msra.mxu0 0.0
    %545 = vmatpush.msra.mxu0 0.0
    %546 = vmatpush.msra.mxu0 0.0
    %547 = vmatpush.msra.mxu0 0.0
    %v548 = vand.u32 %v39, 4294901760
    %549 = vmatpush.msra.mxu0 %v548
    %v550 = vand.u32 %v407, 4294901760
    %551 = vmatmul.f32.gmra.mxu0 %v550
    %v552 = vpop.f32.mrf.mxu0
    %v553 = vadd.f32 %v531, %v552
    %554 = vdwg.mxu0
    %v556 = vsel %vm405, %v404, 0
    %558 = vmatpush.msra.mxu0 0.0
    %559 = vmatpush.msra.mxu0 0.0
    %560 = vmatpush.msra.mxu0 0.0
    %561 = vmatpush.msra.mxu0 0.0
    %562 = vmatpush.msra.mxu0 0.0
    %563 = vmatpush.msra.mxu0 0.0
    %564 = vmatpush.msra.mxu0 0.0
    %565 = vmatpush.msra.mxu0 0.0
    %566 = vmatpush.msra.mxu0 0.0
    %567 = vmatpush.msra.mxu0 0.0
    %568 = vmatpush.msra.mxu0 0.0
    %569 = vmatpush.msra.mxu0 0.0
    %570 = vmatpush.msra.mxu0 0.0
    %571 = vmatpush.msra.mxu0 0.0
    %572 = vmatpush.msra.mxu0 0.0
    %v573 = vand.u32 %v40, 4294901760
    %574 = vmatpush.msra.mxu0 %v573
    %v575 = vand.u32 %v556, 4294901760
    %v576 = vsub.f32 %v556, %v575
    %v577 = vand.u32 %v576, 4294901760
    %v578 = vsub.f32 %v576, %v577
    %v579 = vand.u32 %v578, 4294901760
    %580 = vmatmul.f32.gmra.mxu0 %v579
    %v581 = vpop.f32.mrf.mxu0
    %v582 = vadd.f32 0.0, %v581
    %583 = vdwg.mxu0
    %584 = vmatpush.msra.mxu0 0.0
    %585 = vmatpush.msra.mxu0 0.0
    %586 = vmatpush.msra.mxu0 0.0
    %587 = vmatpush.msra.mxu0 0.0
    %588 = vmatpush.msra.mxu0 0.0
    %589 = vmatpush.msra.mxu0 0.0
    %590 = vmatpush.msra.mxu0 0.0
    %591 = vmatpush.msra.mxu0 0.0
    %592 = vmatpush.msra.mxu0 0.0
    %593 = vmatpush.msra.mxu0 0.0
    %594 = vmatpush.msra.mxu0 0.0
    %595 = vmatpush.msra.mxu0 0.0
    %596 = vmatpush.msra.mxu0 0.0
    %597 = vmatpush.msra.mxu0 0.0
    %598 = vmatpush.msra.mxu0 0.0
    %v599 = vand.u32 %v40, 4294901760
    %v600 = vsub.f32 %v40, %v599
    %v601 = vand.u32 %v600, 4294901760
    %v602 = vsub.f32 %v600, %v601
    %v603 = vand.u32 %v602, 4294901760
    %604 = vmatpush.msra.mxu0 %v603
    %v605 = vand.u32 %v556, 4294901760
    %606 = vmatmul.f32.gmra.mxu0 %v605
    %v607 = vpop.f32.mrf.mxu0
    %v608 = vadd.f32 %v582, %v607
    %609 = vdwg.mxu0
    %610 = vmatpush.msra.mxu0 0.0
    %611 = vmatpush.msra.mxu0 0.0
    %612 = vmatpush.msra.mxu0 0.0
    %613 = vmatpush.msra.mxu0 0.0
    %614 = vmatpush.msra.mxu0 0.0
    %615 = vmatpush.msra.mxu0 0.0
    %616 = vmatpush.msra.mxu0 0.0
    %617 = vmatpush.msra.mxu0 0.0
    %618 = vmatpush.msra.mxu0 0.0
    %619 = vmatpush.msra.mxu0 0.0
    %620 = vmatpush.msra.mxu0 0.0
    %621 = vmatpush.msra.mxu0 0.0
    %622 = vmatpush.msra.mxu0 0.0
    %623 = vmatpush.msra.mxu0 0.0
    %624 = vmatpush.msra.mxu0 0.0
    %v625 = vand.u32 %v40, 4294901760
    %v626 = vsub.f32 %v40, %v625
    %627 = vmatpush.msra.mxu0 %v626
    %v628 = vand.u32 %v556, 4294901760
    %v629 = vsub.f32 %v556, %v628
    %630 = vmatmul.f32.gmra.mxu0 %v629
    %v631 = vpop.f32.mrf.mxu0
    %v632 = vadd.f32 %v608, %v631
    %633 = vdwg.mxu0
    %634 = vmatpush.msra.mxu0 0.0
    %635 = vmatpush.msra.mxu0 0.0
    %636 = vmatpush.msra.mxu0 0.0
    %637 = vmatpush.msra.mxu0 0.0
    %638 = vmatpush.msra.mxu0 0.0
    %639 = vmatpush.msra.mxu0 0.0
    %640 = vmatpush.msra.mxu0 0.0
    %641 = vmatpush.msra.mxu0 0.0
    %642 = vmatpush.msra.mxu0 0.0
    %643 = vmatpush.msra.mxu0 0.0
    %644 = vmatpush.msra.mxu0 0.0
    %645 = vmatpush.msra.mxu0 0.0
    %646 = vmatpush.msra.mxu0 0.0
    %647 = vmatpush.msra.mxu0 0.0
    %648 = vmatpush.msra.mxu0 0.0
    %v649 = vand.u32 %v40, 4294901760
    %650 = vmatpush.msra.mxu0 %v649
    %v651 = vand.u32 %v556, 4294901760
    %v652 = vsub.f32 %v556, %v651
    %v653 = vand.u32 %v652, 4294901760
    %654 = vmatmul.f32.gmra.mxu0 %v653
    %v655 = vpop.f32.mrf.mxu0
    %v656 = vadd.f32 %v632, %v655
    %657 = vdwg.mxu0
    %658 = vmatpush.msra.mxu0 0.0
    %659 = vmatpush.msra.mxu0 0.0
    %660 = vmatpush.msra.mxu0 0.0
    %661 = vmatpush.msra.mxu0 0.0
    %662 = vmatpush.msra.mxu0 0.0
    %663 = vmatpush.msra.mxu0 0.0
    %664 = vmatpush.msra.mxu0 0.0
    %665 = vmatpush.msra.mxu0 0.0
    %666 = vmatpush.msra.mxu0 0.0
    %667 = vmatpush.msra.mxu0 0.0
    %668 = vmatpush.msra.mxu0 0.0
    %669 = vmatpush.msra.mxu0 0.0
    %670 = vmatpush.msra.mxu0 0.0
    %671 = vmatpush.msra.mxu0 0.0
    %672 = vmatpush.msra.mxu0 0.0
    %v673 = vand.u32 %v40, 4294901760
    %v674 = vsub.f32 %v40, %v673
    %v675 = vand.u32 %v674, 4294901760
    %676 = vmatpush.msra.mxu0 %v675
    %v677 = vand.u32 %v556, 4294901760
    %678 = vmatmul.f32.gmra.mxu0 %v677
    %v679 = vpop.f32.mrf.mxu0
    %v680 = vadd.f32 %v656, %v679
    %681 = vdwg.mxu0
    %682 = vmatpush.msra.mxu0 0.0
    %683 = vmatpush.msra.mxu0 0.0
    %684 = vmatpush.msra.mxu0 0.0
    %685 = vmatpush.msra.mxu0 0.0
    %686 = vmatpush.msra.mxu0 0.0
    %687 = vmatpush.msra.mxu0 0.0
    %688 = vmatpush.msra.mxu0 0.0
    %689 = vmatpush.msra.mxu0 0.0
    %690 = vmatpush.msra.mxu0 0.0
    %691 = vmatpush.msra.mxu0 0.0
    %692 = vmatpush.msra.mxu0 0.0
    %693 = vmatpush.msra.mxu0 0.0
    %694 = vmatpush.msra.mxu0 0.0
    %695 = vmatpush.msra.mxu0 0.0
    %696 = vmatpush.msra.mxu0 0.0
    %v697 = vand.u32 %v40, 4294901760
    %698 = vmatpush.msra.mxu0 %v697
    %v699 = vand.u32 %v556, 4294901760
    %700 = vmatmul.f32.gmra.mxu0 %v699
    %v701 = vpop.f32.mrf.mxu0
    %v702 = vadd.f32 %v680, %v701
    %703 = vdwg.mxu0
    %v704 = vld [vmem:[%s3] sm:$0xff]
    %v705 = vld [vmem:[%s3 + $0x8] sm:$0xff]
    %v706 = vld [vmem:[%s3 + $0x10] sm:$0xff]
    %v707 = vld [vmem:[%s3 + $0x18] sm:$0xff]
    %v708 = vld [vmem:[%s4] sm:$0xff]
    %v709 = vld [vmem:[%s4 + $0x8] sm:$0xff]
    %v710 = vld [vmem:[%s4 + $0x10] sm:$0xff]
    %v711 = vld [vmem:[%s4 + $0x18] sm:$0xff]
    %v714 = vrot.slane %v553, 1
    %vm715 = vcmask 1041409
    %v716 = vsel %vm715, %v702, %v714
    %v717 = vsel %vm49, %v716, 0
    %719 = vmatpush.msra.mxu0 0.0
    %720 = vmatpush.msra.mxu0 0.0
    %721 = vmatpush.msra.mxu0 0.0
    %722 = vmatpush.msra.mxu0 0.0
    %723 = vmatpush.msra.mxu0 0.0
    %724 = vmatpush.msra.mxu0 0.0
    %725 = vmatpush.msra.mxu0 0.0
    %726 = vmatpush.msra.mxu0 0.0
    %727 = vmatpush.msra.mxu0 0.0
    %728 = vmatpush.msra.mxu0 0.0
    %729 = vmatpush.msra.mxu0 0.0
    %730 = vmatpush.msra.mxu0 0.0
    %v731 = vand.u32 %v711, 4294901760
    %732 = vmatpush.msra.mxu0 %v731
    %v733 = vand.u32 %v710, 4294901760
    %734 = vmatpush.msra.mxu0 %v733
    %v735 = vand.u32 %v709, 4294901760
    %736 = vmatpush.msra.mxu0 %v735
    %v737 = vand.u32 %v708, 4294901760
    %738 = vmatpush.msra.mxu0 %v737
    %v739 = vand.u32 %v717, 4294901760
    %v740 = vsub.f32 %v717, %v739
    %v741 = vand.u32 %v740, 4294901760
    %v742 = vsub.f32 %v740, %v741
    %v743 = vand.u32 %v742, 4294901760
    %744 = vmatmul.f32.gmra.mxu0 %v743
    %v745 = vpop.f32.mrf.mxu0
    %v746 = vadd.f32 0.0, %v745
    %747 = vdwg.mxu0
    %748 = vmatpush.msra.mxu0 0.0
    %749 = vmatpush.msra.mxu0 0.0
    %750 = vmatpush.msra.mxu0 0.0
    %751 = vmatpush.msra.mxu0 0.0
    %752 = vmatpush.msra.mxu0 0.0
    %753 = vmatpush.msra.mxu0 0.0
    %754 = vmatpush.msra.mxu0 0.0
    %755 = vmatpush.msra.mxu0 0.0
    %756 = vmatpush.msra.mxu0 0.0
    %757 = vmatpush.msra.mxu0 0.0
    %758 = vmatpush.msra.mxu0 0.0
    %759 = vmatpush.msra.mxu0 0.0
    %v760 = vand.u32 %v711, 4294901760
    %v761 = vsub.f32 %v711, %v760
    %v762 = vand.u32 %v761, 4294901760
    %v763 = vsub.f32 %v761, %v762
    %v764 = vand.u32 %v763, 4294901760
    %765 = vmatpush.msra.mxu0 %v764
    %v766 = vand.u32 %v710, 4294901760
    %v767 = vsub.f32 %v710, %v766
    %v768 = vand.u32 %v767, 4294901760
    %v769 = vsub.f32 %v767, %v768
    %v770 = vand.u32 %v769, 4294901760
    %771 = vmatpush.msra.mxu0 %v770
    %v772 = vand.u32 %v709, 4294901760
    %v773 = vsub.f32 %v709, %v772
    %v774 = vand.u32 %v773, 4294901760
    %v775 = vsub.f32 %v773, %v774
    %v776 = vand.u32 %v775, 4294901760
    %777 = vmatpush.msra.mxu0 %v776
    %v778 = vand.u32 %v708, 4294901760
    %v779 = vsub.f32 %v708, %v778
    %v780 = vand.u32 %v779, 4294901760
    %v781 = vsub.f32 %v779, %v780
    %v782 = vand.u32 %v781, 4294901760
    %783 = vmatpush.msra.mxu0 %v782
    %v784 = vand.u32 %v717, 4294901760
    %785 = vmatmul.f32.gmra.mxu0 %v784
    %v786 = vpop.f32.mrf.mxu0
    %v787 = vadd.f32 %v746, %v786
    %788 = vdwg.mxu0
    %789 = vmatpush.msra.mxu0 0.0
    %790 = vmatpush.msra.mxu0 0.0
    %791 = vmatpush.msra.mxu0 0.0
    %792 = vmatpush.msra.mxu0 0.0
    %793 = vmatpush.msra.mxu0 0.0
    %794 = vmatpush.msra.mxu0 0.0
    %795 = vmatpush.msra.mxu0 0.0
    %796 = vmatpush.msra.mxu0 0.0
    %797 = vmatpush.msra.mxu0 0.0
    %798 = vmatpush.msra.mxu0 0.0
    %799 = vmatpush.msra.mxu0 0.0
    %800 = vmatpush.msra.mxu0 0.0
    %v801 = vand.u32 %v711, 4294901760
    %v802 = vsub.f32 %v711, %v801
    %803 = vmatpush.msra.mxu0 %v802
    %v804 = vand.u32 %v710, 4294901760
    %v805 = vsub.f32 %v710, %v804
    %806 = vmatpush.msra.mxu0 %v805
    %v807 = vand.u32 %v709, 4294901760
    %v808 = vsub.f32 %v709, %v807
    %809 = vmatpush.msra.mxu0 %v808
    %v810 = vand.u32 %v708, 4294901760
    %v811 = vsub.f32 %v708, %v810
    %812 = vmatpush.msra.mxu0 %v811
    %v813 = vand.u32 %v717, 4294901760
    %v814 = vsub.f32 %v717, %v813
    %815 = vmatmul.f32.gmra.mxu0 %v814
    %v816 = vpop.f32.mrf.mxu0
    %v817 = vadd.f32 %v787, %v816
    %818 = vdwg.mxu0
    %819 = vmatpush.msra.mxu0 0.0
    %820 = vmatpush.msra.mxu0 0.0
    %821 = vmatpush.msra.mxu0 0.0
    %822 = vmatpush.msra.mxu0 0.0
    %823 = vmatpush.msra.mxu0 0.0
    %824 = vmatpush.msra.mxu0 0.0
    %825 = vmatpush.msra.mxu0 0.0
    %826 = vmatpush.msra.mxu0 0.0
    %827 = vmatpush.msra.mxu0 0.0
    %828 = vmatpush.msra.mxu0 0.0
    %829 = vmatpush.msra.mxu0 0.0
    %830 = vmatpush.msra.mxu0 0.0
    %v831 = vand.u32 %v711, 4294901760
    %832 = vmatpush.msra.mxu0 %v831
    %v833 = vand.u32 %v710, 4294901760
    %834 = vmatpush.msra.mxu0 %v833
    %v835 = vand.u32 %v709, 4294901760
    %836 = vmatpush.msra.mxu0 %v835
    %v837 = vand.u32 %v708, 4294901760
    %838 = vmatpush.msra.mxu0 %v837
    %v839 = vand.u32 %v717, 4294901760
    %v840 = vsub.f32 %v717, %v839
    %v841 = vand.u32 %v840, 4294901760
    %842 = vmatmul.f32.gmra.mxu0 %v841
    %v843 = vpop.f32.mrf.mxu0
    %v844 = vadd.f32 %v817, %v843
    %845 = vdwg.mxu0
    %846 = vmatpush.msra.mxu0 0.0
    %847 = vmatpush.msra.mxu0 0.0
    %848 = vmatpush.msra.mxu0 0.0
    %849 = vmatpush.msra.mxu0 0.0
    %850 = vmatpush.msra.mxu0 0.0
    %851 = vmatpush.msra.mxu0 0.0
    %852 = vmatpush.msra.mxu0 0.0
    %853 = vmatpush.msra.mxu0 0.0
    %854 = vmatpush.msra.mxu0 0.0
    %855 = vmatpush.msra.mxu0 0.0
    %856 = vmatpush.msra.mxu0 0.0
    %857 = vmatpush.msra.mxu0 0.0
    %v858 = vand.u32 %v711, 4294901760
    %v859 = vsub.f32 %v711, %v858
    %v860 = vand.u32 %v859, 4294901760
    %861 = vmatpush.msra.mxu0 %v860
    %v862 = vand.u32 %v710, 4294901760
    %v863 = vsub.f32 %v710, %v862
    %v864 = vand.u32 %v863, 4294901760
    %865 = vmatpush.msra.mxu0 %v864
    %v866 = vand.u32 %v709, 4294901760
    %v867 = vsub.f32 %v709, %v866
    %v868 = vand.u32 %v867, 4294901760
    %869 = vmatpush.msra.mxu0 %v868
    %v870 = vand.u32 %v708, 4294901760
    %v871 = vsub.f32 %v708, %v870
    %v872 = vand.u32 %v871, 4294901760
    %873 = vmatpush.msra.mxu0 %v872
    %v874 = vand.u32 %v717, 4294901760
    %875 = vmatmul.f32.gmra.mxu0 %v874
    %v876 = vpop.f32.mrf.mxu0
    %v877 = vadd.f32 %v844, %v876
    %878 = vdwg.mxu0
    %879 = vmatpush.msra.mxu0 0.0
    %880 = vmatpush.msra.mxu0 0.0
    %881 = vmatpush.msra.mxu0 0.0
    %882 = vmatpush.msra.mxu0 0.0
    %883 = vmatpush.msra.mxu0 0.0
    %884 = vmatpush.msra.mxu0 0.0
    %885 = vmatpush.msra.mxu0 0.0
    %886 = vmatpush.msra.mxu0 0.0
    %887 = vmatpush.msra.mxu0 0.0
    %888 = vmatpush.msra.mxu0 0.0
    %889 = vmatpush.msra.mxu0 0.0
    %890 = vmatpush.msra.mxu0 0.0
    %v891 = vand.u32 %v711, 4294901760
    %892 = vmatpush.msra.mxu0 %v891
    %v893 = vand.u32 %v710, 4294901760
    %894 = vmatpush.msra.mxu0 %v893
    %v895 = vand.u32 %v709, 4294901760
    %896 = vmatpush.msra.mxu0 %v895
    %v897 = vand.u32 %v708, 4294901760
    %898 = vmatpush.msra.mxu0 %v897
    %v899 = vand.u32 %v717, 4294901760
    %900 = vmatmul.f32.gmra.mxu0 %v899
    %v901 = vpop.f32.mrf.mxu0
    %v902 = vadd.f32 %v877, %v901
    %903 = vdwg.mxu0
    %v904 = vrot.slane %v702, 7
    %v905 = vsel %vm715, %v904, %v553
    %v906 = vsel %vm49, %v905, 0
    %908 = vmatpush.msra.mxu0 0.0
    %909 = vmatpush.msra.mxu0 0.0
    %910 = vmatpush.msra.mxu0 0.0
    %911 = vmatpush.msra.mxu0 0.0
    %912 = vmatpush.msra.mxu0 0.0
    %913 = vmatpush.msra.mxu0 0.0
    %914 = vmatpush.msra.mxu0 0.0
    %915 = vmatpush.msra.mxu0 0.0
    %916 = vmatpush.msra.mxu0 0.0
    %917 = vmatpush.msra.mxu0 0.0
    %918 = vmatpush.msra.mxu0 0.0
    %919 = vmatpush.msra.mxu0 0.0
    %v920 = vand.u32 %v707, 4294901760
    %921 = vmatpush.msra.mxu0 %v920
    %v922 = vand.u32 %v706, 4294901760
    %923 = vmatpush.msra.mxu0 %v922
    %v924 = vand.u32 %v705, 4294901760
    %925 = vmatpush.msra.mxu0 %v924
    %v926 = vand.u32 %v704, 4294901760
    %927 = vmatpush.msra.mxu0 %v926
    %v928 = vand.u32 %v906, 4294901760
    %v929 = vsub.f32 %v906, %v928
    %v930 = vand.u32 %v929, 4294901760
    %v931 = vsub.f32 %v929, %v930
    %v932 = vand.u32 %v931, 4294901760
    %933 = vmatmul.f32.gmra.mxu0 %v932
    %v934 = vpop.f32.mrf.mxu0
    %v935 = vadd.f32 %v902, %v934
    %936 = vdwg.mxu0
    %937 = vmatpush.msra.mxu0 0.0
    %938 = vmatpush.msra.mxu0 0.0
    %939 = vmatpush.msra.mxu0 0.0
    %940 = vmatpush.msra.mxu0 0.0
    %941 = vmatpush.msra.mxu0 0.0
    %942 = vmatpush.msra.mxu0 0.0
    %943 = vmatpush.msra.mxu0 0.0
    %944 = vmatpush.msra.mxu0 0.0
    %945 = vmatpush.msra.mxu0 0.0
    %946 = vmatpush.msra.mxu0 0.0
    %947 = vmatpush.msra.mxu0 0.0
    %948 = vmatpush.msra.mxu0 0.0
    %v949 = vand.u32 %v707, 4294901760
    %v950 = vsub.f32 %v707, %v949
    %v951 = vand.u32 %v950, 4294901760
    %v952 = vsub.f32 %v950, %v951
    %v953 = vand.u32 %v952, 4294901760
    %954 = vmatpush.msra.mxu0 %v953
    %v955 = vand.u32 %v706, 4294901760
    %v956 = vsub.f32 %v706, %v955
    %v957 = vand.u32 %v956, 4294901760
    %v958 = vsub.f32 %v956, %v957
    %v959 = vand.u32 %v958, 4294901760
    %960 = vmatpush.msra.mxu0 %v959
    %v961 = vand.u32 %v705, 4294901760
    %v962 = vsub.f32 %v705, %v961
    %v963 = vand.u32 %v962, 4294901760
    %v964 = vsub.f32 %v962, %v963
    %v965 = vand.u32 %v964, 4294901760
    %966 = vmatpush.msra.mxu0 %v965
    %v967 = vand.u32 %v704, 4294901760
    %v968 = vsub.f32 %v704, %v967
    %v969 = vand.u32 %v968, 4294901760
    %v970 = vsub.f32 %v968, %v969
    %v971 = vand.u32 %v970, 4294901760
    %972 = vmatpush.msra.mxu0 %v971
    %v973 = vand.u32 %v906, 4294901760
    %974 = vmatmul.f32.gmra.mxu0 %v973
    %v975 = vpop.f32.mrf.mxu0
    %v976 = vadd.f32 %v935, %v975
    %977 = vdwg.mxu0
    %978 = vmatpush.msra.mxu0 0.0
    %979 = vmatpush.msra.mxu0 0.0
    %980 = vmatpush.msra.mxu0 0.0
    %981 = vmatpush.msra.mxu0 0.0
    %982 = vmatpush.msra.mxu0 0.0
    %983 = vmatpush.msra.mxu0 0.0
    %984 = vmatpush.msra.mxu0 0.0
    %985 = vmatpush.msra.mxu0 0.0
    %986 = vmatpush.msra.mxu0 0.0
    %987 = vmatpush.msra.mxu0 0.0
    %988 = vmatpush.msra.mxu0 0.0
    %989 = vmatpush.msra.mxu0 0.0
    %v990 = vand.u32 %v707, 4294901760
    %v991 = vsub.f32 %v707, %v990
    %992 = vmatpush.msra.mxu0 %v991
    %v993 = vand.u32 %v706, 4294901760
    %v994 = vsub.f32 %v706, %v993
    %995 = vmatpush.msra.mxu0 %v994
    %v996 = vand.u32 %v705, 4294901760
    %v997 = vsub.f32 %v705, %v996
    %998 = vmatpush.msra.mxu0 %v997
    %v999 = vand.u32 %v704, 4294901760
    %v1000 = vsub.f32 %v704, %v999
    %1001 = vmatpush.msra.mxu0 %v1000
    %v1002 = vand.u32 %v906, 4294901760
    %v1003 = vsub.f32 %v906, %v1002
    %1004 = vmatmul.f32.gmra.mxu0 %v1003
    %v1005 = vpop.f32.mrf.mxu0
    %v1006 = vadd.f32 %v976, %v1005
    %1007 = vdwg.mxu0
    %1008 = vmatpush.msra.mxu0 0.0
    %1009 = vmatpush.msra.mxu0 0.0
    %1010 = vmatpush.msra.mxu0 0.0
    %1011 = vmatpush.msra.mxu0 0.0
    %1012 = vmatpush.msra.mxu0 0.0
    %1013 = vmatpush.msra.mxu0 0.0
    %1014 = vmatpush.msra.mxu0 0.0
    %1015 = vmatpush.msra.mxu0 0.0
    %1016 = vmatpush.msra.mxu0 0.0
    %1017 = vmatpush.msra.mxu0 0.0
    %1018 = vmatpush.msra.mxu0 0.0
    %1019 = vmatpush.msra.mxu0 0.0
    %v1020 = vand.u32 %v707, 4294901760
    %1021 = vmatpush.msra.mxu0 %v1020
    %v1022 = vand.u32 %v706, 4294901760
    %1023 = vmatpush.msra.mxu0 %v1022
    %v1024 = vand.u32 %v705, 4294901760
    %1025 = vmatpush.msra.mxu0 %v1024
    %v1026 = vand.u32 %v704, 4294901760
    %1027 = vmatpush.msra.mxu0 %v1026
    %v1028 = vand.u32 %v906, 4294901760
    %v1029 = vsub.f32 %v906, %v1028
    %v1030 = vand.u32 %v1029, 4294901760
    %1031 = vmatmul.f32.gmra.mxu0 %v1030
    %v1032 = vpop.f32.mrf.mxu0
    %v1033 = vadd.f32 %v1006, %v1032
    %1034 = vdwg.mxu0
    %1035 = vmatpush.msra.mxu0 0.0
    %1036 = vmatpush.msra.mxu0 0.0
    %1037 = vmatpush.msra.mxu0 0.0
    %1038 = vmatpush.msra.mxu0 0.0
    %1039 = vmatpush.msra.mxu0 0.0
    %1040 = vmatpush.msra.mxu0 0.0
    %1041 = vmatpush.msra.mxu0 0.0
    %1042 = vmatpush.msra.mxu0 0.0
    %1043 = vmatpush.msra.mxu0 0.0
    %1044 = vmatpush.msra.mxu0 0.0
    %1045 = vmatpush.msra.mxu0 0.0
    %1046 = vmatpush.msra.mxu0 0.0
    %v1047 = vand.u32 %v707, 4294901760
    %v1048 = vsub.f32 %v707, %v1047
    %v1049 = vand.u32 %v1048, 4294901760
    %1050 = vmatpush.msra.mxu0 %v1049
    %v1051 = vand.u32 %v706, 4294901760
    %v1052 = vsub.f32 %v706, %v1051
    %v1053 = vand.u32 %v1052, 4294901760
    %1054 = vmatpush.msra.mxu0 %v1053
    %v1055 = vand.u32 %v705, 4294901760
    %v1056 = vsub.f32 %v705, %v1055
    %v1057 = vand.u32 %v1056, 4294901760
    %1058 = vmatpush.msra.mxu0 %v1057
    %v1059 = vand.u32 %v704, 4294901760
    %v1060 = vsub.f32 %v704, %v1059
    %v1061 = vand.u32 %v1060, 4294901760
    %1062 = vmatpush.msra.mxu0 %v1061
    %v1063 = vand.u32 %v906, 4294901760
    %1064 = vmatmul.f32.gmra.mxu0 %v1063
    %v1065 = vpop.f32.mrf.mxu0
    %v1066 = vadd.f32 %v1033, %v1065
    %1067 = vdwg.mxu0
    %1068 = vmatpush.msra.mxu0 0.0
    %1069 = vmatpush.msra.mxu0 0.0
    %1070 = vmatpush.msra.mxu0 0.0
    %1071 = vmatpush.msra.mxu0 0.0
    %1072 = vmatpush.msra.mxu0 0.0
    %1073 = vmatpush.msra.mxu0 0.0
    %1074 = vmatpush.msra.mxu0 0.0
    %1075 = vmatpush.msra.mxu0 0.0
    %1076 = vmatpush.msra.mxu0 0.0
    %1077 = vmatpush.msra.mxu0 0.0
    %1078 = vmatpush.msra.mxu0 0.0
    %1079 = vmatpush.msra.mxu0 0.0
    %v1080 = vand.u32 %v707, 4294901760
    %1081 = vmatpush.msra.mxu0 %v1080
    %v1082 = vand.u32 %v706, 4294901760
    %1083 = vmatpush.msra.mxu0 %v1082
    %v1084 = vand.u32 %v705, 4294901760
    %1085 = vmatpush.msra.mxu0 %v1084
    %v1086 = vand.u32 %v704, 4294901760
    %1087 = vmatpush.msra.mxu0 %v1086
    %v1088 = vand.u32 %v906, 4294901760
    %1089 = vmatmul.f32.gmra.mxu0 %v1088
    %v1090 = vpop.f32.mrf.mxu0
    %v1091 = vadd.f32 %v1066, %v1090
    %1092 = vdwg.mxu0
    %v1093 = vld [vmem:[%s5] sm:$0x1]
    %v1095 = vperm.slane %v1093, 0
    %v1097 = vadd.f32 %v1091, %v1095
    %v1098 = vld [vmem:[%s8] sm:$0xff]
    %v1099 = vld [vmem:[%s8 + $0x8] sm:$0xff]
    %v1100 = vld [vmem:[%s8 + $0x10] sm:$0xff]
    %v1101 = vld [vmem:[%s8 + $0x18] sm:$0xff]
    %v1102 = vld [vmem:[%s10] sm:$0x1]
    %v1104 = vperm.slane %v1102, 0
    %v1107 = vsel %vm49, %v1097, 0
    %1109 = vmatpush.msra.mxu0 0.0
    %1110 = vmatpush.msra.mxu0 0.0
    %1111 = vmatpush.msra.mxu0 0.0
    %1112 = vmatpush.msra.mxu0 0.0
    %1113 = vmatpush.msra.mxu0 0.0
    %1114 = vmatpush.msra.mxu0 0.0
    %1115 = vmatpush.msra.mxu0 0.0
    %1116 = vmatpush.msra.mxu0 0.0
    %1117 = vmatpush.msra.mxu0 0.0
    %1118 = vmatpush.msra.mxu0 0.0
    %1119 = vmatpush.msra.mxu0 0.0
    %1120 = vmatpush.msra.mxu0 0.0
    %v1121 = vand.u32 %v1101, 4294901760
    %1122 = vmatpush.msra.mxu0 %v1121
    %v1123 = vand.u32 %v1100, 4294901760
    %1124 = vmatpush.msra.mxu0 %v1123
    %v1125 = vand.u32 %v1099, 4294901760
    %1126 = vmatpush.msra.mxu0 %v1125
    %v1127 = vand.u32 %v1098, 4294901760
    %1128 = vmatpush.msra.mxu0 %v1127
    %v1129 = vand.u32 %v1107, 4294901760
    %v1130 = vsub.f32 %v1107, %v1129
    %v1131 = vand.u32 %v1130, 4294901760
    %v1132 = vsub.f32 %v1130, %v1131
    %v1133 = vand.u32 %v1132, 4294901760
    %1134 = vmatmul.f32.gmra.mxu0 %v1133
    %v1135 = vpop.f32.mrf.mxu0
    %v1136 = vadd.f32 %v1104, %v1135
    %1137 = vdwg.mxu0
    %1138 = vmatpush.msra.mxu0 0.0
    %1139 = vmatpush.msra.mxu0 0.0
    %1140 = vmatpush.msra.mxu0 0.0
    %1141 = vmatpush.msra.mxu0 0.0
    %1142 = vmatpush.msra.mxu0 0.0
    %1143 = vmatpush.msra.mxu0 0.0
    %1144 = vmatpush.msra.mxu0 0.0
    %1145 = vmatpush.msra.mxu0 0.0
    %1146 = vmatpush.msra.mxu0 0.0
    %1147 = vmatpush.msra.mxu0 0.0
    %1148 = vmatpush.msra.mxu0 0.0
    %1149 = vmatpush.msra.mxu0 0.0
    %v1150 = vand.u32 %v1101, 4294901760
    %v1151 = vsub.f32 %v1101, %v1150
    %v1152 = vand.u32 %v1151, 4294901760
    %v1153 = vsub.f32 %v1151, %v1152
    %v1154 = vand.u32 %v1153, 4294901760
    %1155 = vmatpush.msra.mxu0 %v1154
    %v1156 = vand.u32 %v1100, 4294901760
    %v1157 = vsub.f32 %v1100, %v1156
    %v1158 = vand.u32 %v1157, 4294901760
    %v1159 = vsub.f32 %v1157, %v1158
    %v1160 = vand.u32 %v1159, 4294901760
    %1161 = vmatpush.msra.mxu0 %v1160
    %v1162 = vand.u32 %v1099, 4294901760
    %v1163 = vsub.f32 %v1099, %v1162
    %v1164 = vand.u32 %v1163, 4294901760
    %v1165 = vsub.f32 %v1163, %v1164
    %v1166 = vand.u32 %v1165, 4294901760
    %1167 = vmatpush.msra.mxu0 %v1166
    %v1168 = vand.u32 %v1098, 4294901760
    %v1169 = vsub.f32 %v1098, %v1168
    %v1170 = vand.u32 %v1169, 4294901760
    %v1171 = vsub.f32 %v1169, %v1170
    %v1172 = vand.u32 %v1171, 4294901760
    %1173 = vmatpush.msra.mxu0 %v1172
    %v1174 = vand.u32 %v1107, 4294901760
    %1175 = vmatmul.f32.gmra.mxu0 %v1174
    %v1176 = vpop.f32.mrf.mxu0
    %v1177 = vadd.f32 %v1136, %v1176
    %1178 = vdwg.mxu0
    %1179 = vmatpush.msra.mxu0 0.0
    %1180 = vmatpush.msra.mxu0 0.0
    %1181 = vmatpush.msra.mxu0 0.0
    %1182 = vmatpush.msra.mxu0 0.0
    %1183 = vmatpush.msra.mxu0 0.0
    %1184 = vmatpush.msra.mxu0 0.0
    %1185 = vmatpush.msra.mxu0 0.0
    %1186 = vmatpush.msra.mxu0 0.0
    %1187 = vmatpush.msra.mxu0 0.0
    %1188 = vmatpush.msra.mxu0 0.0
    %1189 = vmatpush.msra.mxu0 0.0
    %1190 = vmatpush.msra.mxu0 0.0
    %v1191 = vand.u32 %v1101, 4294901760
    %v1192 = vsub.f32 %v1101, %v1191
    %1193 = vmatpush.msra.mxu0 %v1192
    %v1194 = vand.u32 %v1100, 4294901760
    %v1195 = vsub.f32 %v1100, %v1194
    %1196 = vmatpush.msra.mxu0 %v1195
    %v1197 = vand.u32 %v1099, 4294901760
    %v1198 = vsub.f32 %v1099, %v1197
    %1199 = vmatpush.msra.mxu0 %v1198
    %v1200 = vand.u32 %v1098, 4294901760
    %v1201 = vsub.f32 %v1098, %v1200
    %1202 = vmatpush.msra.mxu0 %v1201
    %v1203 = vand.u32 %v1107, 4294901760
    %v1204 = vsub.f32 %v1107, %v1203
    %1205 = vmatmul.f32.gmra.mxu0 %v1204
    %v1206 = vpop.f32.mrf.mxu0
    %v1207 = vadd.f32 %v1177, %v1206
    %1208 = vdwg.mxu0
    %1209 = vmatpush.msra.mxu0 0.0
    %1210 = vmatpush.msra.mxu0 0.0
    %1211 = vmatpush.msra.mxu0 0.0
    %1212 = vmatpush.msra.mxu0 0.0
    %1213 = vmatpush.msra.mxu0 0.0
    %1214 = vmatpush.msra.mxu0 0.0
    %1215 = vmatpush.msra.mxu0 0.0
    %1216 = vmatpush.msra.mxu0 0.0
    %1217 = vmatpush.msra.mxu0 0.0
    %1218 = vmatpush.msra.mxu0 0.0
    %1219 = vmatpush.msra.mxu0 0.0
    %1220 = vmatpush.msra.mxu0 0.0
    %v1221 = vand.u32 %v1101, 4294901760
    %1222 = vmatpush.msra.mxu0 %v1221
    %v1223 = vand.u32 %v1100, 4294901760
    %1224 = vmatpush.msra.mxu0 %v1223
    %v1225 = vand.u32 %v1099, 4294901760
    %1226 = vmatpush.msra.mxu0 %v1225
    %v1227 = vand.u32 %v1098, 4294901760
    %1228 = vmatpush.msra.mxu0 %v1227
    %v1229 = vand.u32 %v1107, 4294901760
    %v1230 = vsub.f32 %v1107, %v1229
    %v1231 = vand.u32 %v1230, 4294901760
    %1232 = vmatmul.f32.gmra.mxu0 %v1231
    %v1233 = vpop.f32.mrf.mxu0
    %v1234 = vadd.f32 %v1207, %v1233
    %1235 = vdwg.mxu0
    %1236 = vmatpush.msra.mxu0 0.0
    %1237 = vmatpush.msra.mxu0 0.0
    %1238 = vmatpush.msra.mxu0 0.0
    %1239 = vmatpush.msra.mxu0 0.0
    %1240 = vmatpush.msra.mxu0 0.0
    %1241 = vmatpush.msra.mxu0 0.0
    %1242 = vmatpush.msra.mxu0 0.0
    %1243 = vmatpush.msra.mxu0 0.0
    %1244 = vmatpush.msra.mxu0 0.0
    %1245 = vmatpush.msra.mxu0 0.0
    %1246 = vmatpush.msra.mxu0 0.0
    %1247 = vmatpush.msra.mxu0 0.0
    %v1248 = vand.u32 %v1101, 4294901760
    %v1249 = vsub.f32 %v1101, %v1248
    %v1250 = vand.u32 %v1249, 4294901760
    %1251 = vmatpush.msra.mxu0 %v1250
    %v1252 = vand.u32 %v1100, 4294901760
    %v1253 = vsub.f32 %v1100, %v1252
    %v1254 = vand.u32 %v1253, 4294901760
    %1255 = vmatpush.msra.mxu0 %v1254
    %v1256 = vand.u32 %v1099, 4294901760
    %v1257 = vsub.f32 %v1099, %v1256
    %v1258 = vand.u32 %v1257, 4294901760
    %1259 = vmatpush.msra.mxu0 %v1258
    %v1260 = vand.u32 %v1098, 4294901760
    %v1261 = vsub.f32 %v1098, %v1260
    %v1262 = vand.u32 %v1261, 4294901760
    %1263 = vmatpush.msra.mxu0 %v1262
    %v1264 = vand.u32 %v1107, 4294901760
    %1265 = vmatmul.f32.gmra.mxu0 %v1264
    %v1266 = vpop.f32.mrf.mxu0
    %v1267 = vadd.f32 %v1234, %v1266
    %1268 = vdwg.mxu0
    %1269 = vmatpush.msra.mxu0 0.0
    %1270 = vmatpush.msra.mxu0 0.0
    %1271 = vmatpush.msra.mxu0 0.0
    %1272 = vmatpush.msra.mxu0 0.0
    %1273 = vmatpush.msra.mxu0 0.0
    %1274 = vmatpush.msra.mxu0 0.0
    %1275 = vmatpush.msra.mxu0 0.0
    %1276 = vmatpush.msra.mxu0 0.0
    %1277 = vmatpush.msra.mxu0 0.0
    %1278 = vmatpush.msra.mxu0 0.0
    %1279 = vmatpush.msra.mxu0 0.0
    %1280 = vmatpush.msra.mxu0 0.0
    %v1281 = vand.u32 %v1101, 4294901760
    %1282 = vmatpush.msra.mxu0 %v1281
    %v1283 = vand.u32 %v1100, 4294901760
    %1284 = vmatpush.msra.mxu0 %v1283
    %v1285 = vand.u32 %v1099, 4294901760
    %1286 = vmatpush.msra.mxu0 %v1285
    %v1287 = vand.u32 %v1098, 4294901760
    %1288 = vmatpush.msra.mxu0 %v1287
    %v1289 = vand.u32 %v1107, 4294901760
    %1290 = vmatmul.f32.gmra.mxu0 %v1289
    %v1291 = vpop.f32.mrf.mxu0
    %v1292 = vadd.f32 %v1267, %v1291
    %1293 = vdwg.mxu0
    %v1294 = vld [vmem:[%s6] sm:$0xff]
    %v1295 = vld [vmem:[%s6 + $0x8] sm:$0xff]
    %v1296 = vld [vmem:[%s6 + $0x10] sm:$0xff]
    %v1297 = vld [vmem:[%s6 + $0x18] sm:$0xff]
    %v1298 = vld [vmem:[%s6 + $0x20] sm:$0xff]
    %v1299 = vld [vmem:[%s6 + $0x28] sm:$0xff]
    %v1300 = vld [vmem:[%s6 + $0x30] sm:$0xff]
    %v1301 = vld [vmem:[%s6 + $0x38] sm:$0xff]
    %v1302 = vld [vmem:[%s6 + $0x40] sm:$0xff]
    %v1303 = vld [vmem:[%s6 + $0x48] sm:$0xff]
    %v1304 = vld [vmem:[%s6 + $0x50] sm:$0xff]
    %v1305 = vld [vmem:[%s6 + $0x58] sm:$0xff]
    %v1306 = vld [vmem:[%s6 + $0x60] sm:$0xff]
    %v1307 = vld [vmem:[%s6 + $0x68] sm:$0xff]
    %v1308 = vld [vmem:[%s6 + $0x70] sm:$0xff]
    %v1309 = vld [vmem:[%s6 + $0x78] sm:$0xff]
    %1310 = vmatpush.msra.mxu0 0.0
    %1311 = vmatpush.msra.mxu0 0.0
    %1312 = vmatpush.msra.mxu0 0.0
    %1313 = vmatpush.msra.mxu0 0.0
    %1314 = vmatpush.msra.mxu0 0.0
    %1315 = vmatpush.msra.mxu0 0.0
    %1316 = vmatpush.msra.mxu0 0.0
    %1317 = vmatpush.msra.mxu0 0.0
    %1318 = vmatpush.msra.mxu0 0.0
    %1319 = vmatpush.msra.mxu0 0.0
    %1320 = vmatpush.msra.mxu0 0.0
    %1321 = vmatpush.msra.mxu0 0.0
    %v1322 = vand.u32 %v1306, 4294901760
    %1323 = vmatpush.msra.mxu0 %v1322
    %v1324 = vand.u32 %v1302, 4294901760
    %1325 = vmatpush.msra.mxu0 %v1324
    %v1326 = vand.u32 %v1298, 4294901760
    %1327 = vmatpush.msra.mxu0 %v1326
    %v1328 = vand.u32 %v1294, 4294901760
    %1329 = vmatpush.msra.mxu0 %v1328
    %v1330 = vand.u32 %v1107, 4294901760
    %v1331 = vsub.f32 %v1107, %v1330
    %v1332 = vand.u32 %v1331, 4294901760
    %v1333 = vsub.f32 %v1331, %v1332
    %v1334 = vand.u32 %v1333, 4294901760
    %1335 = vmatmul.f32.gmra.mxu0 %v1334
    %v1336 = vpop.f32.mrf.mxu0
    %v1337 = vadd.f32 0.0, %v1336
    %1338 = vdwg.mxu0
    %1339 = vmatpush.msra.mxu0 0.0
    %1340 = vmatpush.msra.mxu0 0.0
    %1341 = vmatpush.msra.mxu0 0.0
    %1342 = vmatpush.msra.mxu0 0.0
    %1343 = vmatpush.msra.mxu0 0.0
    %1344 = vmatpush.msra.mxu0 0.0
    %1345 = vmatpush.msra.mxu0 0.0
    %1346 = vmatpush.msra.mxu0 0.0
    %1347 = vmatpush.msra.mxu0 0.0
    %1348 = vmatpush.msra.mxu0 0.0
    %1349 = vmatpush.msra.mxu0 0.0
    %1350 = vmatpush.msra.mxu0 0.0
    %v1351 = vand.u32 %v1306, 4294901760
    %v1352 = vsub.f32 %v1306, %v1351
    %v1353 = vand.u32 %v1352, 4294901760
    %v1354 = vsub.f32 %v1352, %v1353
    %v1355 = vand.u32 %v1354, 4294901760
    %1356 = vmatpush.msra.mxu0 %v1355
    %v1357 = vand.u32 %v1302, 4294901760
    %v1358 = vsub.f32 %v1302, %v1357
    %v1359 = vand.u32 %v1358, 4294901760
    %v1360 = vsub.f32 %v1358, %v1359
    %v1361 = vand.u32 %v1360, 4294901760
    %1362 = vmatpush.msra.mxu0 %v1361
    %v1363 = vand.u32 %v1298, 4294901760
    %v1364 = vsub.f32 %v1298, %v1363
    %v1365 = vand.u32 %v1364, 4294901760
    %v1366 = vsub.f32 %v1364, %v1365
    %v1367 = vand.u32 %v1366, 4294901760
    %1368 = vmatpush.msra.mxu0 %v1367
    %v1369 = vand.u32 %v1294, 4294901760
    %v1370 = vsub.f32 %v1294, %v1369
    %v1371 = vand.u32 %v1370, 4294901760
    %v1372 = vsub.f32 %v1370, %v1371
    %v1373 = vand.u32 %v1372, 4294901760
    %1374 = vmatpush.msra.mxu0 %v1373
    %v1375 = vand.u32 %v1107, 4294901760
    %1376 = vmatmul.f32.gmra.mxu0 %v1375
    %v1377 = vpop.f32.mrf.mxu0
    %v1378 = vadd.f32 %v1337, %v1377
    %1379 = vdwg.mxu0
    %1380 = vmatpush.msra.mxu0 0.0
    %1381 = vmatpush.msra.mxu0 0.0
    %1382 = vmatpush.msra.mxu0 0.0
    %1383 = vmatpush.msra.mxu0 0.0
    %1384 = vmatpush.msra.mxu0 0.0
    %1385 = vmatpush.msra.mxu0 0.0
    %1386 = vmatpush.msra.mxu0 0.0
    %1387 = vmatpush.msra.mxu0 0.0
    %1388 = vmatpush.msra.mxu0 0.0
    %1389 = vmatpush.msra.mxu0 0.0
    %1390 = vmatpush.msra.mxu0 0.0
    %1391 = vmatpush.msra.mxu0 0.0
    %v1392 = vand.u32 %v1306, 4294901760
    %v1393 = vsub.f32 %v1306, %v1392
    %1394 = vmatpush.msra.mxu0 %v1393
    %v1395 = vand.u32 %v1302, 4294901760
    %v1396 = vsub.f32 %v1302, %v1395
    %1397 = vmatpush.msra.mxu0 %v1396
    %v1398 = vand.u32 %v1298, 4294901760
    %v1399 = vsub.f32 %v1298, %v1398
    %1400 = vmatpush.msra.mxu0 %v1399
    %v1401 = vand.u32 %v1294, 4294901760
    %v1402 = vsub.f32 %v1294, %v1401
    %1403 = vmatpush.msra.mxu0 %v1402
    %v1404 = vand.u32 %v1107, 4294901760
    %v1405 = vsub.f32 %v1107, %v1404
    %1406 = vmatmul.f32.gmra.mxu0 %v1405
    %v1407 = vpop.f32.mrf.mxu0
    %v1408 = vadd.f32 %v1378, %v1407
    %1409 = vdwg.mxu0
    %1410 = vmatpush.msra.mxu0 0.0
    %1411 = vmatpush.msra.mxu0 0.0
    %1412 = vmatpush.msra.mxu0 0.0
    %1413 = vmatpush.msra.mxu0 0.0
    %1414 = vmatpush.msra.mxu0 0.0
    %1415 = vmatpush.msra.mxu0 0.0
    %1416 = vmatpush.msra.mxu0 0.0
    %1417 = vmatpush.msra.mxu0 0.0
    %1418 = vmatpush.msra.mxu0 0.0
    %1419 = vmatpush.msra.mxu0 0.0
    %1420 = vmatpush.msra.mxu0 0.0
    %1421 = vmatpush.msra.mxu0 0.0
    %v1422 = vand.u32 %v1306, 4294901760
    %1423 = vmatpush.msra.mxu0 %v1422
    %v1424 = vand.u32 %v1302, 4294901760
    %1425 = vmatpush.msra.mxu0 %v1424
    %v1426 = vand.u32 %v1298, 4294901760
    %1427 = vmatpush.msra.mxu0 %v1426
    %v1428 = vand.u32 %v1294, 4294901760
    %1429 = vmatpush.msra.mxu0 %v1428
    %v1430 = vand.u32 %v1107, 4294901760
    %v1431 = vsub.f32 %v1107, %v1430
    %v1432 = vand.u32 %v1431, 4294901760
    %1433 = vmatmul.f32.gmra.mxu0 %v1432
    %v1434 = vpop.f32.mrf.mxu0
    %v1435 = vadd.f32 %v1408, %v1434
    %1436 = vdwg.mxu0
    %1437 = vmatpush.msra.mxu0 0.0
    %1438 = vmatpush.msra.mxu0 0.0
    %1439 = vmatpush.msra.mxu0 0.0
    %1440 = vmatpush.msra.mxu0 0.0
    %1441 = vmatpush.msra.mxu0 0.0
    %1442 = vmatpush.msra.mxu0 0.0
    %1443 = vmatpush.msra.mxu0 0.0
    %1444 = vmatpush.msra.mxu0 0.0
    %1445 = vmatpush.msra.mxu0 0.0
    %1446 = vmatpush.msra.mxu0 0.0
    %1447 = vmatpush.msra.mxu0 0.0
    %1448 = vmatpush.msra.mxu0 0.0
    %v1449 = vand.u32 %v1306, 4294901760
    %v1450 = vsub.f32 %v1306, %v1449
    %v1451 = vand.u32 %v1450, 4294901760
    %1452 = vmatpush.msra.mxu0 %v1451
    %v1453 = vand.u32 %v1302, 4294901760
    %v1454 = vsub.f32 %v1302, %v1453
    %v1455 = vand.u32 %v1454, 4294901760
    %1456 = vmatpush.msra.mxu0 %v1455
    %v1457 = vand.u32 %v1298, 4294901760
    %v1458 = vsub.f32 %v1298, %v1457
    %v1459 = vand.u32 %v1458, 4294901760
    %1460 = vmatpush.msra.mxu0 %v1459
    %v1461 = vand.u32 %v1294, 4294901760
    %v1462 = vsub.f32 %v1294, %v1461
    %v1463 = vand.u32 %v1462, 4294901760
    %1464 = vmatpush.msra.mxu0 %v1463
    %v1465 = vand.u32 %v1107, 4294901760
    %1466 = vmatmul.f32.gmra.mxu0 %v1465
    %v1467 = vpop.f32.mrf.mxu0
    %v1468 = vadd.f32 %v1435, %v1467
    %1469 = vdwg.mxu0
    %1470 = vmatpush.msra.mxu0 0.0
    %1471 = vmatpush.msra.mxu0 0.0
    %1472 = vmatpush.msra.mxu0 0.0
    %1473 = vmatpush.msra.mxu0 0.0
    %1474 = vmatpush.msra.mxu0 0.0
    %1475 = vmatpush.msra.mxu0 0.0
    %1476 = vmatpush.msra.mxu0 0.0
    %1477 = vmatpush.msra.mxu0 0.0
    %1478 = vmatpush.msra.mxu0 0.0
    %1479 = vmatpush.msra.mxu0 0.0
    %1480 = vmatpush.msra.mxu0 0.0
    %1481 = vmatpush.msra.mxu0 0.0
    %v1482 = vand.u32 %v1306, 4294901760
    %1483 = vmatpush.msra.mxu0 %v1482
    %v1484 = vand.u32 %v1302, 4294901760
    %1485 = vmatpush.msra.mxu0 %v1484
    %v1486 = vand.u32 %v1298, 4294901760
    %1487 = vmatpush.msra.mxu0 %v1486
    %v1488 = vand.u32 %v1294, 4294901760
    %1489 = vmatpush.msra.mxu0 %v1488
    %v1490 = vand.u32 %v1107, 4294901760
    %1491 = vmatmul.f32.gmra.mxu0 %v1490
    %v1492 = vpop.f32.mrf.mxu0
    %v1493 = vadd.f32 %v1468, %v1492
    %1494 = vdwg.mxu0
    %1495 = vmatpush.msra.mxu0 0.0
    %1496 = vmatpush.msra.mxu0 0.0
    %1497 = vmatpush.msra.mxu0 0.0
    %1498 = vmatpush.msra.mxu0 0.0
    %1499 = vmatpush.msra.mxu0 0.0
    %1500 = vmatpush.msra.mxu0 0.0
    %1501 = vmatpush.msra.mxu0 0.0
    %1502 = vmatpush.msra.mxu0 0.0
    %1503 = vmatpush.msra.mxu0 0.0
    %1504 = vmatpush.msra.mxu0 0.0
    %1505 = vmatpush.msra.mxu0 0.0
    %1506 = vmatpush.msra.mxu0 0.0
    %v1507 = vand.u32 %v1307, 4294901760
    %1508 = vmatpush.msra.mxu0 %v1507
    %v1509 = vand.u32 %v1303, 4294901760
    %1510 = vmatpush.msra.mxu0 %v1509
    %v1511 = vand.u32 %v1299, 4294901760
    %1512 = vmatpush.msra.mxu0 %v1511
    %v1513 = vand.u32 %v1295, 4294901760
    %1514 = vmatpush.msra.mxu0 %v1513
    %v1515 = vand.u32 %v1107, 4294901760
    %v1516 = vsub.f32 %v1107, %v1515
    %v1517 = vand.u32 %v1516, 4294901760
    %v1518 = vsub.f32 %v1516, %v1517
    %v1519 = vand.u32 %v1518, 4294901760
    %1520 = vmatmul.f32.gmra.mxu0 %v1519
    %v1521 = vpop.f32.mrf.mxu0
    %v1522 = vadd.f32 0.0, %v1521
    %1523 = vdwg.mxu0
    %1524 = vmatpush.msra.mxu0 0.0
    %1525 = vmatpush.msra.mxu0 0.0
    %1526 = vmatpush.msra.mxu0 0.0
    %1527 = vmatpush.msra.mxu0 0.0
    %1528 = vmatpush.msra.mxu0 0.0
    %1529 = vmatpush.msra.mxu0 0.0
    %1530 = vmatpush.msra.mxu0 0.0
    %1531 = vmatpush.msra.mxu0 0.0
    %1532 = vmatpush.msra.mxu0 0.0
    %1533 = vmatpush.msra.mxu0 0.0
    %1534 = vmatpush.msra.mxu0 0.0
    %1535 = vmatpush.msra.mxu0 0.0
    %v1536 = vand.u32 %v1307, 4294901760
    %v1537 = vsub.f32 %v1307, %v1536
    %v1538 = vand.u32 %v1537, 4294901760
    %v1539 = vsub.f32 %v1537, %v1538
    %v1540 = vand.u32 %v1539, 4294901760
    %1541 = vmatpush.msra.mxu0 %v1540
    %v1542 = vand.u32 %v1303, 4294901760
    %v1543 = vsub.f32 %v1303, %v1542
    %v1544 = vand.u32 %v1543, 4294901760
    %v1545 = vsub.f32 %v1543, %v1544
    %v1546 = vand.u32 %v1545, 4294901760
    %1547 = vmatpush.msra.mxu0 %v1546
    %v1548 = vand.u32 %v1299, 4294901760
    %v1549 = vsub.f32 %v1299, %v1548
    %v1550 = vand.u32 %v1549, 4294901760
    %v1551 = vsub.f32 %v1549, %v1550
    %v1552 = vand.u32 %v1551, 4294901760
    %1553 = vmatpush.msra.mxu0 %v1552
    %v1554 = vand.u32 %v1295, 4294901760
    %v1555 = vsub.f32 %v1295, %v1554
    %v1556 = vand.u32 %v1555, 4294901760
    %v1557 = vsub.f32 %v1555, %v1556
    %v1558 = vand.u32 %v1557, 4294901760
    %1559 = vmatpush.msra.mxu0 %v1558
    %v1560 = vand.u32 %v1107, 4294901760
    %1561 = vmatmul.f32.gmra.mxu0 %v1560
    %v1562 = vpop.f32.mrf.mxu0
    %v1563 = vadd.f32 %v1522, %v1562
    %1564 = vdwg.mxu0
    %1565 = vmatpush.msra.mxu0 0.0
    %1566 = vmatpush.msra.mxu0 0.0
    %1567 = vmatpush.msra.mxu0 0.0
    %1568 = vmatpush.msra.mxu0 0.0
    %1569 = vmatpush.msra.mxu0 0.0
    %1570 = vmatpush.msra.mxu0 0.0
    %1571 = vmatpush.msra.mxu0 0.0
    %1572 = vmatpush.msra.mxu0 0.0
    %1573 = vmatpush.msra.mxu0 0.0
    %1574 = vmatpush.msra.mxu0 0.0
    %1575 = vmatpush.msra.mxu0 0.0
    %1576 = vmatpush.msra.mxu0 0.0
    %v1577 = vand.u32 %v1307, 4294901760
    %v1578 = vsub.f32 %v1307, %v1577
    %1579 = vmatpush.msra.mxu0 %v1578
    %v1580 = vand.u32 %v1303, 4294901760
    %v1581 = vsub.f32 %v1303, %v1580
    %1582 = vmatpush.msra.mxu0 %v1581
    %v1583 = vand.u32 %v1299, 4294901760
    %v1584 = vsub.f32 %v1299, %v1583
    %1585 = vmatpush.msra.mxu0 %v1584
    %v1586 = vand.u32 %v1295, 4294901760
    %v1587 = vsub.f32 %v1295, %v1586
    %1588 = vmatpush.msra.mxu0 %v1587
    %v1589 = vand.u32 %v1107, 4294901760
    %v1590 = vsub.f32 %v1107, %v1589
    %1591 = vmatmul.f32.gmra.mxu0 %v1590
    %v1592 = vpop.f32.mrf.mxu0
    %v1593 = vadd.f32 %v1563, %v1592
    %1594 = vdwg.mxu0
    %1595 = vmatpush.msra.mxu0 0.0
    %1596 = vmatpush.msra.mxu0 0.0
    %1597 = vmatpush.msra.mxu0 0.0
    %1598 = vmatpush.msra.mxu0 0.0
    %1599 = vmatpush.msra.mxu0 0.0
    %1600 = vmatpush.msra.mxu0 0.0
    %1601 = vmatpush.msra.mxu0 0.0
    %1602 = vmatpush.msra.mxu0 0.0
    %1603 = vmatpush.msra.mxu0 0.0
    %1604 = vmatpush.msra.mxu0 0.0
    %1605 = vmatpush.msra.mxu0 0.0
    %1606 = vmatpush.msra.mxu0 0.0
    %v1607 = vand.u32 %v1307, 4294901760
    %1608 = vmatpush.msra.mxu0 %v1607
    %v1609 = vand.u32 %v1303, 4294901760
    %1610 = vmatpush.msra.mxu0 %v1609
    %v1611 = vand.u32 %v1299, 4294901760
    %1612 = vmatpush.msra.mxu0 %v1611
    %v1613 = vand.u32 %v1295, 4294901760
    %1614 = vmatpush.msra.mxu0 %v1613
    %v1615 = vand.u32 %v1107, 4294901760
    %v1616 = vsub.f32 %v1107, %v1615
    %v1617 = vand.u32 %v1616, 4294901760
    %1618 = vmatmul.f32.gmra.mxu0 %v1617
    %v1619 = vpop.f32.mrf.mxu0
    %v1620 = vadd.f32 %v1593, %v1619
    %1621 = vdwg.mxu0
    %1622 = vmatpush.msra.mxu0 0.0
    %1623 = vmatpush.msra.mxu0 0.0
    %1624 = vmatpush.msra.mxu0 0.0
    %1625 = vmatpush.msra.mxu0 0.0
    %1626 = vmatpush.msra.mxu0 0.0
    %1627 = vmatpush.msra.mxu0 0.0
    %1628 = vmatpush.msra.mxu0 0.0
    %1629 = vmatpush.msra.mxu0 0.0
    %1630 = vmatpush.msra.mxu0 0.0
    %1631 = vmatpush.msra.mxu0 0.0
    %1632 = vmatpush.msra.mxu0 0.0
    %1633 = vmatpush.msra.mxu0 0.0
    %v1634 = vand.u32 %v1307, 4294901760
    %v1635 = vsub.f32 %v1307, %v1634
    %v1636 = vand.u32 %v1635, 4294901760
    %1637 = vmatpush.msra.mxu0 %v1636
    %v1638 = vand.u32 %v1303, 4294901760
    %v1639 = vsub.f32 %v1303, %v1638
    %v1640 = vand.u32 %v1639, 4294901760
    %1641 = vmatpush.msra.mxu0 %v1640
    %v1642 = vand.u32 %v1299, 4294901760
    %v1643 = vsub.f32 %v1299, %v1642
    %v1644 = vand.u32 %v1643, 4294901760
    %1645 = vmatpush.msra.mxu0 %v1644
    %v1646 = vand.u32 %v1295, 4294901760
    %v1647 = vsub.f32 %v1295, %v1646
    %v1648 = vand.u32 %v1647, 4294901760
    %1649 = vmatpush.msra.mxu0 %v1648
    %v1650 = vand.u32 %v1107, 4294901760
    %1651 = vmatmul.f32.gmra.mxu0 %v1650
    %v1652 = vpop.f32.mrf.mxu0
    %v1653 = vadd.f32 %v1620, %v1652
    %1654 = vdwg.mxu0
    %1655 = vmatpush.msra.mxu0 0.0
    %1656 = vmatpush.msra.mxu0 0.0
    %1657 = vmatpush.msra.mxu0 0.0
    %1658 = vmatpush.msra.mxu0 0.0
    %1659 = vmatpush.msra.mxu0 0.0
    %1660 = vmatpush.msra.mxu0 0.0
    %1661 = vmatpush.msra.mxu0 0.0
    %1662 = vmatpush.msra.mxu0 0.0
    %1663 = vmatpush.msra.mxu0 0.0
    %1664 = vmatpush.msra.mxu0 0.0
    %1665 = vmatpush.msra.mxu0 0.0
    %1666 = vmatpush.msra.mxu0 0.0
    %v1667 = vand.u32 %v1307, 4294901760
    %1668 = vmatpush.msra.mxu0 %v1667
    %v1669 = vand.u32 %v1303, 4294901760
    %1670 = vmatpush.msra.mxu0 %v1669
    %v1671 = vand.u32 %v1299, 4294901760
    %1672 = vmatpush.msra.mxu0 %v1671
    %v1673 = vand.u32 %v1295, 4294901760
    %1674 = vmatpush.msra.mxu0 %v1673
    %v1675 = vand.u32 %v1107, 4294901760
    %1676 = vmatmul.f32.gmra.mxu0 %v1675
    %v1677 = vpop.f32.mrf.mxu0
    %v1678 = vadd.f32 %v1653, %v1677
    %1679 = vdwg.mxu0
    %1680 = vmatpush.msra.mxu0 0.0
    %1681 = vmatpush.msra.mxu0 0.0
    %1682 = vmatpush.msra.mxu0 0.0
    %1683 = vmatpush.msra.mxu0 0.0
    %1684 = vmatpush.msra.mxu0 0.0
    %1685 = vmatpush.msra.mxu0 0.0
    %1686 = vmatpush.msra.mxu0 0.0
    %1687 = vmatpush.msra.mxu0 0.0
    %1688 = vmatpush.msra.mxu0 0.0
    %1689 = vmatpush.msra.mxu0 0.0
    %1690 = vmatpush.msra.mxu0 0.0
    %1691 = vmatpush.msra.mxu0 0.0
    %v1692 = vand.u32 %v1308, 4294901760
    %1693 = vmatpush.msra.mxu0 %v1692
    %v1694 = vand.u32 %v1304, 4294901760
    %1695 = vmatpush.msra.mxu0 %v1694
    %v1696 = vand.u32 %v1300, 4294901760
    %1697 = vmatpush.msra.mxu0 %v1696
    %v1698 = vand.u32 %v1296, 4294901760
    %1699 = vmatpush.msra.mxu0 %v1698
    %v1700 = vand.u32 %v1107, 4294901760
    %v1701 = vsub.f32 %v1107, %v1700
    %v1702 = vand.u32 %v1701, 4294901760
    %v1703 = vsub.f32 %v1701, %v1702
    %v1704 = vand.u32 %v1703, 4294901760
    %1705 = vmatmul.f32.gmra.mxu0 %v1704
    %v1706 = vpop.f32.mrf.mxu0
    %v1707 = vadd.f32 0.0, %v1706
    %1708 = vdwg.mxu0
    %1709 = vmatpush.msra.mxu0 0.0
    %1710 = vmatpush.msra.mxu0 0.0
    %1711 = vmatpush.msra.mxu0 0.0
    %1712 = vmatpush.msra.mxu0 0.0
    %1713 = vmatpush.msra.mxu0 0.0
    %1714 = vmatpush.msra.mxu0 0.0
    %1715 = vmatpush.msra.mxu0 0.0
    %1716 = vmatpush.msra.mxu0 0.0
    %1717 = vmatpush.msra.mxu0 0.0
    %1718 = vmatpush.msra.mxu0 0.0
    %1719 = vmatpush.msra.mxu0 0.0
    %1720 = vmatpush.msra.mxu0 0.0
    %v1721 = vand.u32 %v1308, 4294901760
    %v1722 = vsub.f32 %v1308, %v1721
    %v1723 = vand.u32 %v1722, 4294901760
    %v1724 = vsub.f32 %v1722, %v1723
    %v1725 = vand.u32 %v1724, 4294901760
    %1726 = vmatpush.msra.mxu0 %v1725
    %v1727 = vand.u32 %v1304, 4294901760
    %v1728 = vsub.f32 %v1304, %v1727
    %v1729 = vand.u32 %v1728, 4294901760
    %v1730 = vsub.f32 %v1728, %v1729
    %v1731 = vand.u32 %v1730, 4294901760
    %1732 = vmatpush.msra.mxu0 %v1731
    %v1733 = vand.u32 %v1300, 4294901760
    %v1734 = vsub.f32 %v1300, %v1733
    %v1735 = vand.u32 %v1734, 4294901760
    %v1736 = vsub.f32 %v1734, %v1735
    %v1737 = vand.u32 %v1736, 4294901760
    %1738 = vmatpush.msra.mxu0 %v1737
    %v1739 = vand.u32 %v1296, 4294901760
    %v1740 = vsub.f32 %v1296, %v1739
    %v1741 = vand.u32 %v1740, 4294901760
    %v1742 = vsub.f32 %v1740, %v1741
    %v1743 = vand.u32 %v1742, 4294901760
    %1744 = vmatpush.msra.mxu0 %v1743
    %v1745 = vand.u32 %v1107, 4294901760
    %1746 = vmatmul.f32.gmra.mxu0 %v1745
    %v1747 = vpop.f32.mrf.mxu0
    %v1748 = vadd.f32 %v1707, %v1747
    %1749 = vdwg.mxu0
    %1750 = vmatpush.msra.mxu0 0.0
    %1751 = vmatpush.msra.mxu0 0.0
    %1752 = vmatpush.msra.mxu0 0.0
    %1753 = vmatpush.msra.mxu0 0.0
    %1754 = vmatpush.msra.mxu0 0.0
    %1755 = vmatpush.msra.mxu0 0.0
    %1756 = vmatpush.msra.mxu0 0.0
    %1757 = vmatpush.msra.mxu0 0.0
    %1758 = vmatpush.msra.mxu0 0.0
    %1759 = vmatpush.msra.mxu0 0.0
    %1760 = vmatpush.msra.mxu0 0.0
    %1761 = vmatpush.msra.mxu0 0.0
    %v1762 = vand.u32 %v1308, 4294901760
    %v1763 = vsub.f32 %v1308, %v1762
    %1764 = vmatpush.msra.mxu0 %v1763
    %v1765 = vand.u32 %v1304, 4294901760
    %v1766 = vsub.f32 %v1304, %v1765
    %1767 = vmatpush.msra.mxu0 %v1766
    %v1768 = vand.u32 %v1300, 4294901760
    %v1769 = vsub.f32 %v1300, %v1768
    %1770 = vmatpush.msra.mxu0 %v1769
    %v1771 = vand.u32 %v1296, 4294901760
    %v1772 = vsub.f32 %v1296, %v1771
    %1773 = vmatpush.msra.mxu0 %v1772
    %v1774 = vand.u32 %v1107, 4294901760
    %v1775 = vsub.f32 %v1107, %v1774
    %1776 = vmatmul.f32.gmra.mxu0 %v1775
    %v1777 = vpop.f32.mrf.mxu0
    %v1778 = vadd.f32 %v1748, %v1777
    %1779 = vdwg.mxu0
    %1780 = vmatpush.msra.mxu0 0.0
    %1781 = vmatpush.msra.mxu0 0.0
    %1782 = vmatpush.msra.mxu0 0.0
    %1783 = vmatpush.msra.mxu0 0.0
    %1784 = vmatpush.msra.mxu0 0.0
    %1785 = vmatpush.msra.mxu0 0.0
    %1786 = vmatpush.msra.mxu0 0.0
    %1787 = vmatpush.msra.mxu0 0.0
    %1788 = vmatpush.msra.mxu0 0.0
    %1789 = vmatpush.msra.mxu0 0.0
    %1790 = vmatpush.msra.mxu0 0.0
    %1791 = vmatpush.msra.mxu0 0.0
    %v1792 = vand.u32 %v1308, 4294901760
    %1793 = vmatpush.msra.mxu0 %v1792
    %v1794 = vand.u32 %v1304, 4294901760
    %1795 = vmatpush.msra.mxu0 %v1794
    %v1796 = vand.u32 %v1300, 4294901760
    %1797 = vmatpush.msra.mxu0 %v1796
    %v1798 = vand.u32 %v1296, 4294901760
    %1799 = vmatpush.msra.mxu0 %v1798
    %v1800 = vand.u32 %v1107, 4294901760
    %v1801 = vsub.f32 %v1107, %v1800
    %v1802 = vand.u32 %v1801, 4294901760
    %1803 = vmatmul.f32.gmra.mxu0 %v1802
    %v1804 = vpop.f32.mrf.mxu0
    %v1805 = vadd.f32 %v1778, %v1804
    %1806 = vdwg.mxu0
    %1807 = vmatpush.msra.mxu0 0.0
    %1808 = vmatpush.msra.mxu0 0.0
    %1809 = vmatpush.msra.mxu0 0.0
    %1810 = vmatpush.msra.mxu0 0.0
    %1811 = vmatpush.msra.mxu0 0.0
    %1812 = vmatpush.msra.mxu0 0.0
    %1813 = vmatpush.msra.mxu0 0.0
    %1814 = vmatpush.msra.mxu0 0.0
    %1815 = vmatpush.msra.mxu0 0.0
    %1816 = vmatpush.msra.mxu0 0.0
    %1817 = vmatpush.msra.mxu0 0.0
    %1818 = vmatpush.msra.mxu0 0.0
    %v1819 = vand.u32 %v1308, 4294901760
    %v1820 = vsub.f32 %v1308, %v1819
    %v1821 = vand.u32 %v1820, 4294901760
    %1822 = vmatpush.msra.mxu0 %v1821
    %v1823 = vand.u32 %v1304, 4294901760
    %v1824 = vsub.f32 %v1304, %v1823
    %v1825 = vand.u32 %v1824, 4294901760
    %1826 = vmatpush.msra.mxu0 %v1825
    %v1827 = vand.u32 %v1300, 4294901760
    %v1828 = vsub.f32 %v1300, %v1827
    %v1829 = vand.u32 %v1828, 4294901760
    %1830 = vmatpush.msra.mxu0 %v1829
    %v1831 = vand.u32 %v1296, 4294901760
    %v1832 = vsub.f32 %v1296, %v1831
    %v1833 = vand.u32 %v1832, 4294901760
    %1834 = vmatpush.msra.mxu0 %v1833
    %v1835 = vand.u32 %v1107, 4294901760
    %1836 = vmatmul.f32.gmra.mxu0 %v1835
    %v1837 = vpop.f32.mrf.mxu0
    %v1838 = vadd.f32 %v1805, %v1837
    %1839 = vdwg.mxu0
    %1840 = vmatpush.msra.mxu0 0.0
    %1841 = vmatpush.msra.mxu0 0.0
    %1842 = vmatpush.msra.mxu0 0.0
    %1843 = vmatpush.msra.mxu0 0.0
    %1844 = vmatpush.msra.mxu0 0.0
    %1845 = vmatpush.msra.mxu0 0.0
    %1846 = vmatpush.msra.mxu0 0.0
    %1847 = vmatpush.msra.mxu0 0.0
    %1848 = vmatpush.msra.mxu0 0.0
    %1849 = vmatpush.msra.mxu0 0.0
    %1850 = vmatpush.msra.mxu0 0.0
    %1851 = vmatpush.msra.mxu0 0.0
    %v1852 = vand.u32 %v1308, 4294901760
    %1853 = vmatpush.msra.mxu0 %v1852
    %v1854 = vand.u32 %v1304, 4294901760
    %1855 = vmatpush.msra.mxu0 %v1854
    %v1856 = vand.u32 %v1300, 4294901760
    %1857 = vmatpush.msra.mxu0 %v1856
    %v1858 = vand.u32 %v1296, 4294901760
    %1859 = vmatpush.msra.mxu0 %v1858
    %v1860 = vand.u32 %v1107, 4294901760
    %1861 = vmatmul.f32.gmra.mxu0 %v1860
    %v1862 = vpop.f32.mrf.mxu0
    %v1863 = vadd.f32 %v1838, %v1862
    %1864 = vdwg.mxu0
    %1865 = vmatpush.msra.mxu0 0.0
    %1866 = vmatpush.msra.mxu0 0.0
    %1867 = vmatpush.msra.mxu0 0.0
    %1868 = vmatpush.msra.mxu0 0.0
    %1869 = vmatpush.msra.mxu0 0.0
    %1870 = vmatpush.msra.mxu0 0.0
    %1871 = vmatpush.msra.mxu0 0.0
    %1872 = vmatpush.msra.mxu0 0.0
    %1873 = vmatpush.msra.mxu0 0.0
    %1874 = vmatpush.msra.mxu0 0.0
    %1875 = vmatpush.msra.mxu0 0.0
    %1876 = vmatpush.msra.mxu0 0.0
    %v1877 = vand.u32 %v1309, 4294901760
    %1878 = vmatpush.msra.mxu0 %v1877
    %v1879 = vand.u32 %v1305, 4294901760
    %1880 = vmatpush.msra.mxu0 %v1879
    %v1881 = vand.u32 %v1301, 4294901760
    %1882 = vmatpush.msra.mxu0 %v1881
    %v1883 = vand.u32 %v1297, 4294901760
    %1884 = vmatpush.msra.mxu0 %v1883
    %v1885 = vand.u32 %v1107, 4294901760
    %v1886 = vsub.f32 %v1107, %v1885
    %v1887 = vand.u32 %v1886, 4294901760
    %v1888 = vsub.f32 %v1886, %v1887
    %v1889 = vand.u32 %v1888, 4294901760
    %1890 = vmatmul.f32.gmra.mxu0 %v1889
    %v1891 = vpop.f32.mrf.mxu0
    %v1892 = vadd.f32 0.0, %v1891
    %1893 = vdwg.mxu0
    %1894 = vmatpush.msra.mxu0 0.0
    %1895 = vmatpush.msra.mxu0 0.0
    %1896 = vmatpush.msra.mxu0 0.0
    %1897 = vmatpush.msra.mxu0 0.0
    %1898 = vmatpush.msra.mxu0 0.0
    %1899 = vmatpush.msra.mxu0 0.0
    %1900 = vmatpush.msra.mxu0 0.0
    %1901 = vmatpush.msra.mxu0 0.0
    %1902 = vmatpush.msra.mxu0 0.0
    %1903 = vmatpush.msra.mxu0 0.0
    %1904 = vmatpush.msra.mxu0 0.0
    %1905 = vmatpush.msra.mxu0 0.0
    %v1906 = vand.u32 %v1309, 4294901760
    %v1907 = vsub.f32 %v1309, %v1906
    %v1908 = vand.u32 %v1907, 4294901760
    %v1909 = vsub.f32 %v1907, %v1908
    %v1910 = vand.u32 %v1909, 4294901760
    %1911 = vmatpush.msra.mxu0 %v1910
    %v1912 = vand.u32 %v1305, 4294901760
    %v1913 = vsub.f32 %v1305, %v1912
    %v1914 = vand.u32 %v1913, 4294901760
    %v1915 = vsub.f32 %v1913, %v1914
    %v1916 = vand.u32 %v1915, 4294901760
    %1917 = vmatpush.msra.mxu0 %v1916
    %v1918 = vand.u32 %v1301, 4294901760
    %v1919 = vsub.f32 %v1301, %v1918
    %v1920 = vand.u32 %v1919, 4294901760
    %v1921 = vsub.f32 %v1919, %v1920
    %v1922 = vand.u32 %v1921, 4294901760
    %1923 = vmatpush.msra.mxu0 %v1922
    %v1924 = vand.u32 %v1297, 4294901760
    %v1925 = vsub.f32 %v1297, %v1924
    %v1926 = vand.u32 %v1925, 4294901760
    %v1927 = vsub.f32 %v1925, %v1926
    %v1928 = vand.u32 %v1927, 4294901760
    %1929 = vmatpush.msra.mxu0 %v1928
    %v1930 = vand.u32 %v1107, 4294901760
    %1931 = vmatmul.f32.gmra.mxu0 %v1930
    %v1932 = vpop.f32.mrf.mxu0
    %v1933 = vadd.f32 %v1892, %v1932
    %1934 = vdwg.mxu0
    %1935 = vmatpush.msra.mxu0 0.0
    %1936 = vmatpush.msra.mxu0 0.0
    %1937 = vmatpush.msra.mxu0 0.0
    %1938 = vmatpush.msra.mxu0 0.0
    %1939 = vmatpush.msra.mxu0 0.0
    %1940 = vmatpush.msra.mxu0 0.0
    %1941 = vmatpush.msra.mxu0 0.0
    %1942 = vmatpush.msra.mxu0 0.0
    %1943 = vmatpush.msra.mxu0 0.0
    %1944 = vmatpush.msra.mxu0 0.0
    %1945 = vmatpush.msra.mxu0 0.0
    %1946 = vmatpush.msra.mxu0 0.0
    %v1947 = vand.u32 %v1309, 4294901760
    %v1948 = vsub.f32 %v1309, %v1947
    %1949 = vmatpush.msra.mxu0 %v1948
    %v1950 = vand.u32 %v1305, 4294901760
    %v1951 = vsub.f32 %v1305, %v1950
    %1952 = vmatpush.msra.mxu0 %v1951
    %v1953 = vand.u32 %v1301, 4294901760
    %v1954 = vsub.f32 %v1301, %v1953
    %1955 = vmatpush.msra.mxu0 %v1954
    %v1956 = vand.u32 %v1297, 4294901760
    %v1957 = vsub.f32 %v1297, %v1956
    %1958 = vmatpush.msra.mxu0 %v1957
    %v1959 = vand.u32 %v1107, 4294901760
    %v1960 = vsub.f32 %v1107, %v1959
    %1961 = vmatmul.f32.gmra.mxu0 %v1960
    %v1962 = vpop.f32.mrf.mxu0
    %v1963 = vadd.f32 %v1933, %v1962
    %1964 = vdwg.mxu0
    %1965 = vmatpush.msra.mxu0 0.0
    %1966 = vmatpush.msra.mxu0 0.0
    %1967 = vmatpush.msra.mxu0 0.0
    %1968 = vmatpush.msra.mxu0 0.0
    %1969 = vmatpush.msra.mxu0 0.0
    %1970 = vmatpush.msra.mxu0 0.0
    %1971 = vmatpush.msra.mxu0 0.0
    %1972 = vmatpush.msra.mxu0 0.0
    %1973 = vmatpush.msra.mxu0 0.0
    %1974 = vmatpush.msra.mxu0 0.0
    %1975 = vmatpush.msra.mxu0 0.0
    %1976 = vmatpush.msra.mxu0 0.0
    %v1977 = vand.u32 %v1309, 4294901760
    %1978 = vmatpush.msra.mxu0 %v1977
    %v1979 = vand.u32 %v1305, 4294901760
    %1980 = vmatpush.msra.mxu0 %v1979
    %v1981 = vand.u32 %v1301, 4294901760
    %1982 = vmatpush.msra.mxu0 %v1981
    %v1983 = vand.u32 %v1297, 4294901760
    %1984 = vmatpush.msra.mxu0 %v1983
    %v1985 = vand.u32 %v1107, 4294901760
    %v1986 = vsub.f32 %v1107, %v1985
    %v1987 = vand.u32 %v1986, 4294901760
    %1988 = vmatmul.f32.gmra.mxu0 %v1987
    %v1989 = vpop.f32.mrf.mxu0
    %v1990 = vadd.f32 %v1963, %v1989
    %1991 = vdwg.mxu0
    %1992 = vmatpush.msra.mxu0 0.0
    %1993 = vmatpush.msra.mxu0 0.0
    %1994 = vmatpush.msra.mxu0 0.0
    %1995 = vmatpush.msra.mxu0 0.0
    %1996 = vmatpush.msra.mxu0 0.0
    %1997 = vmatpush.msra.mxu0 0.0
    %1998 = vmatpush.msra.mxu0 0.0
    %1999 = vmatpush.msra.mxu0 0.0
    %2000 = vmatpush.msra.mxu0 0.0
    %2001 = vmatpush.msra.mxu0 0.0
    %2002 = vmatpush.msra.mxu0 0.0
    %2003 = vmatpush.msra.mxu0 0.0
    %v2004 = vand.u32 %v1309, 4294901760
    %v2005 = vsub.f32 %v1309, %v2004
    %v2006 = vand.u32 %v2005, 4294901760
    %2007 = vmatpush.msra.mxu0 %v2006
    %v2008 = vand.u32 %v1305, 4294901760
    %v2009 = vsub.f32 %v1305, %v2008
    %v2010 = vand.u32 %v2009, 4294901760
    %2011 = vmatpush.msra.mxu0 %v2010
    %v2012 = vand.u32 %v1301, 4294901760
    %v2013 = vsub.f32 %v1301, %v2012
    %v2014 = vand.u32 %v2013, 4294901760
    %2015 = vmatpush.msra.mxu0 %v2014
    %v2016 = vand.u32 %v1297, 4294901760
    %v2017 = vsub.f32 %v1297, %v2016
    %v2018 = vand.u32 %v2017, 4294901760
    %2019 = vmatpush.msra.mxu0 %v2018
    %v2020 = vand.u32 %v1107, 4294901760
    %2021 = vmatmul.f32.gmra.mxu0 %v2020
    %v2022 = vpop.f32.mrf.mxu0
    %v2023 = vadd.f32 %v1990, %v2022
    %2024 = vdwg.mxu0
    %2025 = vmatpush.msra.mxu0 0.0
    %2026 = vmatpush.msra.mxu0 0.0
    %2027 = vmatpush.msra.mxu0 0.0
    %2028 = vmatpush.msra.mxu0 0.0
    %2029 = vmatpush.msra.mxu0 0.0
    %2030 = vmatpush.msra.mxu0 0.0
    %2031 = vmatpush.msra.mxu0 0.0
    %2032 = vmatpush.msra.mxu0 0.0
    %2033 = vmatpush.msra.mxu0 0.0
    %2034 = vmatpush.msra.mxu0 0.0
    %2035 = vmatpush.msra.mxu0 0.0
    %2036 = vmatpush.msra.mxu0 0.0
    %v2037 = vand.u32 %v1309, 4294901760
    %2038 = vmatpush.msra.mxu0 %v2037
    %v2039 = vand.u32 %v1305, 4294901760
    %2040 = vmatpush.msra.mxu0 %v2039
    %v2041 = vand.u32 %v1301, 4294901760
    %2042 = vmatpush.msra.mxu0 %v2041
    %v2043 = vand.u32 %v1297, 4294901760
    %2044 = vmatpush.msra.mxu0 %v2043
    %v2045 = vand.u32 %v1107, 4294901760
    %2046 = vmatmul.f32.gmra.mxu0 %v2045
    %v2047 = vpop.f32.mrf.mxu0
    %v2048 = vadd.f32 %v2023, %v2047
    %2049 = vdwg.mxu0
    %v2050 = vld [vmem:[%s7] sm:$0xff]
    %v2051 = vld [vmem:[%s7 + $0x8] sm:$0xff]
    %v2052 = vld [vmem:[%s7 + $0x10] sm:$0xff]
    %v2053 = vld [vmem:[%s7 + $0x18] sm:$0xff]
    %v2054 = vld [vmem:[%s7 + $0x20] sm:$0xff]
    %v2055 = vld [vmem:[%s7 + $0x28] sm:$0xff]
    %v2056 = vld [vmem:[%s7 + $0x30] sm:$0xff]
    %v2057 = vld [vmem:[%s7 + $0x38] sm:$0xff]
    %v2058 = vld [vmem:[%s7 + $0x40] sm:$0xff]
    %v2059 = vld [vmem:[%s7 + $0x48] sm:$0xff]
    %v2060 = vld [vmem:[%s7 + $0x50] sm:$0xff]
    %v2061 = vld [vmem:[%s7 + $0x58] sm:$0xff]
    %v2062 = vld [vmem:[%s7 + $0x60] sm:$0xff]
    %v2063 = vld [vmem:[%s7 + $0x68] sm:$0xff]
    %v2064 = vld [vmem:[%s7 + $0x70] sm:$0xff]
    %v2065 = vld [vmem:[%s7 + $0x78] sm:$0xff]
    %2066 = vmatpush.msra.mxu0 0.0
    %2067 = vmatpush.msra.mxu0 0.0
    %2068 = vmatpush.msra.mxu0 0.0
    %2069 = vmatpush.msra.mxu0 0.0
    %2070 = vmatpush.msra.mxu0 0.0
    %2071 = vmatpush.msra.mxu0 0.0
    %2072 = vmatpush.msra.mxu0 0.0
    %2073 = vmatpush.msra.mxu0 0.0
    %2074 = vmatpush.msra.mxu0 0.0
    %2075 = vmatpush.msra.mxu0 0.0
    %2076 = vmatpush.msra.mxu0 0.0
    %2077 = vmatpush.msra.mxu0 0.0
    %v2078 = vand.u32 %v2062, 4294901760
    %2079 = vmatpush.msra.mxu0 %v2078
    %v2080 = vand.u32 %v2058, 4294901760
    %2081 = vmatpush.msra.mxu0 %v2080
    %v2082 = vand.u32 %v2054, 4294901760
    %2083 = vmatpush.msra.mxu0 %v2082
    %v2084 = vand.u32 %v2050, 4294901760
    %2085 = vmatpush.msra.mxu0 %v2084
    %v2086 = vand.u32 %v1107, 4294901760
    %v2087 = vsub.f32 %v1107, %v2086
    %v2088 = vand.u32 %v2087, 4294901760
    %v2089 = vsub.f32 %v2087, %v2088
    %v2090 = vand.u32 %v2089, 4294901760
    %2091 = vmatmul.f32.gmra.mxu0 %v2090
    %v2092 = vpop.f32.mrf.mxu0
    %v2093 = vadd.f32 0.0, %v2092
    %2094 = vdwg.mxu0
    %2095 = vmatpush.msra.mxu0 0.0
    %2096 = vmatpush.msra.mxu0 0.0
    %2097 = vmatpush.msra.mxu0 0.0
    %2098 = vmatpush.msra.mxu0 0.0
    %2099 = vmatpush.msra.mxu0 0.0
    %2100 = vmatpush.msra.mxu0 0.0
    %2101 = vmatpush.msra.mxu0 0.0
    %2102 = vmatpush.msra.mxu0 0.0
    %2103 = vmatpush.msra.mxu0 0.0
    %2104 = vmatpush.msra.mxu0 0.0
    %2105 = vmatpush.msra.mxu0 0.0
    %2106 = vmatpush.msra.mxu0 0.0
    %v2107 = vand.u32 %v2062, 4294901760
    %v2108 = vsub.f32 %v2062, %v2107
    %v2109 = vand.u32 %v2108, 4294901760
    %v2110 = vsub.f32 %v2108, %v2109
    %v2111 = vand.u32 %v2110, 4294901760
    %2112 = vmatpush.msra.mxu0 %v2111
    %v2113 = vand.u32 %v2058, 4294901760
    %v2114 = vsub.f32 %v2058, %v2113
    %v2115 = vand.u32 %v2114, 4294901760
    %v2116 = vsub.f32 %v2114, %v2115
    %v2117 = vand.u32 %v2116, 4294901760
    %2118 = vmatpush.msra.mxu0 %v2117
    %v2119 = vand.u32 %v2054, 4294901760
    %v2120 = vsub.f32 %v2054, %v2119
    %v2121 = vand.u32 %v2120, 4294901760
    %v2122 = vsub.f32 %v2120, %v2121
    %v2123 = vand.u32 %v2122, 4294901760
    %2124 = vmatpush.msra.mxu0 %v2123
    %v2125 = vand.u32 %v2050, 4294901760
    %v2126 = vsub.f32 %v2050, %v2125
    %v2127 = vand.u32 %v2126, 4294901760
    %v2128 = vsub.f32 %v2126, %v2127
    %v2129 = vand.u32 %v2128, 4294901760
    %2130 = vmatpush.msra.mxu0 %v2129
    %v2131 = vand.u32 %v1107, 4294901760
    %2132 = vmatmul.f32.gmra.mxu0 %v2131
    %v2133 = vpop.f32.mrf.mxu0
    %v2134 = vadd.f32 %v2093, %v2133
    %2135 = vdwg.mxu0
    %2136 = vmatpush.msra.mxu0 0.0
    %2137 = vmatpush.msra.mxu0 0.0
    %2138 = vmatpush.msra.mxu0 0.0
    %2139 = vmatpush.msra.mxu0 0.0
    %2140 = vmatpush.msra.mxu0 0.0
    %2141 = vmatpush.msra.mxu0 0.0
    %2142 = vmatpush.msra.mxu0 0.0
    %2143 = vmatpush.msra.mxu0 0.0
    %2144 = vmatpush.msra.mxu0 0.0
    %2145 = vmatpush.msra.mxu0 0.0
    %2146 = vmatpush.msra.mxu0 0.0
    %2147 = vmatpush.msra.mxu0 0.0
    %v2148 = vand.u32 %v2062, 4294901760
    %v2149 = vsub.f32 %v2062, %v2148
    %2150 = vmatpush.msra.mxu0 %v2149
    %v2151 = vand.u32 %v2058, 4294901760
    %v2152 = vsub.f32 %v2058, %v2151
    %2153 = vmatpush.msra.mxu0 %v2152
    %v2154 = vand.u32 %v2054, 4294901760
    %v2155 = vsub.f32 %v2054, %v2154
    %2156 = vmatpush.msra.mxu0 %v2155
    %v2157 = vand.u32 %v2050, 4294901760
    %v2158 = vsub.f32 %v2050, %v2157
    %2159 = vmatpush.msra.mxu0 %v2158
    %v2160 = vand.u32 %v1107, 4294901760
    %v2161 = vsub.f32 %v1107, %v2160
    %2162 = vmatmul.f32.gmra.mxu0 %v2161
    %v2163 = vpop.f32.mrf.mxu0
    %v2164 = vadd.f32 %v2134, %v2163
    %2165 = vdwg.mxu0
    %2166 = vmatpush.msra.mxu0 0.0
    %2167 = vmatpush.msra.mxu0 0.0
    %2168 = vmatpush.msra.mxu0 0.0
    %2169 = vmatpush.msra.mxu0 0.0
    %2170 = vmatpush.msra.mxu0 0.0
    %2171 = vmatpush.msra.mxu0 0.0
    %2172 = vmatpush.msra.mxu0 0.0
    %2173 = vmatpush.msra.mxu0 0.0
    %2174 = vmatpush.msra.mxu0 0.0
    %2175 = vmatpush.msra.mxu0 0.0
    %2176 = vmatpush.msra.mxu0 0.0
    %2177 = vmatpush.msra.mxu0 0.0
    %v2178 = vand.u32 %v2062, 4294901760
    %2179 = vmatpush.msra.mxu0 %v2178
    %v2180 = vand.u32 %v2058, 4294901760
    %2181 = vmatpush.msra.mxu0 %v2180
    %v2182 = vand.u32 %v2054, 4294901760
    %2183 = vmatpush.msra.mxu0 %v2182
    %v2184 = vand.u32 %v2050, 4294901760
    %2185 = vmatpush.msra.mxu0 %v2184
    %v2186 = vand.u32 %v1107, 4294901760
    %v2187 = vsub.f32 %v1107, %v2186
    %v2188 = vand.u32 %v2187, 4294901760
    %2189 = vmatmul.f32.gmra.mxu0 %v2188
    %v2190 = vpop.f32.mrf.mxu0
    %v2191 = vadd.f32 %v2164, %v2190
    %2192 = vdwg.mxu0
    %2193 = vmatpush.msra.mxu0 0.0
    %2194 = vmatpush.msra.mxu0 0.0
    %2195 = vmatpush.msra.mxu0 0.0
    %2196 = vmatpush.msra.mxu0 0.0
    %2197 = vmatpush.msra.mxu0 0.0
    %2198 = vmatpush.msra.mxu0 0.0
    %2199 = vmatpush.msra.mxu0 0.0
    %2200 = vmatpush.msra.mxu0 0.0
    %2201 = vmatpush.msra.mxu0 0.0
    %2202 = vmatpush.msra.mxu0 0.0
    %2203 = vmatpush.msra.mxu0 0.0
    %2204 = vmatpush.msra.mxu0 0.0
    %v2205 = vand.u32 %v2062, 4294901760
    %v2206 = vsub.f32 %v2062, %v2205
    %v2207 = vand.u32 %v2206, 4294901760
    %2208 = vmatpush.msra.mxu0 %v2207
    %v2209 = vand.u32 %v2058, 4294901760
    %v2210 = vsub.f32 %v2058, %v2209
    %v2211 = vand.u32 %v2210, 4294901760
    %2212 = vmatpush.msra.mxu0 %v2211
    %v2213 = vand.u32 %v2054, 4294901760
    %v2214 = vsub.f32 %v2054, %v2213
    %v2215 = vand.u32 %v2214, 4294901760
    %2216 = vmatpush.msra.mxu0 %v2215
    %v2217 = vand.u32 %v2050, 4294901760
    %v2218 = vsub.f32 %v2050, %v2217
    %v2219 = vand.u32 %v2218, 4294901760
    %2220 = vmatpush.msra.mxu0 %v2219
    %v2221 = vand.u32 %v1107, 4294901760
    %2222 = vmatmul.f32.gmra.mxu0 %v2221
    %v2223 = vpop.f32.mrf.mxu0
    %v2224 = vadd.f32 %v2191, %v2223
    %2225 = vdwg.mxu0
    %2226 = vmatpush.msra.mxu0 0.0
    %2227 = vmatpush.msra.mxu0 0.0
    %2228 = vmatpush.msra.mxu0 0.0
    %2229 = vmatpush.msra.mxu0 0.0
    %2230 = vmatpush.msra.mxu0 0.0
    %2231 = vmatpush.msra.mxu0 0.0
    %2232 = vmatpush.msra.mxu0 0.0
    %2233 = vmatpush.msra.mxu0 0.0
    %2234 = vmatpush.msra.mxu0 0.0
    %2235 = vmatpush.msra.mxu0 0.0
    %2236 = vmatpush.msra.mxu0 0.0
    %2237 = vmatpush.msra.mxu0 0.0
    %v2238 = vand.u32 %v2062, 4294901760
    %2239 = vmatpush.msra.mxu0 %v2238
    %v2240 = vand.u32 %v2058, 4294901760
    %2241 = vmatpush.msra.mxu0 %v2240
    %v2242 = vand.u32 %v2054, 4294901760
    %2243 = vmatpush.msra.mxu0 %v2242
    %v2244 = vand.u32 %v2050, 4294901760
    %2245 = vmatpush.msra.mxu0 %v2244
    %v2246 = vand.u32 %v1107, 4294901760
    %2247 = vmatmul.f32.gmra.mxu0 %v2246
    %v2248 = vpop.f32.mrf.mxu0
    %v2249 = vadd.f32 %v2224, %v2248
    %2250 = vdwg.mxu0
    %2251 = vmatpush.msra.mxu0 0.0
    %2252 = vmatpush.msra.mxu0 0.0
    %2253 = vmatpush.msra.mxu0 0.0
    %2254 = vmatpush.msra.mxu0 0.0
    %2255 = vmatpush.msra.mxu0 0.0
    %2256 = vmatpush.msra.mxu0 0.0
    %2257 = vmatpush.msra.mxu0 0.0
    %2258 = vmatpush.msra.mxu0 0.0
    %2259 = vmatpush.msra.mxu0 0.0
    %2260 = vmatpush.msra.mxu0 0.0
    %2261 = vmatpush.msra.mxu0 0.0
    %2262 = vmatpush.msra.mxu0 0.0
    %v2263 = vand.u32 %v2063, 4294901760
    %2264 = vmatpush.msra.mxu0 %v2263
    %v2265 = vand.u32 %v2059, 4294901760
    %2266 = vmatpush.msra.mxu0 %v2265
    %v2267 = vand.u32 %v2055, 4294901760
    %2268 = vmatpush.msra.mxu0 %v2267
    %v2269 = vand.u32 %v2051, 4294901760
    %2270 = vmatpush.msra.mxu0 %v2269
    %v2271 = vand.u32 %v1107, 4294901760
    %v2272 = vsub.f32 %v1107, %v2271
    %v2273 = vand.u32 %v2272, 4294901760
    %v2274 = vsub.f32 %v2272, %v2273
    %v2275 = vand.u32 %v2274, 4294901760
    %2276 = vmatmul.f32.gmra.mxu0 %v2275
    %v2277 = vpop.f32.mrf.mxu0
    %v2278 = vadd.f32 0.0, %v2277
    %2279 = vdwg.mxu0
    %2280 = vmatpush.msra.mxu0 0.0
    %2281 = vmatpush.msra.mxu0 0.0
    %2282 = vmatpush.msra.mxu0 0.0
    %2283 = vmatpush.msra.mxu0 0.0
    %2284 = vmatpush.msra.mxu0 0.0
    %2285 = vmatpush.msra.mxu0 0.0
    %2286 = vmatpush.msra.mxu0 0.0
    %2287 = vmatpush.msra.mxu0 0.0
    %2288 = vmatpush.msra.mxu0 0.0
    %2289 = vmatpush.msra.mxu0 0.0
    %2290 = vmatpush.msra.mxu0 0.0
    %2291 = vmatpush.msra.mxu0 0.0
    %v2292 = vand.u32 %v2063, 4294901760
    %v2293 = vsub.f32 %v2063, %v2292
    %v2294 = vand.u32 %v2293, 4294901760
    %v2295 = vsub.f32 %v2293, %v2294
    %v2296 = vand.u32 %v2295, 4294901760
    %2297 = vmatpush.msra.mxu0 %v2296
    %v2298 = vand.u32 %v2059, 4294901760
    %v2299 = vsub.f32 %v2059, %v2298
    %v2300 = vand.u32 %v2299, 4294901760
    %v2301 = vsub.f32 %v2299, %v2300
    %v2302 = vand.u32 %v2301, 4294901760
    %2303 = vmatpush.msra.mxu0 %v2302
    %v2304 = vand.u32 %v2055, 4294901760
    %v2305 = vsub.f32 %v2055, %v2304
    %v2306 = vand.u32 %v2305, 4294901760
    %v2307 = vsub.f32 %v2305, %v2306
    %v2308 = vand.u32 %v2307, 4294901760
    %2309 = vmatpush.msra.mxu0 %v2308
    %v2310 = vand.u32 %v2051, 4294901760
    %v2311 = vsub.f32 %v2051, %v2310
    %v2312 = vand.u32 %v2311, 4294901760
    %v2313 = vsub.f32 %v2311, %v2312
    %v2314 = vand.u32 %v2313, 4294901760
    %2315 = vmatpush.msra.mxu0 %v2314
    %v2316 = vand.u32 %v1107, 4294901760
    %2317 = vmatmul.f32.gmra.mxu0 %v2316
    %v2318 = vpop.f32.mrf.mxu0
    %v2319 = vadd.f32 %v2278, %v2318
    %2320 = vdwg.mxu0
    %2321 = vmatpush.msra.mxu0 0.0
    %2322 = vmatpush.msra.mxu0 0.0
    %2323 = vmatpush.msra.mxu0 0.0
    %2324 = vmatpush.msra.mxu0 0.0
    %2325 = vmatpush.msra.mxu0 0.0
    %2326 = vmatpush.msra.mxu0 0.0
    %2327 = vmatpush.msra.mxu0 0.0
    %2328 = vmatpush.msra.mxu0 0.0
    %2329 = vmatpush.msra.mxu0 0.0
    %2330 = vmatpush.msra.mxu0 0.0
    %2331 = vmatpush.msra.mxu0 0.0
    %2332 = vmatpush.msra.mxu0 0.0
    %v2333 = vand.u32 %v2063, 4294901760
    %v2334 = vsub.f32 %v2063, %v2333
    %2335 = vmatpush.msra.mxu0 %v2334
    %v2336 = vand.u32 %v2059, 4294901760
    %v2337 = vsub.f32 %v2059, %v2336
    %2338 = vmatpush.msra.mxu0 %v2337
    %v2339 = vand.u32 %v2055, 4294901760
    %v2340 = vsub.f32 %v2055, %v2339
    %2341 = vmatpush.msra.mxu0 %v2340
    %v2342 = vand.u32 %v2051, 4294901760
    %v2343 = vsub.f32 %v2051, %v2342
    %2344 = vmatpush.msra.mxu0 %v2343
    %v2345 = vand.u32 %v1107, 4294901760
    %v2346 = vsub.f32 %v1107, %v2345
    %2347 = vmatmul.f32.gmra.mxu0 %v2346
    %v2348 = vpop.f32.mrf.mxu0
    %v2349 = vadd.f32 %v2319, %v2348
    %2350 = vdwg.mxu0
    %2351 = vmatpush.msra.mxu0 0.0
    %2352 = vmatpush.msra.mxu0 0.0
    %2353 = vmatpush.msra.mxu0 0.0
    %2354 = vmatpush.msra.mxu0 0.0
    %2355 = vmatpush.msra.mxu0 0.0
    %2356 = vmatpush.msra.mxu0 0.0
    %2357 = vmatpush.msra.mxu0 0.0
    %2358 = vmatpush.msra.mxu0 0.0
    %2359 = vmatpush.msra.mxu0 0.0
    %2360 = vmatpush.msra.mxu0 0.0
    %2361 = vmatpush.msra.mxu0 0.0
    %2362 = vmatpush.msra.mxu0 0.0
    %v2363 = vand.u32 %v2063, 4294901760
    %2364 = vmatpush.msra.mxu0 %v2363
    %v2365 = vand.u32 %v2059, 4294901760
    %2366 = vmatpush.msra.mxu0 %v2365
    %v2367 = vand.u32 %v2055, 4294901760
    %2368 = vmatpush.msra.mxu0 %v2367
    %v2369 = vand.u32 %v2051, 4294901760
    %2370 = vmatpush.msra.mxu0 %v2369
    %v2371 = vand.u32 %v1107, 4294901760
    %v2372 = vsub.f32 %v1107, %v2371
    %v2373 = vand.u32 %v2372, 4294901760
    %2374 = vmatmul.f32.gmra.mxu0 %v2373
    %v2375 = vpop.f32.mrf.mxu0
    %v2376 = vadd.f32 %v2349, %v2375
    %2377 = vdwg.mxu0
    %2378 = vmatpush.msra.mxu0 0.0
    %2379 = vmatpush.msra.mxu0 0.0
    %2380 = vmatpush.msra.mxu0 0.0
    %2381 = vmatpush.msra.mxu0 0.0
    %2382 = vmatpush.msra.mxu0 0.0
    %2383 = vmatpush.msra.mxu0 0.0
    %2384 = vmatpush.msra.mxu0 0.0
    %2385 = vmatpush.msra.mxu0 0.0
    %2386 = vmatpush.msra.mxu0 0.0
    %2387 = vmatpush.msra.mxu0 0.0
    %2388 = vmatpush.msra.mxu0 0.0
    %2389 = vmatpush.msra.mxu0 0.0
    %v2390 = vand.u32 %v2063, 4294901760
    %v2391 = vsub.f32 %v2063, %v2390
    %v2392 = vand.u32 %v2391, 4294901760
    %2393 = vmatpush.msra.mxu0 %v2392
    %v2394 = vand.u32 %v2059, 4294901760
    %v2395 = vsub.f32 %v2059, %v2394
    %v2396 = vand.u32 %v2395, 4294901760
    %2397 = vmatpush.msra.mxu0 %v2396
    %v2398 = vand.u32 %v2055, 4294901760
    %v2399 = vsub.f32 %v2055, %v2398
    %v2400 = vand.u32 %v2399, 4294901760
    %2401 = vmatpush.msra.mxu0 %v2400
    %v2402 = vand.u32 %v2051, 4294901760
    %v2403 = vsub.f32 %v2051, %v2402
    %v2404 = vand.u32 %v2403, 4294901760
    %2405 = vmatpush.msra.mxu0 %v2404
    %v2406 = vand.u32 %v1107, 4294901760
    %2407 = vmatmul.f32.gmra.mxu0 %v2406
    %v2408 = vpop.f32.mrf.mxu0
    %v2409 = vadd.f32 %v2376, %v2408
    %2410 = vdwg.mxu0
    %2411 = vmatpush.msra.mxu0 0.0
    %2412 = vmatpush.msra.mxu0 0.0
    %2413 = vmatpush.msra.mxu0 0.0
    %2414 = vmatpush.msra.mxu0 0.0
    %2415 = vmatpush.msra.mxu0 0.0
    %2416 = vmatpush.msra.mxu0 0.0
    %2417 = vmatpush.msra.mxu0 0.0
    %2418 = vmatpush.msra.mxu0 0.0
    %2419 = vmatpush.msra.mxu0 0.0
    %2420 = vmatpush.msra.mxu0 0.0
    %2421 = vmatpush.msra.mxu0 0.0
    %2422 = vmatpush.msra.mxu0 0.0
    %v2423 = vand.u32 %v2063, 4294901760
    %2424 = vmatpush.msra.mxu0 %v2423
    %v2425 = vand.u32 %v2059, 4294901760
    %2426 = vmatpush.msra.mxu0 %v2425
    %v2427 = vand.u32 %v2055, 4294901760
    %2428 = vmatpush.msra.mxu0 %v2427
    %v2429 = vand.u32 %v2051, 4294901760
    %2430 = vmatpush.msra.mxu0 %v2429
    %v2431 = vand.u32 %v1107, 4294901760
    %2432 = vmatmul.f32.gmra.mxu0 %v2431
    %v2433 = vpop.f32.mrf.mxu0
    %v2434 = vadd.f32 %v2409, %v2433
    %2435 = vdwg.mxu0
    %2436 = vmatpush.msra.mxu0 0.0
    %2437 = vmatpush.msra.mxu0 0.0
    %2438 = vmatpush.msra.mxu0 0.0
    %2439 = vmatpush.msra.mxu0 0.0
    %2440 = vmatpush.msra.mxu0 0.0
    %2441 = vmatpush.msra.mxu0 0.0
    %2442 = vmatpush.msra.mxu0 0.0
    %2443 = vmatpush.msra.mxu0 0.0
    %2444 = vmatpush.msra.mxu0 0.0
    %2445 = vmatpush.msra.mxu0 0.0
    %2446 = vmatpush.msra.mxu0 0.0
    %2447 = vmatpush.msra.mxu0 0.0
    %v2448 = vand.u32 %v2064, 4294901760
    %2449 = vmatpush.msra.mxu0 %v2448
    %v2450 = vand.u32 %v2060, 4294901760
    %2451 = vmatpush.msra.mxu0 %v2450
    %v2452 = vand.u32 %v2056, 4294901760
    %2453 = vmatpush.msra.mxu0 %v2452
    %v2454 = vand.u32 %v2052, 4294901760
    %2455 = vmatpush.msra.mxu0 %v2454
    %v2456 = vand.u32 %v1107, 4294901760
    %v2457 = vsub.f32 %v1107, %v2456
    %v2458 = vand.u32 %v2457, 4294901760
    %v2459 = vsub.f32 %v2457, %v2458
    %v2460 = vand.u32 %v2459, 4294901760
    %2461 = vmatmul.f32.gmra.mxu0 %v2460
    %v2462 = vpop.f32.mrf.mxu0
    %v2463 = vadd.f32 0.0, %v2462
    %2464 = vdwg.mxu0
    %2465 = vmatpush.msra.mxu0 0.0
    %2466 = vmatpush.msra.mxu0 0.0
    %2467 = vmatpush.msra.mxu0 0.0
    %2468 = vmatpush.msra.mxu0 0.0
    %2469 = vmatpush.msra.mxu0 0.0
    %2470 = vmatpush.msra.mxu0 0.0
    %2471 = vmatpush.msra.mxu0 0.0
    %2472 = vmatpush.msra.mxu0 0.0
    %2473 = vmatpush.msra.mxu0 0.0
    %2474 = vmatpush.msra.mxu0 0.0
    %2475 = vmatpush.msra.mxu0 0.0
    %2476 = vmatpush.msra.mxu0 0.0
    %v2477 = vand.u32 %v2064, 4294901760
    %v2478 = vsub.f32 %v2064, %v2477
    %v2479 = vand.u32 %v2478, 4294901760
    %v2480 = vsub.f32 %v2478, %v2479
    %v2481 = vand.u32 %v2480, 4294901760
    %2482 = vmatpush.msra.mxu0 %v2481
    %v2483 = vand.u32 %v2060, 4294901760
    %v2484 = vsub.f32 %v2060, %v2483
    %v2485 = vand.u32 %v2484, 4294901760
    %v2486 = vsub.f32 %v2484, %v2485
    %v2487 = vand.u32 %v2486, 4294901760
    %2488 = vmatpush.msra.mxu0 %v2487
    %v2489 = vand.u32 %v2056, 4294901760
    %v2490 = vsub.f32 %v2056, %v2489
    %v2491 = vand.u32 %v2490, 4294901760
    %v2492 = vsub.f32 %v2490, %v2491
    %v2493 = vand.u32 %v2492, 4294901760
    %2494 = vmatpush.msra.mxu0 %v2493
    %v2495 = vand.u32 %v2052, 4294901760
    %v2496 = vsub.f32 %v2052, %v2495
    %v2497 = vand.u32 %v2496, 4294901760
    %v2498 = vsub.f32 %v2496, %v2497
    %v2499 = vand.u32 %v2498, 4294901760
    %2500 = vmatpush.msra.mxu0 %v2499
    %v2501 = vand.u32 %v1107, 4294901760
    %2502 = vmatmul.f32.gmra.mxu0 %v2501
    %v2503 = vpop.f32.mrf.mxu0
    %v2504 = vadd.f32 %v2463, %v2503
    %2505 = vdwg.mxu0
    %2506 = vmatpush.msra.mxu0 0.0
    %2507 = vmatpush.msra.mxu0 0.0
    %2508 = vmatpush.msra.mxu0 0.0
    %2509 = vmatpush.msra.mxu0 0.0
    %2510 = vmatpush.msra.mxu0 0.0
    %2511 = vmatpush.msra.mxu0 0.0
    %2512 = vmatpush.msra.mxu0 0.0
    %2513 = vmatpush.msra.mxu0 0.0
    %2514 = vmatpush.msra.mxu0 0.0
    %2515 = vmatpush.msra.mxu0 0.0
    %2516 = vmatpush.msra.mxu0 0.0
    %2517 = vmatpush.msra.mxu0 0.0
    %v2518 = vand.u32 %v2064, 4294901760
    %v2519 = vsub.f32 %v2064, %v2518
    %2520 = vmatpush.msra.mxu0 %v2519
    %v2521 = vand.u32 %v2060, 4294901760
    %v2522 = vsub.f32 %v2060, %v2521
    %2523 = vmatpush.msra.mxu0 %v2522
    %v2524 = vand.u32 %v2056, 4294901760
    %v2525 = vsub.f32 %v2056, %v2524
    %2526 = vmatpush.msra.mxu0 %v2525
    %v2527 = vand.u32 %v2052, 4294901760
    %v2528 = vsub.f32 %v2052, %v2527
    %2529 = vmatpush.msra.mxu0 %v2528
    %v2530 = vand.u32 %v1107, 4294901760
    %v2531 = vsub.f32 %v1107, %v2530
    %2532 = vmatmul.f32.gmra.mxu0 %v2531
    %v2533 = vpop.f32.mrf.mxu0
    %v2534 = vadd.f32 %v2504, %v2533
    %2535 = vdwg.mxu0
    %2536 = vmatpush.msra.mxu0 0.0
    %2537 = vmatpush.msra.mxu0 0.0
    %2538 = vmatpush.msra.mxu0 0.0
    %2539 = vmatpush.msra.mxu0 0.0
    %2540 = vmatpush.msra.mxu0 0.0
    %2541 = vmatpush.msra.mxu0 0.0
    %2542 = vmatpush.msra.mxu0 0.0
    %2543 = vmatpush.msra.mxu0 0.0
    %2544 = vmatpush.msra.mxu0 0.0
    %2545 = vmatpush.msra.mxu0 0.0
    %2546 = vmatpush.msra.mxu0 0.0
    %2547 = vmatpush.msra.mxu0 0.0
    %v2548 = vand.u32 %v2064, 4294901760
    %2549 = vmatpush.msra.mxu0 %v2548
    %v2550 = vand.u32 %v2060, 4294901760
    %2551 = vmatpush.msra.mxu0 %v2550
    %v2552 = vand.u32 %v2056, 4294901760
    %2553 = vmatpush.msra.mxu0 %v2552
    %v2554 = vand.u32 %v2052, 4294901760
    %2555 = vmatpush.msra.mxu0 %v2554
    %v2556 = vand.u32 %v1107, 4294901760
    %v2557 = vsub.f32 %v1107, %v2556
    %v2558 = vand.u32 %v2557, 4294901760
    %2559 = vmatmul.f32.gmra.mxu0 %v2558
    %v2560 = vpop.f32.mrf.mxu0
    %v2561 = vadd.f32 %v2534, %v2560
    %2562 = vdwg.mxu0
    %2563 = vmatpush.msra.mxu0 0.0
    %2564 = vmatpush.msra.mxu0 0.0
    %2565 = vmatpush.msra.mxu0 0.0
    %2566 = vmatpush.msra.mxu0 0.0
    %2567 = vmatpush.msra.mxu0 0.0
    %2568 = vmatpush.msra.mxu0 0.0
    %2569 = vmatpush.msra.mxu0 0.0
    %2570 = vmatpush.msra.mxu0 0.0
    %2571 = vmatpush.msra.mxu0 0.0
    %2572 = vmatpush.msra.mxu0 0.0
    %2573 = vmatpush.msra.mxu0 0.0
    %2574 = vmatpush.msra.mxu0 0.0
    %v2575 = vand.u32 %v2064, 4294901760
    %v2576 = vsub.f32 %v2064, %v2575
    %v2577 = vand.u32 %v2576, 4294901760
    %2578 = vmatpush.msra.mxu0 %v2577
    %v2579 = vand.u32 %v2060, 4294901760
    %v2580 = vsub.f32 %v2060, %v2579
    %v2581 = vand.u32 %v2580, 4294901760
    %2582 = vmatpush.msra.mxu0 %v2581
    %v2583 = vand.u32 %v2056, 4294901760
    %v2584 = vsub.f32 %v2056, %v2583
    %v2585 = vand.u32 %v2584, 4294901760
    %2586 = vmatpush.msra.mxu0 %v2585
    %v2587 = vand.u32 %v2052, 4294901760
    %v2588 = vsub.f32 %v2052, %v2587
    %v2589 = vand.u32 %v2588, 4294901760
    %2590 = vmatpush.msra.mxu0 %v2589
    %v2591 = vand.u32 %v1107, 4294901760
    %2592 = vmatmul.f32.gmra.mxu0 %v2591
    %v2593 = vpop.f32.mrf.mxu0
    %v2594 = vadd.f32 %v2561, %v2593
    %2595 = vdwg.mxu0
    %2596 = vmatpush.msra.mxu0 0.0
    %2597 = vmatpush.msra.mxu0 0.0
    %2598 = vmatpush.msra.mxu0 0.0
    %2599 = vmatpush.msra.mxu0 0.0
    %2600 = vmatpush.msra.mxu0 0.0
    %2601 = vmatpush.msra.mxu0 0.0
    %2602 = vmatpush.msra.mxu0 0.0
    %2603 = vmatpush.msra.mxu0 0.0
    %2604 = vmatpush.msra.mxu0 0.0
    %2605 = vmatpush.msra.mxu0 0.0
    %2606 = vmatpush.msra.mxu0 0.0
    %2607 = vmatpush.msra.mxu0 0.0
    %v2608 = vand.u32 %v2064, 4294901760
    %2609 = vmatpush.msra.mxu0 %v2608
    %v2610 = vand.u32 %v2060, 4294901760
    %2611 = vmatpush.msra.mxu0 %v2610
    %v2612 = vand.u32 %v2056, 4294901760
    %2613 = vmatpush.msra.mxu0 %v2612
    %v2614 = vand.u32 %v2052, 4294901760
    %2615 = vmatpush.msra.mxu0 %v2614
    %v2616 = vand.u32 %v1107, 4294901760
    %2617 = vmatmul.f32.gmra.mxu0 %v2616
    %v2618 = vpop.f32.mrf.mxu0
    %v2619 = vadd.f32 %v2594, %v2618
    %2620 = vdwg.mxu0
    %2621 = vmatpush.msra.mxu0 0.0
    %2622 = vmatpush.msra.mxu0 0.0
    %2623 = vmatpush.msra.mxu0 0.0
    %2624 = vmatpush.msra.mxu0 0.0
    %2625 = vmatpush.msra.mxu0 0.0
    %2626 = vmatpush.msra.mxu0 0.0
    %2627 = vmatpush.msra.mxu0 0.0
    %2628 = vmatpush.msra.mxu0 0.0
    %2629 = vmatpush.msra.mxu0 0.0
    %2630 = vmatpush.msra.mxu0 0.0
    %2631 = vmatpush.msra.mxu0 0.0
    %2632 = vmatpush.msra.mxu0 0.0
    %v2633 = vand.u32 %v2065, 4294901760
    %2634 = vmatpush.msra.mxu0 %v2633
    %v2635 = vand.u32 %v2061, 4294901760
    %2636 = vmatpush.msra.mxu0 %v2635
    %v2637 = vand.u32 %v2057, 4294901760
    %2638 = vmatpush.msra.mxu0 %v2637
    %v2639 = vand.u32 %v2053, 4294901760
    %2640 = vmatpush.msra.mxu0 %v2639
    %v2641 = vand.u32 %v1107, 4294901760
    %v2642 = vsub.f32 %v1107, %v2641
    %v2643 = vand.u32 %v2642, 4294901760
    %v2644 = vsub.f32 %v2642, %v2643
    %v2645 = vand.u32 %v2644, 4294901760
    %2646 = vmatmul.f32.gmra.mxu0 %v2645
    %v2647 = vpop.f32.mrf.mxu0
    %v2648 = vadd.f32 0.0, %v2647
    %2649 = vdwg.mxu0
    %2650 = vmatpush.msra.mxu0 0.0
    %2651 = vmatpush.msra.mxu0 0.0
    %2652 = vmatpush.msra.mxu0 0.0
    %2653 = vmatpush.msra.mxu0 0.0
    %2654 = vmatpush.msra.mxu0 0.0
    %2655 = vmatpush.msra.mxu0 0.0
    %2656 = vmatpush.msra.mxu0 0.0
    %2657 = vmatpush.msra.mxu0 0.0
    %2658 = vmatpush.msra.mxu0 0.0
    %2659 = vmatpush.msra.mxu0 0.0
    %2660 = vmatpush.msra.mxu0 0.0
    %2661 = vmatpush.msra.mxu0 0.0
    %v2662 = vand.u32 %v2065, 4294901760
    %v2663 = vsub.f32 %v2065, %v2662
    %v2664 = vand.u32 %v2663, 4294901760
    %v2665 = vsub.f32 %v2663, %v2664
    %v2666 = vand.u32 %v2665, 4294901760
    %2667 = vmatpush.msra.mxu0 %v2666
    %v2668 = vand.u32 %v2061, 4294901760
    %v2669 = vsub.f32 %v2061, %v2668
    %v2670 = vand.u32 %v2669, 4294901760
    %v2671 = vsub.f32 %v2669, %v2670
    %v2672 = vand.u32 %v2671, 4294901760
    %2673 = vmatpush.msra.mxu0 %v2672
    %v2674 = vand.u32 %v2057, 4294901760
    %v2675 = vsub.f32 %v2057, %v2674
    %v2676 = vand.u32 %v2675, 4294901760
    %v2677 = vsub.f32 %v2675, %v2676
    %v2678 = vand.u32 %v2677, 4294901760
    %2679 = vmatpush.msra.mxu0 %v2678
    %v2680 = vand.u32 %v2053, 4294901760
    %v2681 = vsub.f32 %v2053, %v2680
    %v2682 = vand.u32 %v2681, 4294901760
    %v2683 = vsub.f32 %v2681, %v2682
    %v2684 = vand.u32 %v2683, 4294901760
    %2685 = vmatpush.msra.mxu0 %v2684
    %v2686 = vand.u32 %v1107, 4294901760
    %2687 = vmatmul.f32.gmra.mxu0 %v2686
    %v2688 = vpop.f32.mrf.mxu0
    %v2689 = vadd.f32 %v2648, %v2688
    %2690 = vdwg.mxu0
    %2691 = vmatpush.msra.mxu0 0.0
    %2692 = vmatpush.msra.mxu0 0.0
    %2693 = vmatpush.msra.mxu0 0.0
    %2694 = vmatpush.msra.mxu0 0.0
    %2695 = vmatpush.msra.mxu0 0.0
    %2696 = vmatpush.msra.mxu0 0.0
    %2697 = vmatpush.msra.mxu0 0.0
    %2698 = vmatpush.msra.mxu0 0.0
    %2699 = vmatpush.msra.mxu0 0.0
    %2700 = vmatpush.msra.mxu0 0.0
    %2701 = vmatpush.msra.mxu0 0.0
    %2702 = vmatpush.msra.mxu0 0.0
    %v2703 = vand.u32 %v2065, 4294901760
    %v2704 = vsub.f32 %v2065, %v2703
    %2705 = vmatpush.msra.mxu0 %v2704
    %v2706 = vand.u32 %v2061, 4294901760
    %v2707 = vsub.f32 %v2061, %v2706
    %2708 = vmatpush.msra.mxu0 %v2707
    %v2709 = vand.u32 %v2057, 4294901760
    %v2710 = vsub.f32 %v2057, %v2709
    %2711 = vmatpush.msra.mxu0 %v2710
    %v2712 = vand.u32 %v2053, 4294901760
    %v2713 = vsub.f32 %v2053, %v2712
    %2714 = vmatpush.msra.mxu0 %v2713
    %v2715 = vand.u32 %v1107, 4294901760
    %v2716 = vsub.f32 %v1107, %v2715
    %2717 = vmatmul.f32.gmra.mxu0 %v2716
    %v2718 = vpop.f32.mrf.mxu0
    %v2719 = vadd.f32 %v2689, %v2718
    %2720 = vdwg.mxu0
    %2721 = vmatpush.msra.mxu0 0.0
    %2722 = vmatpush.msra.mxu0 0.0
    %2723 = vmatpush.msra.mxu0 0.0
    %2724 = vmatpush.msra.mxu0 0.0
    %2725 = vmatpush.msra.mxu0 0.0
    %2726 = vmatpush.msra.mxu0 0.0
    %2727 = vmatpush.msra.mxu0 0.0
    %2728 = vmatpush.msra.mxu0 0.0
    %2729 = vmatpush.msra.mxu0 0.0
    %2730 = vmatpush.msra.mxu0 0.0
    %2731 = vmatpush.msra.mxu0 0.0
    %2732 = vmatpush.msra.mxu0 0.0
    %v2733 = vand.u32 %v2065, 4294901760
    %2734 = vmatpush.msra.mxu0 %v2733
    %v2735 = vand.u32 %v2061, 4294901760
    %2736 = vmatpush.msra.mxu0 %v2735
    %v2737 = vand.u32 %v2057, 4294901760
    %2738 = vmatpush.msra.mxu0 %v2737
    %v2739 = vand.u32 %v2053, 4294901760
    %2740 = vmatpush.msra.mxu0 %v2739
    %v2741 = vand.u32 %v1107, 4294901760
    %v2742 = vsub.f32 %v1107, %v2741
    %v2743 = vand.u32 %v2742, 4294901760
    %2744 = vmatmul.f32.gmra.mxu0 %v2743
    %v2745 = vpop.f32.mrf.mxu0
    %v2746 = vadd.f32 %v2719, %v2745
    %2747 = vdwg.mxu0
    %2748 = vmatpush.msra.mxu0 0.0
    %2749 = vmatpush.msra.mxu0 0.0
    %2750 = vmatpush.msra.mxu0 0.0
    %2751 = vmatpush.msra.mxu0 0.0
    %2752 = vmatpush.msra.mxu0 0.0
    %2753 = vmatpush.msra.mxu0 0.0
    %2754 = vmatpush.msra.mxu0 0.0
    %2755 = vmatpush.msra.mxu0 0.0
    %2756 = vmatpush.msra.mxu0 0.0
    %2757 = vmatpush.msra.mxu0 0.0
    %2758 = vmatpush.msra.mxu0 0.0
    %2759 = vmatpush.msra.mxu0 0.0
    %v2760 = vand.u32 %v2065, 4294901760
    %v2761 = vsub.f32 %v2065, %v2760
    %v2762 = vand.u32 %v2761, 4294901760
    %2763 = vmatpush.msra.mxu0 %v2762
    %v2764 = vand.u32 %v2061, 4294901760
    %v2765 = vsub.f32 %v2061, %v2764
    %v2766 = vand.u32 %v2765, 4294901760
    %2767 = vmatpush.msra.mxu0 %v2766
    %v2768 = vand.u32 %v2057, 4294901760
    %v2769 = vsub.f32 %v2057, %v2768
    %v2770 = vand.u32 %v2769, 4294901760
    %2771 = vmatpush.msra.mxu0 %v2770
    %v2772 = vand.u32 %v2053, 4294901760
    %v2773 = vsub.f32 %v2053, %v2772
    %v2774 = vand.u32 %v2773, 4294901760
    %2775 = vmatpush.msra.mxu0 %v2774
    %v2776 = vand.u32 %v1107, 4294901760
    %2777 = vmatmul.f32.gmra.mxu0 %v2776
    %v2778 = vpop.f32.mrf.mxu0
    %v2779 = vadd.f32 %v2746, %v2778
    %2780 = vdwg.mxu0
    %2781 = vmatpush.msra.mxu0 0.0
    %2782 = vmatpush.msra.mxu0 0.0
    %2783 = vmatpush.msra.mxu0 0.0
    %2784 = vmatpush.msra.mxu0 0.0
    %2785 = vmatpush.msra.mxu0 0.0
    %2786 = vmatpush.msra.mxu0 0.0
    %2787 = vmatpush.msra.mxu0 0.0
    %2788 = vmatpush.msra.mxu0 0.0
    %2789 = vmatpush.msra.mxu0 0.0
    %2790 = vmatpush.msra.mxu0 0.0
    %2791 = vmatpush.msra.mxu0 0.0
    %2792 = vmatpush.msra.mxu0 0.0
    %v2793 = vand.u32 %v2065, 4294901760
    %2794 = vmatpush.msra.mxu0 %v2793
    %v2795 = vand.u32 %v2061, 4294901760
    %2796 = vmatpush.msra.mxu0 %v2795
    %v2797 = vand.u32 %v2057, 4294901760
    %2798 = vmatpush.msra.mxu0 %v2797
    %v2799 = vand.u32 %v2053, 4294901760
    %2800 = vmatpush.msra.mxu0 %v2799
    %v2801 = vand.u32 %v1107, 4294901760
    %2802 = vmatmul.f32.gmra.mxu0 %v2801
    %v2803 = vpop.f32.mrf.mxu0
    %v2804 = vadd.f32 %v2779, %v2803
    %2805 = vdwg.mxu0
    %v2806 = vmul.f32 %v1493, %v2249
    %v2807 = vmul.f32 %v1678, %v2434
    %v2808 = vmul.f32 %v1863, %v2619
    %v2809 = vmul.f32 %v2048, %v2804
    %v2810 = vld [vmem:[%s9] sm:$0xff]
    %v2811 = vld [vmem:[%s9 + $0x8] sm:$0xff]
    %v2812 = vld [vmem:[%s9 + $0x10] sm:$0xff]
    %v2813 = vld [vmem:[%s9 + $0x18] sm:$0xff]
    %v2814 = vld [vmem:[%s9 + $0x20] sm:$0xff]
    %v2815 = vld [vmem:[%s9 + $0x28] sm:$0xff]
    %v2816 = vld [vmem:[%s9 + $0x30] sm:$0xff]
    %v2817 = vld [vmem:[%s9 + $0x38] sm:$0xff]
    %v2818 = vld [vmem:[%s9 + $0x40] sm:$0xff]
    %v2819 = vld [vmem:[%s9 + $0x48] sm:$0xff]
    %v2820 = vld [vmem:[%s9 + $0x50] sm:$0xff]
    %v2821 = vld [vmem:[%s9 + $0x58] sm:$0xff]
    %v2822 = vld [vmem:[%s9 + $0x60] sm:$0xff]
    %v2823 = vld [vmem:[%s9 + $0x68] sm:$0xff]
    %v2824 = vld [vmem:[%s9 + $0x70] sm:$0xff]
    %v2825 = vld [vmem:[%s9 + $0x78] sm:$0xff]
    %v2826 = vld [vmem:[%s9 + $0x80] sm:$0xff]
    %v2827 = vld [vmem:[%s9 + $0x88] sm:$0xff]
    %v2828 = vld [vmem:[%s9 + $0x90] sm:$0xff]
    %v2829 = vld [vmem:[%s9 + $0x98] sm:$0xff]
    %v2830 = vld [vmem:[%s9 + $0xa0] sm:$0xff]
    %v2831 = vld [vmem:[%s9 + $0xa8] sm:$0xff]
    %v2832 = vld [vmem:[%s9 + $0xb0] sm:$0xff]
    %v2833 = vld [vmem:[%s9 + $0xb8] sm:$0xff]
    %v2834 = vld [vmem:[%s9 + $0xc0] sm:$0xff]
    %v2835 = vld [vmem:[%s9 + $0xc8] sm:$0xff]
    %v2836 = vld [vmem:[%s9 + $0xd0] sm:$0xff]
    %v2837 = vld [vmem:[%s9 + $0xd8] sm:$0xff]
    %v2838 = vld [vmem:[%s9 + $0xe0] sm:$0xff]
    %v2839 = vld [vmem:[%s9 + $0xe8] sm:$0xff]
    %v2840 = vld [vmem:[%s9 + $0xf0] sm:$0xff]
    %v2841 = vld [vmem:[%s9 + $0xf8] sm:$0xff]
    %v2842 = vld [vmem:[%s9 + $0x100] sm:$0xff]
    %v2843 = vld [vmem:[%s9 + $0x108] sm:$0xff]
    %v2844 = vld [vmem:[%s9 + $0x110] sm:$0xff]
    %v2845 = vld [vmem:[%s9 + $0x118] sm:$0xff]
    %v2846 = vld [vmem:[%s9 + $0x120] sm:$0xff]
    %v2847 = vld [vmem:[%s9 + $0x128] sm:$0xff]
    %v2848 = vld [vmem:[%s9 + $0x130] sm:$0xff]
    %v2849 = vld [vmem:[%s9 + $0x138] sm:$0xff]
    %v2850 = vld [vmem:[%s9 + $0x140] sm:$0xff]
    %v2851 = vld [vmem:[%s9 + $0x148] sm:$0xff]
    %v2852 = vld [vmem:[%s9 + $0x150] sm:$0xff]
    %v2853 = vld [vmem:[%s9 + $0x158] sm:$0xff]
    %v2854 = vld [vmem:[%s9 + $0x160] sm:$0xff]
    %v2855 = vld [vmem:[%s9 + $0x168] sm:$0xff]
    %v2856 = vld [vmem:[%s9 + $0x170] sm:$0xff]
    %v2857 = vld [vmem:[%s9 + $0x178] sm:$0xff]
    %v2858 = vld [vmem:[%s9 + $0x180] sm:$0xff]
    %v2859 = vld [vmem:[%s9 + $0x188] sm:$0xff]
    %v2860 = vld [vmem:[%s9 + $0x190] sm:$0xff]
    %v2861 = vld [vmem:[%s9 + $0x198] sm:$0xff]
    %v2862 = vld [vmem:[%s9 + $0x1a0] sm:$0xff]
    %v2863 = vld [vmem:[%s9 + $0x1a8] sm:$0xff]
    %v2864 = vld [vmem:[%s9 + $0x1b0] sm:$0xff]
    %v2865 = vld [vmem:[%s9 + $0x1b8] sm:$0xff]
    %v2866 = vld [vmem:[%s9 + $0x1c0] sm:$0xff]
    %v2867 = vld [vmem:[%s9 + $0x1c8] sm:$0xff]
    %v2868 = vld [vmem:[%s9 + $0x1d0] sm:$0xff]
    %v2869 = vld [vmem:[%s9 + $0x1d8] sm:$0xff]
    %v2870 = vld [vmem:[%s9 + $0x1e0] sm:$0xff]
    %v2871 = vld [vmem:[%s9 + $0x1e8] sm:$0xff]
    %vm2872 = vcmask 916480
    %v2874 = vsel %vm2872, %v2809, 0
    %v2876 = vand.u32 %v2825, 4294901760
    %2877 = vmatpush.msra.mxu0 %v2876
    %v2878 = vand.u32 %v2824, 4294901760
    %2879 = vmatpush.msra.mxu0 %v2878
    %v2880 = vand.u32 %v2823, 4294901760
    %2881 = vmatpush.msra.mxu0 %v2880
    %v2882 = vand.u32 %v2822, 4294901760
    %2883 = vmatpush.msra.mxu0 %v2882
    %v2884 = vand.u32 %v2821, 4294901760
    %2885 = vmatpush.msra.mxu0 %v2884
    %v2886 = vand.u32 %v2820, 4294901760
    %2887 = vmatpush.msra.mxu0 %v2886
    %v2888 = vand.u32 %v2819, 4294901760
    %2889 = vmatpush.msra.mxu0 %v2888
    %v2890 = vand.u32 %v2818, 4294901760
    %2891 = vmatpush.msra.mxu0 %v2890
    %v2892 = vand.u32 %v2817, 4294901760
    %2893 = vmatpush.msra.mxu0 %v2892
    %v2894 = vand.u32 %v2816, 4294901760
    %2895 = vmatpush.msra.mxu0 %v2894
    %v2896 = vand.u32 %v2815, 4294901760
    %2897 = vmatpush.msra.mxu0 %v2896
    %v2898 = vand.u32 %v2814, 4294901760
    %2899 = vmatpush.msra.mxu0 %v2898
    %v2900 = vand.u32 %v2813, 4294901760
    %2901 = vmatpush.msra.mxu0 %v2900
    %v2902 = vand.u32 %v2812, 4294901760
    %2903 = vmatpush.msra.mxu0 %v2902
    %v2904 = vand.u32 %v2811, 4294901760
    %2905 = vmatpush.msra.mxu0 %v2904
    %v2906 = vand.u32 %v2810, 4294901760
    %2907 = vmatpush.msra.mxu0 %v2906
    %v2908 = vand.u32 %v2806, 4294901760
    %v2909 = vsub.f32 %v2806, %v2908
    %v2910 = vand.u32 %v2909, 4294901760
    %v2911 = vsub.f32 %v2909, %v2910
    %v2912 = vand.u32 %v2911, 4294901760
    %2913 = vmatmul.f32.gmra.mxu0 %v2912
    %v2914 = vpop.f32.mrf.mxu0
    %v2915 = vadd.f32 0.0, %v2914
    %2916 = vdwg.mxu0
    %v2917 = vand.u32 %v2825, 4294901760
    %v2918 = vsub.f32 %v2825, %v2917
    %v2919 = vand.u32 %v2918, 4294901760
    %v2920 = vsub.f32 %v2918, %v2919
    %v2921 = vand.u32 %v2920, 4294901760
    %2922 = vmatpush.msra.mxu0 %v2921
    %v2923 = vand.u32 %v2824, 4294901760
    %v2924 = vsub.f32 %v2824, %v2923
    %v2925 = vand.u32 %v2924, 4294901760
    %v2926 = vsub.f32 %v2924, %v2925
    %v2927 = vand.u32 %v2926, 4294901760
    %2928 = vmatpush.msra.mxu0 %v2927
    %v2929 = vand.u32 %v2823, 4294901760
    %v2930 = vsub.f32 %v2823, %v2929
    %v2931 = vand.u32 %v2930, 4294901760
    %v2932 = vsub.f32 %v2930, %v2931
    %v2933 = vand.u32 %v2932, 4294901760
    %2934 = vmatpush.msra.mxu0 %v2933
    %v2935 = vand.u32 %v2822, 4294901760
    %v2936 = vsub.f32 %v2822, %v2935
    %v2937 = vand.u32 %v2936, 4294901760
    %v2938 = vsub.f32 %v2936, %v2937
    %v2939 = vand.u32 %v2938, 4294901760
    %2940 = vmatpush.msra.mxu0 %v2939
    %v2941 = vand.u32 %v2821, 4294901760
    %v2942 = vsub.f32 %v2821, %v2941
    %v2943 = vand.u32 %v2942, 4294901760
    %v2944 = vsub.f32 %v2942, %v2943
    %v2945 = vand.u32 %v2944, 4294901760
    %2946 = vmatpush.msra.mxu0 %v2945
    %v2947 = vand.u32 %v2820, 4294901760
    %v2948 = vsub.f32 %v2820, %v2947
    %v2949 = vand.u32 %v2948, 4294901760
    %v2950 = vsub.f32 %v2948, %v2949
    %v2951 = vand.u32 %v2950, 4294901760
    %2952 = vmatpush.msra.mxu0 %v2951
    %v2953 = vand.u32 %v2819, 4294901760
    %v2954 = vsub.f32 %v2819, %v2953
    %v2955 = vand.u32 %v2954, 4294901760
    %v2956 = vsub.f32 %v2954, %v2955
    %v2957 = vand.u32 %v2956, 4294901760
    %2958 = vmatpush.msra.mxu0 %v2957
    %v2959 = vand.u32 %v2818, 4294901760
    %v2960 = vsub.f32 %v2818, %v2959
    %v2961 = vand.u32 %v2960, 4294901760
    %v2962 = vsub.f32 %v2960, %v2961
    %v2963 = vand.u32 %v2962, 4294901760
    %2964 = vmatpush.msra.mxu0 %v2963
    %v2965 = vand.u32 %v2817, 4294901760
    %v2966 = vsub.f32 %v2817, %v2965
    %v2967 = vand.u32 %v2966, 4294901760
    %v2968 = vsub.f32 %v2966, %v2967
    %v2969 = vand.u32 %v2968, 4294901760
    %2970 = vmatpush.msra.mxu0 %v2969
    %v2971 = vand.u32 %v2816, 4294901760
    %v2972 = vsub.f32 %v2816, %v2971
    %v2973 = vand.u32 %v2972, 4294901760
    %v2974 = vsub.f32 %v2972, %v2973
    %v2975 = vand.u32 %v2974, 4294901760
    %2976 = vmatpush.msra.mxu0 %v2975
    %v2977 = vand.u32 %v2815, 4294901760
    %v2978 = vsub.f32 %v2815, %v2977
    %v2979 = vand.u32 %v2978, 4294901760
    %v2980 = vsub.f32 %v2978, %v2979
    %v2981 = vand.u32 %v2980, 4294901760
    %2982 = vmatpush.msra.mxu0 %v2981
    %v2983 = vand.u32 %v2814, 4294901760
    %v2984 = vsub.f32 %v2814, %v2983
    %v2985 = vand.u32 %v2984, 4294901760
    %v2986 = vsub.f32 %v2984, %v2985
    %v2987 = vand.u32 %v2986, 4294901760
    %2988 = vmatpush.msra.mxu0 %v2987
    %v2989 = vand.u32 %v2813, 4294901760
    %v2990 = vsub.f32 %v2813, %v2989
    %v2991 = vand.u32 %v2990, 4294901760
    %v2992 = vsub.f32 %v2990, %v2991
    %v2993 = vand.u32 %v2992, 4294901760
    %2994 = vmatpush.msra.mxu0 %v2993
    %v2995 = vand.u32 %v2812, 4294901760
    %v2996 = vsub.f32 %v2812, %v2995
    %v2997 = vand.u32 %v2996, 4294901760
    %v2998 = vsub.f32 %v2996, %v2997
    %v2999 = vand.u32 %v2998, 4294901760
    %3000 = vmatpush.msra.mxu0 %v2999
    %v3001 = vand.u32 %v2811, 4294901760
    %v3002 = vsub.f32 %v2811, %v3001
    %v3003 = vand.u32 %v3002, 4294901760
    %v3004 = vsub.f32 %v3002, %v3003
    %v3005 = vand.u32 %v3004, 4294901760
    %3006 = vmatpush.msra.mxu0 %v3005
    %v3007 = vand.u32 %v2810, 4294901760
    %v3008 = vsub.f32 %v2810, %v3007
    %v3009 = vand.u32 %v3008, 4294901760
    %v3010 = vsub.f32 %v3008, %v3009
    %v3011 = vand.u32 %v3010, 4294901760
    %3012 = vmatpush.msra.mxu0 %v3011
    %v3013 = vand.u32 %v2806, 4294901760
    %3014 = vmatmul.f32.gmra.mxu0 %v3013
    %v3015 = vpop.f32.mrf.mxu0
    %v3016 = vadd.f32 %v2915, %v3015
    %3017 = vdwg.mxu0
    %v3018 = vand.u32 %v2825, 4294901760
    %v3019 = vsub.f32 %v2825, %v3018
    %3020 = vmatpush.msra.mxu0 %v3019
    %v3021 = vand.u32 %v2824, 4294901760
    %v3022 = vsub.f32 %v2824, %v3021
    %3023 = vmatpush.msra.mxu0 %v3022
    %v3024 = vand.u32 %v2823, 4294901760
    %v3025 = vsub.f32 %v2823, %v3024
    %3026 = vmatpush.msra.mxu0 %v3025
    %v3027 = vand.u32 %v2822, 4294901760
    %v3028 = vsub.f32 %v2822, %v3027
    %3029 = vmatpush.msra.mxu0 %v3028
    %v3030 = vand.u32 %v2821, 4294901760
    %v3031 = vsub.f32 %v2821, %v3030
    %3032 = vmatpush.msra.mxu0 %v3031
    %v3033 = vand.u32 %v2820, 4294901760
    %v3034 = vsub.f32 %v2820, %v3033
    %3035 = vmatpush.msra.mxu0 %v3034
    %v3036 = vand.u32 %v2819, 4294901760
    %v3037 = vsub.f32 %v2819, %v3036
    %3038 = vmatpush.msra.mxu0 %v3037
    %v3039 = vand.u32 %v2818, 4294901760
    %v3040 = vsub.f32 %v2818, %v3039
    %3041 = vmatpush.msra.mxu0 %v3040
    %v3042 = vand.u32 %v2817, 4294901760
    %v3043 = vsub.f32 %v2817, %v3042
    %3044 = vmatpush.msra.mxu0 %v3043
    %v3045 = vand.u32 %v2816, 4294901760
    %v3046 = vsub.f32 %v2816, %v3045
    %3047 = vmatpush.msra.mxu0 %v3046
    %v3048 = vand.u32 %v2815, 4294901760
    %v3049 = vsub.f32 %v2815, %v3048
    %3050 = vmatpush.msra.mxu0 %v3049
    %v3051 = vand.u32 %v2814, 4294901760
    %v3052 = vsub.f32 %v2814, %v3051
    %3053 = vmatpush.msra.mxu0 %v3052
    %v3054 = vand.u32 %v2813, 4294901760
    %v3055 = vsub.f32 %v2813, %v3054
    %3056 = vmatpush.msra.mxu0 %v3055
    %v3057 = vand.u32 %v2812, 4294901760
    %v3058 = vsub.f32 %v2812, %v3057
    %3059 = vmatpush.msra.mxu0 %v3058
    %v3060 = vand.u32 %v2811, 4294901760
    %v3061 = vsub.f32 %v2811, %v3060
    %3062 = vmatpush.msra.mxu0 %v3061
    %v3063 = vand.u32 %v2810, 4294901760
    %v3064 = vsub.f32 %v2810, %v3063
    %3065 = vmatpush.msra.mxu0 %v3064
    %v3066 = vand.u32 %v2806, 4294901760
    %v3067 = vsub.f32 %v2806, %v3066
    %3068 = vmatmul.f32.gmra.mxu0 %v3067
    %v3069 = vpop.f32.mrf.mxu0
    %v3070 = vadd.f32 %v3016, %v3069
    %3071 = vdwg.mxu0
    %v3072 = vand.u32 %v2825, 4294901760
    %3073 = vmatpush.msra.mxu0 %v3072
    %v3074 = vand.u32 %v2824, 4294901760
    %3075 = vmatpush.msra.mxu0 %v3074
    %v3076 = vand.u32 %v2823, 4294901760
    %3077 = vmatpush.msra.mxu0 %v3076
    %v3078 = vand.u32 %v2822, 4294901760
    %3079 = vmatpush.msra.mxu0 %v3078
    %v3080 = vand.u32 %v2821, 4294901760
    %3081 = vmatpush.msra.mxu0 %v3080
    %v3082 = vand.u32 %v2820, 4294901760
    %3083 = vmatpush.msra.mxu0 %v3082
    %v3084 = vand.u32 %v2819, 4294901760
    %3085 = vmatpush.msra.mxu0 %v3084
    %v3086 = vand.u32 %v2818, 4294901760
    %3087 = vmatpush.msra.mxu0 %v3086
    %v3088 = vand.u32 %v2817, 4294901760
    %3089 = vmatpush.msra.mxu0 %v3088
    %v3090 = vand.u32 %v2816, 4294901760
    %3091 = vmatpush.msra.mxu0 %v3090
    %v3092 = vand.u32 %v2815, 4294901760
    %3093 = vmatpush.msra.mxu0 %v3092
    %v3094 = vand.u32 %v2814, 4294901760
    %3095 = vmatpush.msra.mxu0 %v3094
    %v3096 = vand.u32 %v2813, 4294901760
    %3097 = vmatpush.msra.mxu0 %v3096
    %v3098 = vand.u32 %v2812, 4294901760
    %3099 = vmatpush.msra.mxu0 %v3098
    %v3100 = vand.u32 %v2811, 4294901760
    %3101 = vmatpush.msra.mxu0 %v3100
    %v3102 = vand.u32 %v2810, 4294901760
    %3103 = vmatpush.msra.mxu0 %v3102
    %v3104 = vand.u32 %v2806, 4294901760
    %v3105 = vsub.f32 %v2806, %v3104
    %v3106 = vand.u32 %v3105, 4294901760
    %3107 = vmatmul.f32.gmra.mxu0 %v3106
    %v3108 = vpop.f32.mrf.mxu0
    %v3109 = vadd.f32 %v3070, %v3108
    %3110 = vdwg.mxu0
    %v3111 = vand.u32 %v2825, 4294901760
    %v3112 = vsub.f32 %v2825, %v3111
    %v3113 = vand.u32 %v3112, 4294901760
    %3114 = vmatpush.msra.mxu0 %v3113
    %v3115 = vand.u32 %v2824, 4294901760
    %v3116 = vsub.f32 %v2824, %v3115
    %v3117 = vand.u32 %v3116, 4294901760
    %3118 = vmatpush.msra.mxu0 %v3117
    %v3119 = vand.u32 %v2823, 4294901760
    %v3120 = vsub.f32 %v2823, %v3119
    %v3121 = vand.u32 %v3120, 4294901760
    %3122 = vmatpush.msra.mxu0 %v3121
    %v3123 = vand.u32 %v2822, 4294901760
    %v3124 = vsub.f32 %v2822, %v3123
    %v3125 = vand.u32 %v3124, 4294901760
    %3126 = vmatpush.msra.mxu0 %v3125
    %v3127 = vand.u32 %v2821, 4294901760
    %v3128 = vsub.f32 %v2821, %v3127
    %v3129 = vand.u32 %v3128, 4294901760
    %3130 = vmatpush.msra.mxu0 %v3129
    %v3131 = vand.u32 %v2820, 4294901760
    %v3132 = vsub.f32 %v2820, %v3131
    %v3133 = vand.u32 %v3132, 4294901760
    %3134 = vmatpush.msra.mxu0 %v3133
    %v3135 = vand.u32 %v2819, 4294901760
    %v3136 = vsub.f32 %v2819, %v3135
    %v3137 = vand.u32 %v3136, 4294901760
    %3138 = vmatpush.msra.mxu0 %v3137
    %v3139 = vand.u32 %v2818, 4294901760
    %v3140 = vsub.f32 %v2818, %v3139
    %v3141 = vand.u32 %v3140, 4294901760
    %3142 = vmatpush.msra.mxu0 %v3141
    %v3143 = vand.u32 %v2817, 4294901760
    %v3144 = vsub.f32 %v2817, %v3143
    %v3145 = vand.u32 %v3144, 4294901760
    %3146 = vmatpush.msra.mxu0 %v3145
    %v3147 = vand.u32 %v2816, 4294901760
    %v3148 = vsub.f32 %v2816, %v3147
    %v3149 = vand.u32 %v3148, 4294901760
    %3150 = vmatpush.msra.mxu0 %v3149
    %v3151 = vand.u32 %v2815, 4294901760
    %v3152 = vsub.f32 %v2815, %v3151
    %v3153 = vand.u32 %v3152, 4294901760
    %3154 = vmatpush.msra.mxu0 %v3153
    %v3155 = vand.u32 %v2814, 4294901760
    %v3156 = vsub.f32 %v2814, %v3155
    %v3157 = vand.u32 %v3156, 4294901760
    %3158 = vmatpush.msra.mxu0 %v3157
    %v3159 = vand.u32 %v2813, 4294901760
    %v3160 = vsub.f32 %v2813, %v3159
    %v3161 = vand.u32 %v3160, 4294901760
    %3162 = vmatpush.msra.mxu0 %v3161
    %v3163 = vand.u32 %v2812, 4294901760
    %v3164 = vsub.f32 %v2812, %v3163
    %v3165 = vand.u32 %v3164, 4294901760
    %3166 = vmatpush.msra.mxu0 %v3165
    %v3167 = vand.u32 %v2811, 4294901760
    %v3168 = vsub.f32 %v2811, %v3167
    %v3169 = vand.u32 %v3168, 4294901760
    %3170 = vmatpush.msra.mxu0 %v3169
    %v3171 = vand.u32 %v2810, 4294901760
    %v3172 = vsub.f32 %v2810, %v3171
    %v3173 = vand.u32 %v3172, 4294901760
    %3174 = vmatpush.msra.mxu0 %v3173
    %v3175 = vand.u32 %v2806, 4294901760
    %3176 = vmatmul.f32.gmra.mxu0 %v3175
    %v3177 = vpop.f32.mrf.mxu0
    %v3178 = vadd.f32 %v3109, %v3177
    %3179 = vdwg.mxu0
    %v3180 = vand.u32 %v2825, 4294901760
    %3181 = vmatpush.msra.mxu0 %v3180
    %v3182 = vand.u32 %v2824, 4294901760
    %3183 = vmatpush.msra.mxu0 %v3182
    %v3184 = vand.u32 %v2823, 4294901760
    %3185 = vmatpush.msra.mxu0 %v3184
    %v3186 = vand.u32 %v2822, 4294901760
    %3187 = vmatpush.msra.mxu0 %v3186
    %v3188 = vand.u32 %v2821, 4294901760
    %3189 = vmatpush.msra.mxu0 %v3188
    %v3190 = vand.u32 %v2820, 4294901760
    %3191 = vmatpush.msra.mxu0 %v3190
    %v3192 = vand.u32 %v2819, 4294901760
    %3193 = vmatpush.msra.mxu0 %v3192
    %v3194 = vand.u32 %v2818, 4294901760
    %3195 = vmatpush.msra.mxu0 %v3194
    %v3196 = vand.u32 %v2817, 4294901760
    %3197 = vmatpush.msra.mxu0 %v3196
    %v3198 = vand.u32 %v2816, 4294901760
    %3199 = vmatpush.msra.mxu0 %v3198
    %v3200 = vand.u32 %v2815, 4294901760
    %3201 = vmatpush.msra.mxu0 %v3200
    %v3202 = vand.u32 %v2814, 4294901760
    %3203 = vmatpush.msra.mxu0 %v3202
    %v3204 = vand.u32 %v2813, 4294901760
    %3205 = vmatpush.msra.mxu0 %v3204
    %v3206 = vand.u32 %v2812, 4294901760
    %3207 = vmatpush.msra.mxu0 %v3206
    %v3208 = vand.u32 %v2811, 4294901760
    %3209 = vmatpush.msra.mxu0 %v3208
    %v3210 = vand.u32 %v2810, 4294901760
    %3211 = vmatpush.msra.mxu0 %v3210
    %v3212 = vand.u32 %v2806, 4294901760
    %3213 = vmatmul.f32.gmra.mxu0 %v3212
    %v3214 = vpop.f32.mrf.mxu0
    %v3215 = vadd.f32 %v3178, %v3214
    %3216 = vdwg.mxu0
    %v3217 = vand.u32 %v2841, 4294901760
    %3218 = vmatpush.msra.mxu0 %v3217
    %v3219 = vand.u32 %v2840, 4294901760
    %3220 = vmatpush.msra.mxu0 %v3219
    %v3221 = vand.u32 %v2839, 4294901760
    %3222 = vmatpush.msra.mxu0 %v3221
    %v3223 = vand.u32 %v2838, 4294901760
    %3224 = vmatpush.msra.mxu0 %v3223
    %v3225 = vand.u32 %v2837, 4294901760
    %3226 = vmatpush.msra.mxu0 %v3225
    %v3227 = vand.u32 %v2836, 4294901760
    %3228 = vmatpush.msra.mxu0 %v3227
    %v3229 = vand.u32 %v2835, 4294901760
    %3230 = vmatpush.msra.mxu0 %v3229
    %v3231 = vand.u32 %v2834, 4294901760
    %3232 = vmatpush.msra.mxu0 %v3231
    %v3233 = vand.u32 %v2833, 4294901760
    %3234 = vmatpush.msra.mxu0 %v3233
    %v3235 = vand.u32 %v2832, 4294901760
    %3236 = vmatpush.msra.mxu0 %v3235
    %v3237 = vand.u32 %v2831, 4294901760
    %3238 = vmatpush.msra.mxu0 %v3237
    %v3239 = vand.u32 %v2830, 4294901760
    %3240 = vmatpush.msra.mxu0 %v3239
    %v3241 = vand.u32 %v2829, 4294901760
    %3242 = vmatpush.msra.mxu0 %v3241
    %v3243 = vand.u32 %v2828, 4294901760
    %3244 = vmatpush.msra.mxu0 %v3243
    %v3245 = vand.u32 %v2827, 4294901760
    %3246 = vmatpush.msra.mxu0 %v3245
    %v3247 = vand.u32 %v2826, 4294901760
    %3248 = vmatpush.msra.mxu0 %v3247
    %v3249 = vand.u32 %v2807, 4294901760
    %v3250 = vsub.f32 %v2807, %v3249
    %v3251 = vand.u32 %v3250, 4294901760
    %v3252 = vsub.f32 %v3250, %v3251
    %v3253 = vand.u32 %v3252, 4294901760
    %3254 = vmatmul.f32.gmra.mxu0 %v3253
    %v3255 = vpop.f32.mrf.mxu0
    %v3256 = vadd.f32 %v3215, %v3255
    %3257 = vdwg.mxu0
    %v3258 = vand.u32 %v2841, 4294901760
    %v3259 = vsub.f32 %v2841, %v3258
    %v3260 = vand.u32 %v3259, 4294901760
    %v3261 = vsub.f32 %v3259, %v3260
    %v3262 = vand.u32 %v3261, 4294901760
    %3263 = vmatpush.msra.mxu0 %v3262
    %v3264 = vand.u32 %v2840, 4294901760
    %v3265 = vsub.f32 %v2840, %v3264
    %v3266 = vand.u32 %v3265, 4294901760
    %v3267 = vsub.f32 %v3265, %v3266
    %v3268 = vand.u32 %v3267, 4294901760
    %3269 = vmatpush.msra.mxu0 %v3268
    %v3270 = vand.u32 %v2839, 4294901760
    %v3271 = vsub.f32 %v2839, %v3270
    %v3272 = vand.u32 %v3271, 4294901760
    %v3273 = vsub.f32 %v3271, %v3272
    %v3274 = vand.u32 %v3273, 4294901760
    %3275 = vmatpush.msra.mxu0 %v3274
    %v3276 = vand.u32 %v2838, 4294901760
    %v3277 = vsub.f32 %v2838, %v3276
    %v3278 = vand.u32 %v3277, 4294901760
    %v3279 = vsub.f32 %v3277, %v3278
    %v3280 = vand.u32 %v3279, 4294901760
    %3281 = vmatpush.msra.mxu0 %v3280
    %v3282 = vand.u32 %v2837, 4294901760
    %v3283 = vsub.f32 %v2837, %v3282
    %v3284 = vand.u32 %v3283, 4294901760
    %v3285 = vsub.f32 %v3283, %v3284
    %v3286 = vand.u32 %v3285, 4294901760
    %3287 = vmatpush.msra.mxu0 %v3286
    %v3288 = vand.u32 %v2836, 4294901760
    %v3289 = vsub.f32 %v2836, %v3288
    %v3290 = vand.u32 %v3289, 4294901760
    %v3291 = vsub.f32 %v3289, %v3290
    %v3292 = vand.u32 %v3291, 4294901760
    %3293 = vmatpush.msra.mxu0 %v3292
    %v3294 = vand.u32 %v2835, 4294901760
    %v3295 = vsub.f32 %v2835, %v3294
    %v3296 = vand.u32 %v3295, 4294901760
    %v3297 = vsub.f32 %v3295, %v3296
    %v3298 = vand.u32 %v3297, 4294901760
    %3299 = vmatpush.msra.mxu0 %v3298
    %v3300 = vand.u32 %v2834, 4294901760
    %v3301 = vsub.f32 %v2834, %v3300
    %v3302 = vand.u32 %v3301, 4294901760
    %v3303 = vsub.f32 %v3301, %v3302
    %v3304 = vand.u32 %v3303, 4294901760
    %3305 = vmatpush.msra.mxu0 %v3304
    %v3306 = vand.u32 %v2833, 4294901760
    %v3307 = vsub.f32 %v2833, %v3306
    %v3308 = vand.u32 %v3307, 4294901760
    %v3309 = vsub.f32 %v3307, %v3308
    %v3310 = vand.u32 %v3309, 4294901760
    %3311 = vmatpush.msra.mxu0 %v3310
    %v3312 = vand.u32 %v2832, 4294901760
    %v3313 = vsub.f32 %v2832, %v3312
    %v3314 = vand.u32 %v3313, 4294901760
    %v3315 = vsub.f32 %v3313, %v3314
    %v3316 = vand.u32 %v3315, 4294901760
    %3317 = vmatpush.msra.mxu0 %v3316
    %v3318 = vand.u32 %v2831, 4294901760
    %v3319 = vsub.f32 %v2831, %v3318
    %v3320 = vand.u32 %v3319, 4294901760
    %v3321 = vsub.f32 %v3319, %v3320
    %v3322 = vand.u32 %v3321, 4294901760
    %3323 = vmatpush.msra.mxu0 %v3322
    %v3324 = vand.u32 %v2830, 4294901760
    %v3325 = vsub.f32 %v2830, %v3324
    %v3326 = vand.u32 %v3325, 4294901760
    %v3327 = vsub.f32 %v3325, %v3326
    %v3328 = vand.u32 %v3327, 4294901760
    %3329 = vmatpush.msra.mxu0 %v3328
    %v3330 = vand.u32 %v2829, 4294901760
    %v3331 = vsub.f32 %v2829, %v3330
    %v3332 = vand.u32 %v3331, 4294901760
    %v3333 = vsub.f32 %v3331, %v3332
    %v3334 = vand.u32 %v3333, 4294901760
    %3335 = vmatpush.msra.mxu0 %v3334
    %v3336 = vand.u32 %v2828, 4294901760
    %v3337 = vsub.f32 %v2828, %v3336
    %v3338 = vand.u32 %v3337, 4294901760
    %v3339 = vsub.f32 %v3337, %v3338
    %v3340 = vand.u32 %v3339, 4294901760
    %3341 = vmatpush.msra.mxu0 %v3340
    %v3342 = vand.u32 %v2827, 4294901760
    %v3343 = vsub.f32 %v2827, %v3342
    %v3344 = vand.u32 %v3343, 4294901760
    %v3345 = vsub.f32 %v3343, %v3344
    %v3346 = vand.u32 %v3345, 4294901760
    %3347 = vmatpush.msra.mxu0 %v3346
    %v3348 = vand.u32 %v2826, 4294901760
    %v3349 = vsub.f32 %v2826, %v3348
    %v3350 = vand.u32 %v3349, 4294901760
    %v3351 = vsub.f32 %v3349, %v3350
    %v3352 = vand.u32 %v3351, 4294901760
    %3353 = vmatpush.msra.mxu0 %v3352
    %v3354 = vand.u32 %v2807, 4294901760
    %3355 = vmatmul.f32.gmra.mxu0 %v3354
    %v3356 = vpop.f32.mrf.mxu0
    %v3357 = vadd.f32 %v3256, %v3356
    %3358 = vdwg.mxu0
    %v3359 = vand.u32 %v2841, 4294901760
    %v3360 = vsub.f32 %v2841, %v3359
    %3361 = vmatpush.msra.mxu0 %v3360
    %v3362 = vand.u32 %v2840, 4294901760
    %v3363 = vsub.f32 %v2840, %v3362
    %3364 = vmatpush.msra.mxu0 %v3363
    %v3365 = vand.u32 %v2839, 4294901760
    %v3366 = vsub.f32 %v2839, %v3365
    %3367 = vmatpush.msra.mxu0 %v3366
    %v3368 = vand.u32 %v2838, 4294901760
    %v3369 = vsub.f32 %v2838, %v3368
    %3370 = vmatpush.msra.mxu0 %v3369
    %v3371 = vand.u32 %v2837, 4294901760
    %v3372 = vsub.f32 %v2837, %v3371
    %3373 = vmatpush.msra.mxu0 %v3372
    %v3374 = vand.u32 %v2836, 4294901760
    %v3375 = vsub.f32 %v2836, %v3374
    %3376 = vmatpush.msra.mxu0 %v3375
    %v3377 = vand.u32 %v2835, 4294901760
    %v3378 = vsub.f32 %v2835, %v3377
    %3379 = vmatpush.msra.mxu0 %v3378
    %v3380 = vand.u32 %v2834, 4294901760
    %v3381 = vsub.f32 %v2834, %v3380
    %3382 = vmatpush.msra.mxu0 %v3381
    %v3383 = vand.u32 %v2833, 4294901760
    %v3384 = vsub.f32 %v2833, %v3383
    %3385 = vmatpush.msra.mxu0 %v3384
    %v3386 = vand.u32 %v2832, 4294901760
    %v3387 = vsub.f32 %v2832, %v3386
    %3388 = vmatpush.msra.mxu0 %v3387
    %v3389 = vand.u32 %v2831, 4294901760
    %v3390 = vsub.f32 %v2831, %v3389
    %3391 = vmatpush.msra.mxu0 %v3390
    %v3392 = vand.u32 %v2830, 4294901760
    %v3393 = vsub.f32 %v2830, %v3392
    %3394 = vmatpush.msra.mxu0 %v3393
    %v3395 = vand.u32 %v2829, 4294901760
    %v3396 = vsub.f32 %v2829, %v3395
    %3397 = vmatpush.msra.mxu0 %v3396
    %v3398 = vand.u32 %v2828, 4294901760
    %v3399 = vsub.f32 %v2828, %v3398
    %3400 = vmatpush.msra.mxu0 %v3399
    %v3401 = vand.u32 %v2827, 4294901760
    %v3402 = vsub.f32 %v2827, %v3401
    %3403 = vmatpush.msra.mxu0 %v3402
    %v3404 = vand.u32 %v2826, 4294901760
    %v3405 = vsub.f32 %v2826, %v3404
    %3406 = vmatpush.msra.mxu0 %v3405
    %v3407 = vand.u32 %v2807, 4294901760
    %v3408 = vsub.f32 %v2807, %v3407
    %3409 = vmatmul.f32.gmra.mxu0 %v3408
    %v3410 = vpop.f32.mrf.mxu0
    %v3411 = vadd.f32 %v3357, %v3410
    %3412 = vdwg.mxu0
    %v3413 = vand.u32 %v2841, 4294901760
    %3414 = vmatpush.msra.mxu0 %v3413
    %v3415 = vand.u32 %v2840, 4294901760
    %3416 = vmatpush.msra.mxu0 %v3415
    %v3417 = vand.u32 %v2839, 4294901760
    %3418 = vmatpush.msra.mxu0 %v3417
    %v3419 = vand.u32 %v2838, 4294901760
    %3420 = vmatpush.msra.mxu0 %v3419
    %v3421 = vand.u32 %v2837, 4294901760
    %3422 = vmatpush.msra.mxu0 %v3421
    %v3423 = vand.u32 %v2836, 4294901760
    %3424 = vmatpush.msra.mxu0 %v3423
    %v3425 = vand.u32 %v2835, 4294901760
    %3426 = vmatpush.msra.mxu0 %v3425
    %v3427 = vand.u32 %v2834, 4294901760
    %3428 = vmatpush.msra.mxu0 %v3427
    %v3429 = vand.u32 %v2833, 4294901760
    %3430 = vmatpush.msra.mxu0 %v3429
    %v3431 = vand.u32 %v2832, 4294901760
    %3432 = vmatpush.msra.mxu0 %v3431
    %v3433 = vand.u32 %v2831, 4294901760
    %3434 = vmatpush.msra.mxu0 %v3433
    %v3435 = vand.u32 %v2830, 4294901760
    %3436 = vmatpush.msra.mxu0 %v3435
    %v3437 = vand.u32 %v2829, 4294901760
    %3438 = vmatpush.msra.mxu0 %v3437
    %v3439 = vand.u32 %v2828, 4294901760
    %3440 = vmatpush.msra.mxu0 %v3439
    %v3441 = vand.u32 %v2827, 4294901760
    %3442 = vmatpush.msra.mxu0 %v3441
    %v3443 = vand.u32 %v2826, 4294901760
    %3444 = vmatpush.msra.mxu0 %v3443
    %v3445 = vand.u32 %v2807, 4294901760
    %v3446 = vsub.f32 %v2807, %v3445
    %v3447 = vand.u32 %v3446, 4294901760
    %3448 = vmatmul.f32.gmra.mxu0 %v3447
    %v3449 = vpop.f32.mrf.mxu0
    %v3450 = vadd.f32 %v3411, %v3449
    %3451 = vdwg.mxu0
    %v3452 = vand.u32 %v2841, 4294901760
    %v3453 = vsub.f32 %v2841, %v3452
    %v3454 = vand.u32 %v3453, 4294901760
    %3455 = vmatpush.msra.mxu0 %v3454
    %v3456 = vand.u32 %v2840, 4294901760
    %v3457 = vsub.f32 %v2840, %v3456
    %v3458 = vand.u32 %v3457, 4294901760
    %3459 = vmatpush.msra.mxu0 %v3458
    %v3460 = vand.u32 %v2839, 4294901760
    %v3461 = vsub.f32 %v2839, %v3460
    %v3462 = vand.u32 %v3461, 4294901760
    %3463 = vmatpush.msra.mxu0 %v3462
    %v3464 = vand.u32 %v2838, 4294901760
    %v3465 = vsub.f32 %v2838, %v3464
    %v3466 = vand.u32 %v3465, 4294901760
    %3467 = vmatpush.msra.mxu0 %v3466
    %v3468 = vand.u32 %v2837, 4294901760
    %v3469 = vsub.f32 %v2837, %v3468
    %v3470 = vand.u32 %v3469, 4294901760
    %3471 = vmatpush.msra.mxu0 %v3470
    %v3472 = vand.u32 %v2836, 4294901760
    %v3473 = vsub.f32 %v2836, %v3472
    %v3474 = vand.u32 %v3473, 4294901760
    %3475 = vmatpush.msra.mxu0 %v3474
    %v3476 = vand.u32 %v2835, 4294901760
    %v3477 = vsub.f32 %v2835, %v3476
    %v3478 = vand.u32 %v3477, 4294901760
    %3479 = vmatpush.msra.mxu0 %v3478
    %v3480 = vand.u32 %v2834, 4294901760
    %v3481 = vsub.f32 %v2834, %v3480
    %v3482 = vand.u32 %v3481, 4294901760
    %3483 = vmatpush.msra.mxu0 %v3482
    %v3484 = vand.u32 %v2833, 4294901760
    %v3485 = vsub.f32 %v2833, %v3484
    %v3486 = vand.u32 %v3485, 4294901760
    %3487 = vmatpush.msra.mxu0 %v3486
    %v3488 = vand.u32 %v2832, 4294901760
    %v3489 = vsub.f32 %v2832, %v3488
    %v3490 = vand.u32 %v3489, 4294901760
    %3491 = vmatpush.msra.mxu0 %v3490
    %v3492 = vand.u32 %v2831, 4294901760
    %v3493 = vsub.f32 %v2831, %v3492
    %v3494 = vand.u32 %v3493, 4294901760
    %3495 = vmatpush.msra.mxu0 %v3494
    %v3496 = vand.u32 %v2830, 4294901760
    %v3497 = vsub.f32 %v2830, %v3496
    %v3498 = vand.u32 %v3497, 4294901760
    %3499 = vmatpush.msra.mxu0 %v3498
    %v3500 = vand.u32 %v2829, 4294901760
    %v3501 = vsub.f32 %v2829, %v3500
    %v3502 = vand.u32 %v3501, 4294901760
    %3503 = vmatpush.msra.mxu0 %v3502
    %v3504 = vand.u32 %v2828, 4294901760
    %v3505 = vsub.f32 %v2828, %v3504
    %v3506 = vand.u32 %v3505, 4294901760
    %3507 = vmatpush.msra.mxu0 %v3506
    %v3508 = vand.u32 %v2827, 4294901760
    %v3509 = vsub.f32 %v2827, %v3508
    %v3510 = vand.u32 %v3509, 4294901760
    %3511 = vmatpush.msra.mxu0 %v3510
    %v3512 = vand.u32 %v2826, 4294901760
    %v3513 = vsub.f32 %v2826, %v3512
    %v3514 = vand.u32 %v3513, 4294901760
    %3515 = vmatpush.msra.mxu0 %v3514
    %v3516 = vand.u32 %v2807, 4294901760
    %3517 = vmatmul.f32.gmra.mxu0 %v3516
    %v3518 = vpop.f32.mrf.mxu0
    %v3519 = vadd.f32 %v3450, %v3518
    %3520 = vdwg.mxu0
    %v3521 = vand.u32 %v2841, 4294901760
    %3522 = vmatpush.msra.mxu0 %v3521
    %v3523 = vand.u32 %v2840, 4294901760
    %3524 = vmatpush.msra.mxu0 %v3523
    %v3525 = vand.u32 %v2839, 4294901760
    %3526 = vmatpush.msra.mxu0 %v3525
    %v3527 = vand.u32 %v2838, 4294901760
    %3528 = vmatpush.msra.mxu0 %v3527
    %v3529 = vand.u32 %v2837, 4294901760
    %3530 = vmatpush.msra.mxu0 %v3529
    %v3531 = vand.u32 %v2836, 4294901760
    %3532 = vmatpush.msra.mxu0 %v3531
    %v3533 = vand.u32 %v2835, 4294901760
    %3534 = vmatpush.msra.mxu0 %v3533
    %v3535 = vand.u32 %v2834, 4294901760
    %3536 = vmatpush.msra.mxu0 %v3535
    %v3537 = vand.u32 %v2833, 4294901760
    %3538 = vmatpush.msra.mxu0 %v3537
    %v3539 = vand.u32 %v2832, 4294901760
    %3540 = vmatpush.msra.mxu0 %v3539
    %v3541 = vand.u32 %v2831, 4294901760
    %3542 = vmatpush.msra.mxu0 %v3541
    %v3543 = vand.u32 %v2830, 4294901760
    %3544 = vmatpush.msra.mxu0 %v3543
    %v3545 = vand.u32 %v2829, 4294901760
    %3546 = vmatpush.msra.mxu0 %v3545
    %v3547 = vand.u32 %v2828, 4294901760
    %3548 = vmatpush.msra.mxu0 %v3547
    %v3549 = vand.u32 %v2827, 4294901760
    %3550 = vmatpush.msra.mxu0 %v3549
    %v3551 = vand.u32 %v2826, 4294901760
    %3552 = vmatpush.msra.mxu0 %v3551
    %v3553 = vand.u32 %v2807, 4294901760
    %3554 = vmatmul.f32.gmra.mxu0 %v3553
    %v3555 = vpop.f32.mrf.mxu0
    %v3556 = vadd.f32 %v3519, %v3555
    %3557 = vdwg.mxu0
    %v3558 = vand.u32 %v2857, 4294901760
    %3559 = vmatpush.msra.mxu0 %v3558
    %v3560 = vand.u32 %v2856, 4294901760
    %3561 = vmatpush.msra.mxu0 %v3560
    %v3562 = vand.u32 %v2855, 4294901760
    %3563 = vmatpush.msra.mxu0 %v3562
    %v3564 = vand.u32 %v2854, 4294901760
    %3565 = vmatpush.msra.mxu0 %v3564
    %v3566 = vand.u32 %v2853, 4294901760
    %3567 = vmatpush.msra.mxu0 %v3566
    %v3568 = vand.u32 %v2852, 4294901760
    %3569 = vmatpush.msra.mxu0 %v3568
    %v3570 = vand.u32 %v2851, 4294901760
    %3571 = vmatpush.msra.mxu0 %v3570
    %v3572 = vand.u32 %v2850, 4294901760
    %3573 = vmatpush.msra.mxu0 %v3572
    %v3574 = vand.u32 %v2849, 4294901760
    %3575 = vmatpush.msra.mxu0 %v3574
    %v3576 = vand.u32 %v2848, 4294901760
    %3577 = vmatpush.msra.mxu0 %v3576
    %v3578 = vand.u32 %v2847, 4294901760
    %3579 = vmatpush.msra.mxu0 %v3578
    %v3580 = vand.u32 %v2846, 4294901760
    %3581 = vmatpush.msra.mxu0 %v3580
    %v3582 = vand.u32 %v2845, 4294901760
    %3583 = vmatpush.msra.mxu0 %v3582
    %v3584 = vand.u32 %v2844, 4294901760
    %3585 = vmatpush.msra.mxu0 %v3584
    %v3586 = vand.u32 %v2843, 4294901760
    %3587 = vmatpush.msra.mxu0 %v3586
    %v3588 = vand.u32 %v2842, 4294901760
    %3589 = vmatpush.msra.mxu0 %v3588
    %v3590 = vand.u32 %v2808, 4294901760
    %v3591 = vsub.f32 %v2808, %v3590
    %v3592 = vand.u32 %v3591, 4294901760
    %v3593 = vsub.f32 %v3591, %v3592
    %v3594 = vand.u32 %v3593, 4294901760
    %3595 = vmatmul.f32.gmra.mxu0 %v3594
    %v3596 = vpop.f32.mrf.mxu0
    %v3597 = vadd.f32 %v3556, %v3596
    %3598 = vdwg.mxu0
    %v3599 = vand.u32 %v2857, 4294901760
    %v3600 = vsub.f32 %v2857, %v3599
    %v3601 = vand.u32 %v3600, 4294901760
    %v3602 = vsub.f32 %v3600, %v3601
    %v3603 = vand.u32 %v3602, 4294901760
    %3604 = vmatpush.msra.mxu0 %v3603
    %v3605 = vand.u32 %v2856, 4294901760
    %v3606 = vsub.f32 %v2856, %v3605
    %v3607 = vand.u32 %v3606, 4294901760
    %v3608 = vsub.f32 %v3606, %v3607
    %v3609 = vand.u32 %v3608, 4294901760
    %3610 = vmatpush.msra.mxu0 %v3609
    %v3611 = vand.u32 %v2855, 4294901760
    %v3612 = vsub.f32 %v2855, %v3611
    %v3613 = vand.u32 %v3612, 4294901760
    %v3614 = vsub.f32 %v3612, %v3613
    %v3615 = vand.u32 %v3614, 4294901760
    %3616 = vmatpush.msra.mxu0 %v3615
    %v3617 = vand.u32 %v2854, 4294901760
    %v3618 = vsub.f32 %v2854, %v3617
    %v3619 = vand.u32 %v3618, 4294901760
    %v3620 = vsub.f32 %v3618, %v3619
    %v3621 = vand.u32 %v3620, 4294901760
    %3622 = vmatpush.msra.mxu0 %v3621
    %v3623 = vand.u32 %v2853, 4294901760
    %v3624 = vsub.f32 %v2853, %v3623
    %v3625 = vand.u32 %v3624, 4294901760
    %v3626 = vsub.f32 %v3624, %v3625
    %v3627 = vand.u32 %v3626, 4294901760
    %3628 = vmatpush.msra.mxu0 %v3627
    %v3629 = vand.u32 %v2852, 4294901760
    %v3630 = vsub.f32 %v2852, %v3629
    %v3631 = vand.u32 %v3630, 4294901760
    %v3632 = vsub.f32 %v3630, %v3631
    %v3633 = vand.u32 %v3632, 4294901760
    %3634 = vmatpush.msra.mxu0 %v3633
    %v3635 = vand.u32 %v2851, 4294901760
    %v3636 = vsub.f32 %v2851, %v3635
    %v3637 = vand.u32 %v3636, 4294901760
    %v3638 = vsub.f32 %v3636, %v3637
    %v3639 = vand.u32 %v3638, 4294901760
    %3640 = vmatpush.msra.mxu0 %v3639
    %v3641 = vand.u32 %v2850, 4294901760
    %v3642 = vsub.f32 %v2850, %v3641
    %v3643 = vand.u32 %v3642, 4294901760
    %v3644 = vsub.f32 %v3642, %v3643
    %v3645 = vand.u32 %v3644, 4294901760
    %3646 = vmatpush.msra.mxu0 %v3645
    %v3647 = vand.u32 %v2849, 4294901760
    %v3648 = vsub.f32 %v2849, %v3647
    %v3649 = vand.u32 %v3648, 4294901760
    %v3650 = vsub.f32 %v3648, %v3649
    %v3651 = vand.u32 %v3650, 4294901760
    %3652 = vmatpush.msra.mxu0 %v3651
    %v3653 = vand.u32 %v2848, 4294901760
    %v3654 = vsub.f32 %v2848, %v3653
    %v3655 = vand.u32 %v3654, 4294901760
    %v3656 = vsub.f32 %v3654, %v3655
    %v3657 = vand.u32 %v3656, 4294901760
    %3658 = vmatpush.msra.mxu0 %v3657
    %v3659 = vand.u32 %v2847, 4294901760
    %v3660 = vsub.f32 %v2847, %v3659
    %v3661 = vand.u32 %v3660, 4294901760
    %v3662 = vsub.f32 %v3660, %v3661
    %v3663 = vand.u32 %v3662, 4294901760
    %3664 = vmatpush.msra.mxu0 %v3663
    %v3665 = vand.u32 %v2846, 4294901760
    %v3666 = vsub.f32 %v2846, %v3665
    %v3667 = vand.u32 %v3666, 4294901760
    %v3668 = vsub.f32 %v3666, %v3667
    %v3669 = vand.u32 %v3668, 4294901760
    %3670 = vmatpush.msra.mxu0 %v3669
    %v3671 = vand.u32 %v2845, 4294901760
    %v3672 = vsub.f32 %v2845, %v3671
    %v3673 = vand.u32 %v3672, 4294901760
    %v3674 = vsub.f32 %v3672, %v3673
    %v3675 = vand.u32 %v3674, 4294901760
    %3676 = vmatpush.msra.mxu0 %v3675
    %v3677 = vand.u32 %v2844, 4294901760
    %v3678 = vsub.f32 %v2844, %v3677
    %v3679 = vand.u32 %v3678, 4294901760
    %v3680 = vsub.f32 %v3678, %v3679
    %v3681 = vand.u32 %v3680, 4294901760
    %3682 = vmatpush.msra.mxu0 %v3681
    %v3683 = vand.u32 %v2843, 4294901760
    %v3684 = vsub.f32 %v2843, %v3683
    %v3685 = vand.u32 %v3684, 4294901760
    %v3686 = vsub.f32 %v3684, %v3685
    %v3687 = vand.u32 %v3686, 4294901760
    %3688 = vmatpush.msra.mxu0 %v3687
    %v3689 = vand.u32 %v2842, 4294901760
    %v3690 = vsub.f32 %v2842, %v3689
    %v3691 = vand.u32 %v3690, 4294901760
    %v3692 = vsub.f32 %v3690, %v3691
    %v3693 = vand.u32 %v3692, 4294901760
    %3694 = vmatpush.msra.mxu0 %v3693
    %v3695 = vand.u32 %v2808, 4294901760
    %3696 = vmatmul.f32.gmra.mxu0 %v3695
    %v3697 = vpop.f32.mrf.mxu0
    %v3698 = vadd.f32 %v3597, %v3697
    %3699 = vdwg.mxu0
    %v3700 = vand.u32 %v2857, 4294901760
    %v3701 = vsub.f32 %v2857, %v3700
    %3702 = vmatpush.msra.mxu0 %v3701
    %v3703 = vand.u32 %v2856, 4294901760
    %v3704 = vsub.f32 %v2856, %v3703
    %3705 = vmatpush.msra.mxu0 %v3704
    %v3706 = vand.u32 %v2855, 4294901760
    %v3707 = vsub.f32 %v2855, %v3706
    %3708 = vmatpush.msra.mxu0 %v3707
    %v3709 = vand.u32 %v2854, 4294901760
    %v3710 = vsub.f32 %v2854, %v3709
    %3711 = vmatpush.msra.mxu0 %v3710
    %v3712 = vand.u32 %v2853, 4294901760
    %v3713 = vsub.f32 %v2853, %v3712
    %3714 = vmatpush.msra.mxu0 %v3713
    %v3715 = vand.u32 %v2852, 4294901760
    %v3716 = vsub.f32 %v2852, %v3715
    %3717 = vmatpush.msra.mxu0 %v3716
    %v3718 = vand.u32 %v2851, 4294901760
    %v3719 = vsub.f32 %v2851, %v3718
    %3720 = vmatpush.msra.mxu0 %v3719
    %v3721 = vand.u32 %v2850, 4294901760
    %v3722 = vsub.f32 %v2850, %v3721
    %3723 = vmatpush.msra.mxu0 %v3722
    %v3724 = vand.u32 %v2849, 4294901760
    %v3725 = vsub.f32 %v2849, %v3724
    %3726 = vmatpush.msra.mxu0 %v3725
    %v3727 = vand.u32 %v2848, 4294901760
    %v3728 = vsub.f32 %v2848, %v3727
    %3729 = vmatpush.msra.mxu0 %v3728
    %v3730 = vand.u32 %v2847, 4294901760
    %v3731 = vsub.f32 %v2847, %v3730
    %3732 = vmatpush.msra.mxu0 %v3731
    %v3733 = vand.u32 %v2846, 4294901760
    %v3734 = vsub.f32 %v2846, %v3733
    %3735 = vmatpush.msra.mxu0 %v3734
    %v3736 = vand.u32 %v2845, 4294901760
    %v3737 = vsub.f32 %v2845, %v3736
    %3738 = vmatpush.msra.mxu0 %v3737
    %v3739 = vand.u32 %v2844, 4294901760
    %v3740 = vsub.f32 %v2844, %v3739
    %3741 = vmatpush.msra.mxu0 %v3740
    %v3742 = vand.u32 %v2843, 4294901760
    %v3743 = vsub.f32 %v2843, %v3742
    %3744 = vmatpush.msra.mxu0 %v3743
    %v3745 = vand.u32 %v2842, 4294901760
    %v3746 = vsub.f32 %v2842, %v3745
    %3747 = vmatpush.msra.mxu0 %v3746
    %v3748 = vand.u32 %v2808, 4294901760
    %v3749 = vsub.f32 %v2808, %v3748
    %3750 = vmatmul.f32.gmra.mxu0 %v3749
    %v3751 = vpop.f32.mrf.mxu0
    %v3752 = vadd.f32 %v3698, %v3751
    %3753 = vdwg.mxu0
    %v3754 = vand.u32 %v2857, 4294901760
    %3755 = vmatpush.msra.mxu0 %v3754
    %v3756 = vand.u32 %v2856, 4294901760
    %3757 = vmatpush.msra.mxu0 %v3756
    %v3758 = vand.u32 %v2855, 4294901760
    %3759 = vmatpush.msra.mxu0 %v3758
    %v3760 = vand.u32 %v2854, 4294901760
    %3761 = vmatpush.msra.mxu0 %v3760
    %v3762 = vand.u32 %v2853, 4294901760
    %3763 = vmatpush.msra.mxu0 %v3762
    %v3764 = vand.u32 %v2852, 4294901760
    %3765 = vmatpush.msra.mxu0 %v3764
    %v3766 = vand.u32 %v2851, 4294901760
    %3767 = vmatpush.msra.mxu0 %v3766
    %v3768 = vand.u32 %v2850, 4294901760
    %3769 = vmatpush.msra.mxu0 %v3768
    %v3770 = vand.u32 %v2849, 4294901760
    %3771 = vmatpush.msra.mxu0 %v3770
    %v3772 = vand.u32 %v2848, 4294901760
    %3773 = vmatpush.msra.mxu0 %v3772
    %v3774 = vand.u32 %v2847, 4294901760
    %3775 = vmatpush.msra.mxu0 %v3774
    %v3776 = vand.u32 %v2846, 4294901760
    %3777 = vmatpush.msra.mxu0 %v3776
    %v3778 = vand.u32 %v2845, 4294901760
    %3779 = vmatpush.msra.mxu0 %v3778
    %v3780 = vand.u32 %v2844, 4294901760
    %3781 = vmatpush.msra.mxu0 %v3780
    %v3782 = vand.u32 %v2843, 4294901760
    %3783 = vmatpush.msra.mxu0 %v3782
    %v3784 = vand.u32 %v2842, 4294901760
    %3785 = vmatpush.msra.mxu0 %v3784
    %v3786 = vand.u32 %v2808, 4294901760
    %v3787 = vsub.f32 %v2808, %v3786
    %v3788 = vand.u32 %v3787, 4294901760
    %3789 = vmatmul.f32.gmra.mxu0 %v3788
    %v3790 = vpop.f32.mrf.mxu0
    %v3791 = vadd.f32 %v3752, %v3790
    %3792 = vdwg.mxu0
    %v3793 = vand.u32 %v2857, 4294901760
    %v3794 = vsub.f32 %v2857, %v3793
    %v3795 = vand.u32 %v3794, 4294901760
    %3796 = vmatpush.msra.mxu0 %v3795
    %v3797 = vand.u32 %v2856, 4294901760
    %v3798 = vsub.f32 %v2856, %v3797
    %v3799 = vand.u32 %v3798, 4294901760
    %3800 = vmatpush.msra.mxu0 %v3799
    %v3801 = vand.u32 %v2855, 4294901760
    %v3802 = vsub.f32 %v2855, %v3801
    %v3803 = vand.u32 %v3802, 4294901760
    %3804 = vmatpush.msra.mxu0 %v3803
    %v3805 = vand.u32 %v2854, 4294901760
    %v3806 = vsub.f32 %v2854, %v3805
    %v3807 = vand.u32 %v3806, 4294901760
    %3808 = vmatpush.msra.mxu0 %v3807
    %v3809 = vand.u32 %v2853, 4294901760
    %v3810 = vsub.f32 %v2853, %v3809
    %v3811 = vand.u32 %v3810, 4294901760
    %3812 = vmatpush.msra.mxu0 %v3811
    %v3813 = vand.u32 %v2852, 4294901760
    %v3814 = vsub.f32 %v2852, %v3813
    %v3815 = vand.u32 %v3814, 4294901760
    %3816 = vmatpush.msra.mxu0 %v3815
    %v3817 = vand.u32 %v2851, 4294901760
    %v3818 = vsub.f32 %v2851, %v3817
    %v3819 = vand.u32 %v3818, 4294901760
    %3820 = vmatpush.msra.mxu0 %v3819
    %v3821 = vand.u32 %v2850, 4294901760
    %v3822 = vsub.f32 %v2850, %v3821
    %v3823 = vand.u32 %v3822, 4294901760
    %3824 = vmatpush.msra.mxu0 %v3823
    %v3825 = vand.u32 %v2849, 4294901760
    %v3826 = vsub.f32 %v2849, %v3825
    %v3827 = vand.u32 %v3826, 4294901760
    %3828 = vmatpush.msra.mxu0 %v3827
    %v3829 = vand.u32 %v2848, 4294901760
    %v3830 = vsub.f32 %v2848, %v3829
    %v3831 = vand.u32 %v3830, 4294901760
    %3832 = vmatpush.msra.mxu0 %v3831
    %v3833 = vand.u32 %v2847, 4294901760
    %v3834 = vsub.f32 %v2847, %v3833
    %v3835 = vand.u32 %v3834, 4294901760
    %3836 = vmatpush.msra.mxu0 %v3835
    %v3837 = vand.u32 %v2846, 4294901760
    %v3838 = vsub.f32 %v2846, %v3837
    %v3839 = vand.u32 %v3838, 4294901760
    %3840 = vmatpush.msra.mxu0 %v3839
    %v3841 = vand.u32 %v2845, 4294901760
    %v3842 = vsub.f32 %v2845, %v3841
    %v3843 = vand.u32 %v3842, 4294901760
    %3844 = vmatpush.msra.mxu0 %v3843
    %v3845 = vand.u32 %v2844, 4294901760
    %v3846 = vsub.f32 %v2844, %v3845
    %v3847 = vand.u32 %v3846, 4294901760
    %3848 = vmatpush.msra.mxu0 %v3847
    %v3849 = vand.u32 %v2843, 4294901760
    %v3850 = vsub.f32 %v2843, %v3849
    %v3851 = vand.u32 %v3850, 4294901760
    %3852 = vmatpush.msra.mxu0 %v3851
    %v3853 = vand.u32 %v2842, 4294901760
    %v3854 = vsub.f32 %v2842, %v3853
    %v3855 = vand.u32 %v3854, 4294901760
    %3856 = vmatpush.msra.mxu0 %v3855
    %v3857 = vand.u32 %v2808, 4294901760
    %3858 = vmatmul.f32.gmra.mxu0 %v3857
    %v3859 = vpop.f32.mrf.mxu0
    %v3860 = vadd.f32 %v3791, %v3859
    %3861 = vdwg.mxu0
    %v3862 = vand.u32 %v2857, 4294901760
    %3863 = vmatpush.msra.mxu0 %v3862
    %v3864 = vand.u32 %v2856, 4294901760
    %3865 = vmatpush.msra.mxu0 %v3864
    %v3866 = vand.u32 %v2855, 4294901760
    %3867 = vmatpush.msra.mxu0 %v3866
    %v3868 = vand.u32 %v2854, 4294901760
    %3869 = vmatpush.msra.mxu0 %v3868
    %v3870 = vand.u32 %v2853, 4294901760
    %3871 = vmatpush.msra.mxu0 %v3870
    %v3872 = vand.u32 %v2852, 4294901760
    %3873 = vmatpush.msra.mxu0 %v3872
    %v3874 = vand.u32 %v2851, 4294901760
    %3875 = vmatpush.msra.mxu0 %v3874
    %v3876 = vand.u32 %v2850, 4294901760
    %3877 = vmatpush.msra.mxu0 %v3876
    %v3878 = vand.u32 %v2849, 4294901760
    %3879 = vmatpush.msra.mxu0 %v3878
    %v3880 = vand.u32 %v2848, 4294901760
    %3881 = vmatpush.msra.mxu0 %v3880
    %v3882 = vand.u32 %v2847, 4294901760
    %3883 = vmatpush.msra.mxu0 %v3882
    %v3884 = vand.u32 %v2846, 4294901760
    %3885 = vmatpush.msra.mxu0 %v3884
    %v3886 = vand.u32 %v2845, 4294901760
    %3887 = vmatpush.msra.mxu0 %v3886
    %v3888 = vand.u32 %v2844, 4294901760
    %3889 = vmatpush.msra.mxu0 %v3888
    %v3890 = vand.u32 %v2843, 4294901760
    %3891 = vmatpush.msra.mxu0 %v3890
    %v3892 = vand.u32 %v2842, 4294901760
    %3893 = vmatpush.msra.mxu0 %v3892
    %v3894 = vand.u32 %v2808, 4294901760
    %3895 = vmatmul.f32.gmra.mxu0 %v3894
    %v3896 = vpop.f32.mrf.mxu0
    %v3897 = vadd.f32 %v3860, %v3896
    %3898 = vdwg.mxu0
    %3899 = vmatpush.msra.mxu0 0.0
    %3900 = vmatpush.msra.mxu0 0.0
    %v3901 = vand.u32 %v2871, 4294901760
    %3902 = vmatpush.msra.mxu0 %v3901
    %v3903 = vand.u32 %v2870, 4294901760
    %3904 = vmatpush.msra.mxu0 %v3903
    %v3905 = vand.u32 %v2869, 4294901760
    %3906 = vmatpush.msra.mxu0 %v3905
    %v3907 = vand.u32 %v2868, 4294901760
    %3908 = vmatpush.msra.mxu0 %v3907
    %v3909 = vand.u32 %v2867, 4294901760
    %3910 = vmatpush.msra.mxu0 %v3909
    %v3911 = vand.u32 %v2866, 4294901760
    %3912 = vmatpush.msra.mxu0 %v3911
    %v3913 = vand.u32 %v2865, 4294901760
    %3914 = vmatpush.msra.mxu0 %v3913
    %v3915 = vand.u32 %v2864, 4294901760
    %3916 = vmatpush.msra.mxu0 %v3915
    %v3917 = vand.u32 %v2863, 4294901760
    %3918 = vmatpush.msra.mxu0 %v3917
    %v3919 = vand.u32 %v2862, 4294901760
    %3920 = vmatpush.msra.mxu0 %v3919
    %v3921 = vand.u32 %v2861, 4294901760
    %3922 = vmatpush.msra.mxu0 %v3921
    %v3923 = vand.u32 %v2860, 4294901760
    %3924 = vmatpush.msra.mxu0 %v3923
    %v3925 = vand.u32 %v2859, 4294901760
    %3926 = vmatpush.msra.mxu0 %v3925
    %v3927 = vand.u32 %v2858, 4294901760
    %3928 = vmatpush.msra.mxu0 %v3927
    %v3929 = vand.u32 %v2874, 4294901760
    %v3930 = vsub.f32 %v2874, %v3929
    %v3931 = vand.u32 %v3930, 4294901760
    %v3932 = vsub.f32 %v3930, %v3931
    %v3933 = vand.u32 %v3932, 4294901760
    %3934 = vmatmul.f32.gmra.mxu0 %v3933
    %v3935 = vpop.f32.mrf.mxu0
    %v3936 = vadd.f32 %v3897, %v3935
    %3937 = vdwg.mxu0
    %3938 = vmatpush.msra.mxu0 0.0
    %3939 = vmatpush.msra.mxu0 0.0
    %v3940 = vand.u32 %v2871, 4294901760
    %v3941 = vsub.f32 %v2871, %v3940
    %v3942 = vand.u32 %v3941, 4294901760
    %v3943 = vsub.f32 %v3941, %v3942
    %v3944 = vand.u32 %v3943, 4294901760
    %3945 = vmatpush.msra.mxu0 %v3944
    %v3946 = vand.u32 %v2870, 4294901760
    %v3947 = vsub.f32 %v2870, %v3946
    %v3948 = vand.u32 %v3947, 4294901760
    %v3949 = vsub.f32 %v3947, %v3948
    %v3950 = vand.u32 %v3949, 4294901760
    %3951 = vmatpush.msra.mxu0 %v3950
    %v3952 = vand.u32 %v2869, 4294901760
    %v3953 = vsub.f32 %v2869, %v3952
    %v3954 = vand.u32 %v3953, 4294901760
    %v3955 = vsub.f32 %v3953, %v3954
    %v3956 = vand.u32 %v3955, 4294901760
    %3957 = vmatpush.msra.mxu0 %v3956
    %v3958 = vand.u32 %v2868, 4294901760
    %v3959 = vsub.f32 %v2868, %v3958
    %v3960 = vand.u32 %v3959, 4294901760
    %v3961 = vsub.f32 %v3959, %v3960
    %v3962 = vand.u32 %v3961, 4294901760
    %3963 = vmatpush.msra.mxu0 %v3962
    %v3964 = vand.u32 %v2867, 4294901760
    %v3965 = vsub.f32 %v2867, %v3964
    %v3966 = vand.u32 %v3965, 4294901760
    %v3967 = vsub.f32 %v3965, %v3966
    %v3968 = vand.u32 %v3967, 4294901760
    %3969 = vmatpush.msra.mxu0 %v3968
    %v3970 = vand.u32 %v2866, 4294901760
    %v3971 = vsub.f32 %v2866, %v3970
    %v3972 = vand.u32 %v3971, 4294901760
    %v3973 = vsub.f32 %v3971, %v3972
    %v3974 = vand.u32 %v3973, 4294901760
    %3975 = vmatpush.msra.mxu0 %v3974
    %v3976 = vand.u32 %v2865, 4294901760
    %v3977 = vsub.f32 %v2865, %v3976
    %v3978 = vand.u32 %v3977, 4294901760
    %v3979 = vsub.f32 %v3977, %v3978
    %v3980 = vand.u32 %v3979, 4294901760
    %3981 = vmatpush.msra.mxu0 %v3980
    %v3982 = vand.u32 %v2864, 4294901760
    %v3983 = vsub.f32 %v2864, %v3982
    %v3984 = vand.u32 %v3983, 4294901760
    %v3985 = vsub.f32 %v3983, %v3984
    %v3986 = vand.u32 %v3985, 4294901760
    %3987 = vmatpush.msra.mxu0 %v3986
    %v3988 = vand.u32 %v2863, 4294901760
    %v3989 = vsub.f32 %v2863, %v3988
    %v3990 = vand.u32 %v3989, 4294901760
    %v3991 = vsub.f32 %v3989, %v3990
    %v3992 = vand.u32 %v3991, 4294901760
    %3993 = vmatpush.msra.mxu0 %v3992
    %v3994 = vand.u32 %v2862, 4294901760
    %v3995 = vsub.f32 %v2862, %v3994
    %v3996 = vand.u32 %v3995, 4294901760
    %v3997 = vsub.f32 %v3995, %v3996
    %v3998 = vand.u32 %v3997, 4294901760
    %3999 = vmatpush.msra.mxu0 %v3998
    %v4000 = vand.u32 %v2861, 4294901760
    %v4001 = vsub.f32 %v2861, %v4000
    %v4002 = vand.u32 %v4001, 4294901760
    %v4003 = vsub.f32 %v4001, %v4002
    %v4004 = vand.u32 %v4003, 4294901760
    %4005 = vmatpush.msra.mxu0 %v4004
    %v4006 = vand.u32 %v2860, 4294901760
    %v4007 = vsub.f32 %v2860, %v4006
    %v4008 = vand.u32 %v4007, 4294901760
    %v4009 = vsub.f32 %v4007, %v4008
    %v4010 = vand.u32 %v4009, 4294901760
    %4011 = vmatpush.msra.mxu0 %v4010
    %v4012 = vand.u32 %v2859, 4294901760
    %v4013 = vsub.f32 %v2859, %v4012
    %v4014 = vand.u32 %v4013, 4294901760
    %v4015 = vsub.f32 %v4013, %v4014
    %v4016 = vand.u32 %v4015, 4294901760
    %4017 = vmatpush.msra.mxu0 %v4016
    %v4018 = vand.u32 %v2858, 4294901760
    %v4019 = vsub.f32 %v2858, %v4018
    %v4020 = vand.u32 %v4019, 4294901760
    %v4021 = vsub.f32 %v4019, %v4020
    %v4022 = vand.u32 %v4021, 4294901760
    %4023 = vmatpush.msra.mxu0 %v4022
    %v4024 = vand.u32 %v2874, 4294901760
    %4025 = vmatmul.f32.gmra.mxu0 %v4024
    %v4026 = vpop.f32.mrf.mxu0
    %v4027 = vadd.f32 %v3936, %v4026
    %4028 = vdwg.mxu0
    %4029 = vmatpush.msra.mxu0 0.0
    %4030 = vmatpush.msra.mxu0 0.0
    %v4031 = vand.u32 %v2871, 4294901760
    %v4032 = vsub.f32 %v2871, %v4031
    %4033 = vmatpush.msra.mxu0 %v4032
    %v4034 = vand.u32 %v2870, 4294901760
    %v4035 = vsub.f32 %v2870, %v4034
    %4036 = vmatpush.msra.mxu0 %v4035
    %v4037 = vand.u32 %v2869, 4294901760
    %v4038 = vsub.f32 %v2869, %v4037
    %4039 = vmatpush.msra.mxu0 %v4038
    %v4040 = vand.u32 %v2868, 4294901760
    %v4041 = vsub.f32 %v2868, %v4040
    %4042 = vmatpush.msra.mxu0 %v4041
    %v4043 = vand.u32 %v2867, 4294901760
    %v4044 = vsub.f32 %v2867, %v4043
    %4045 = vmatpush.msra.mxu0 %v4044
    %v4046 = vand.u32 %v2866, 4294901760
    %v4047 = vsub.f32 %v2866, %v4046
    %4048 = vmatpush.msra.mxu0 %v4047
    %v4049 = vand.u32 %v2865, 4294901760
    %v4050 = vsub.f32 %v2865, %v4049
    %4051 = vmatpush.msra.mxu0 %v4050
    %v4052 = vand.u32 %v2864, 4294901760
    %v4053 = vsub.f32 %v2864, %v4052
    %4054 = vmatpush.msra.mxu0 %v4053
    %v4055 = vand.u32 %v2863, 4294901760
    %v4056 = vsub.f32 %v2863, %v4055
    %4057 = vmatpush.msra.mxu0 %v4056
    %v4058 = vand.u32 %v2862, 4294901760
    %v4059 = vsub.f32 %v2862, %v4058
    %4060 = vmatpush.msra.mxu0 %v4059
    %v4061 = vand.u32 %v2861, 4294901760
    %v4062 = vsub.f32 %v2861, %v4061
    %4063 = vmatpush.msra.mxu0 %v4062
    %v4064 = vand.u32 %v2860, 4294901760
    %v4065 = vsub.f32 %v2860, %v4064
    %4066 = vmatpush.msra.mxu0 %v4065
    %v4067 = vand.u32 %v2859, 4294901760
    %v4068 = vsub.f32 %v2859, %v4067
    %4069 = vmatpush.msra.mxu0 %v4068
    %v4070 = vand.u32 %v2858, 4294901760
    %v4071 = vsub.f32 %v2858, %v4070
    %4072 = vmatpush.msra.mxu0 %v4071
    %v4073 = vand.u32 %v2874, 4294901760
    %v4074 = vsub.f32 %v2874, %v4073
    %4075 = vmatmul.f32.gmra.mxu0 %v4074
    %v4076 = vpop.f32.mrf.mxu0
    %v4077 = vadd.f32 %v4027, %v4076
    %4078 = vdwg.mxu0
    %4079 = vmatpush.msra.mxu0 0.0
    %4080 = vmatpush.msra.mxu0 0.0
    %v4081 = vand.u32 %v2871, 4294901760
    %4082 = vmatpush.msra.mxu0 %v4081
    %v4083 = vand.u32 %v2870, 4294901760
    %4084 = vmatpush.msra.mxu0 %v4083
    %v4085 = vand.u32 %v2869, 4294901760
    %4086 = vmatpush.msra.mxu0 %v4085
    %v4087 = vand.u32 %v2868, 4294901760
    %4088 = vmatpush.msra.mxu0 %v4087
    %v4089 = vand.u32 %v2867, 4294901760
    %4090 = vmatpush.msra.mxu0 %v4089
    %v4091 = vand.u32 %v2866, 4294901760
    %4092 = vmatpush.msra.mxu0 %v4091
    %v4093 = vand.u32 %v2865, 4294901760
    %4094 = vmatpush.msra.mxu0 %v4093
    %v4095 = vand.u32 %v2864, 4294901760
    %4096 = vmatpush.msra.mxu0 %v4095
    %v4097 = vand.u32 %v2863, 4294901760
    %4098 = vmatpush.msra.mxu0 %v4097
    %v4099 = vand.u32 %v2862, 4294901760
    %4100 = vmatpush.msra.mxu0 %v4099
    %v4101 = vand.u32 %v2861, 4294901760
    %4102 = vmatpush.msra.mxu0 %v4101
    %v4103 = vand.u32 %v2860, 4294901760
    %4104 = vmatpush.msra.mxu0 %v4103
    %v4105 = vand.u32 %v2859, 4294901760
    %4106 = vmatpush.msra.mxu0 %v4105
    %v4107 = vand.u32 %v2858, 4294901760
    %4108 = vmatpush.msra.mxu0 %v4107
    %v4109 = vand.u32 %v2874, 4294901760
    %v4110 = vsub.f32 %v2874, %v4109
    %v4111 = vand.u32 %v4110, 4294901760
    %4112 = vmatmul.f32.gmra.mxu0 %v4111
    %v4113 = vpop.f32.mrf.mxu0
    %v4114 = vadd.f32 %v4077, %v4113
    %4115 = vdwg.mxu0
    %4116 = vmatpush.msra.mxu0 0.0
    %4117 = vmatpush.msra.mxu0 0.0
    %v4118 = vand.u32 %v2871, 4294901760
    %v4119 = vsub.f32 %v2871, %v4118
    %v4120 = vand.u32 %v4119, 4294901760
    %4121 = vmatpush.msra.mxu0 %v4120
    %v4122 = vand.u32 %v2870, 4294901760
    %v4123 = vsub.f32 %v2870, %v4122
    %v4124 = vand.u32 %v4123, 4294901760
    %4125 = vmatpush.msra.mxu0 %v4124
    %v4126 = vand.u32 %v2869, 4294901760
    %v4127 = vsub.f32 %v2869, %v4126
    %v4128 = vand.u32 %v4127, 4294901760
    %4129 = vmatpush.msra.mxu0 %v4128
    %v4130 = vand.u32 %v2868, 4294901760
    %v4131 = vsub.f32 %v2868, %v4130
    %v4132 = vand.u32 %v4131, 4294901760
    %4133 = vmatpush.msra.mxu0 %v4132
    %v4134 = vand.u32 %v2867, 4294901760
    %v4135 = vsub.f32 %v2867, %v4134
    %v4136 = vand.u32 %v4135, 4294901760
    %4137 = vmatpush.msra.mxu0 %v4136
    %v4138 = vand.u32 %v2866, 4294901760
    %v4139 = vsub.f32 %v2866, %v4138
    %v4140 = vand.u32 %v4139, 4294901760
    %4141 = vmatpush.msra.mxu0 %v4140
    %v4142 = vand.u32 %v2865, 4294901760
    %v4143 = vsub.f32 %v2865, %v4142
    %v4144 = vand.u32 %v4143, 4294901760
    %4145 = vmatpush.msra.mxu0 %v4144
    %v4146 = vand.u32 %v2864, 4294901760
    %v4147 = vsub.f32 %v2864, %v4146
    %v4148 = vand.u32 %v4147, 4294901760
    %4149 = vmatpush.msra.mxu0 %v4148
    %v4150 = vand.u32 %v2863, 4294901760
    %v4151 = vsub.f32 %v2863, %v4150
    %v4152 = vand.u32 %v4151, 4294901760
    %4153 = vmatpush.msra.mxu0 %v4152
    %v4154 = vand.u32 %v2862, 4294901760
    %v4155 = vsub.f32 %v2862, %v4154
    %v4156 = vand.u32 %v4155, 4294901760
    %4157 = vmatpush.msra.mxu0 %v4156
    %v4158 = vand.u32 %v2861, 4294901760
    %v4159 = vsub.f32 %v2861, %v4158
    %v4160 = vand.u32 %v4159, 4294901760
    %4161 = vmatpush.msra.mxu0 %v4160
    %v4162 = vand.u32 %v2860, 4294901760
    %v4163 = vsub.f32 %v2860, %v4162
    %v4164 = vand.u32 %v4163, 4294901760
    %4165 = vmatpush.msra.mxu0 %v4164
    %v4166 = vand.u32 %v2859, 4294901760
    %v4167 = vsub.f32 %v2859, %v4166
    %v4168 = vand.u32 %v4167, 4294901760
    %4169 = vmatpush.msra.mxu0 %v4168
    %v4170 = vand.u32 %v2858, 4294901760
    %v4171 = vsub.f32 %v2858, %v4170
    %v4172 = vand.u32 %v4171, 4294901760
    %4173 = vmatpush.msra.mxu0 %v4172
    %v4174 = vand.u32 %v2874, 4294901760
    %4175 = vmatmul.f32.gmra.mxu0 %v4174
    %v4176 = vpop.f32.mrf.mxu0
    %v4177 = vadd.f32 %v4114, %v4176
    %4178 = vdwg.mxu0
    %4179 = vmatpush.msra.mxu0 0.0
    %4180 = vmatpush.msra.mxu0 0.0
    %v4181 = vand.u32 %v2871, 4294901760
    %4182 = vmatpush.msra.mxu0 %v4181
    %v4183 = vand.u32 %v2870, 4294901760
    %4184 = vmatpush.msra.mxu0 %v4183
    %v4185 = vand.u32 %v2869, 4294901760
    %4186 = vmatpush.msra.mxu0 %v4185
    %v4187 = vand.u32 %v2868, 4294901760
    %4188 = vmatpush.msra.mxu0 %v4187
    %v4189 = vand.u32 %v2867, 4294901760
    %4190 = vmatpush.msra.mxu0 %v4189
    %v4191 = vand.u32 %v2866, 4294901760
    %4192 = vmatpush.msra.mxu0 %v4191
    %v4193 = vand.u32 %v2865, 4294901760
    %4194 = vmatpush.msra.mxu0 %v4193
    %v4195 = vand.u32 %v2864, 4294901760
    %4196 = vmatpush.msra.mxu0 %v4195
    %v4197 = vand.u32 %v2863, 4294901760
    %4198 = vmatpush.msra.mxu0 %v4197
    %v4199 = vand.u32 %v2862, 4294901760
    %4200 = vmatpush.msra.mxu0 %v4199
    %v4201 = vand.u32 %v2861, 4294901760
    %4202 = vmatpush.msra.mxu0 %v4201
    %v4203 = vand.u32 %v2860, 4294901760
    %4204 = vmatpush.msra.mxu0 %v4203
    %v4205 = vand.u32 %v2859, 4294901760
    %4206 = vmatpush.msra.mxu0 %v4205
    %v4207 = vand.u32 %v2858, 4294901760
    %4208 = vmatpush.msra.mxu0 %v4207
    %v4209 = vand.u32 %v2874, 4294901760
    %4210 = vmatmul.f32.gmra.mxu0 %v4209
    %v4211 = vpop.f32.mrf.mxu0
    %v4212 = vadd.f32 %v4177, %v4211
    %4213 = vdwg.mxu0
    %v4214 = vadd.f32 %v1292, %v4212
    %4215 = vst.msk [vmem:[#allocation2] sm:$0x3] %vm356, %v4214
    // Predicated region
    $region46: #{tpu_custom_call.1} parent=1 // pred_check
      _
    $region47: #{tpu_custom_call.1} parent=1 // pred_check_branch
      %4217 = sbr.rel (0) target = $region49
    $region48: #{tpu_custom_call.1} parent=1 // pred_region
      %4219 = vsyncadd [#allocation3], 0
      %s4221 = sshll.u32 [#allocation2], 4
      %s4222 = int_to_ptr.vmem [resolvable:$true] %s4221
      %s4223 = sshll.u32 %s11, 4
      %s4224 = int_to_ptr.hbm [resolvable:$true] %s4223
      %4226 = dma.vmem_to_hbm [thread:$0]  %s4222, 32, %s4224, [#allocation3]
    $region49: #{tpu_custom_call.1} parent=1 // pred_fallthru
      _
    // Predicated region
    $region50: #{tpu_custom_call.1} parent=1 // pred_check
      _
    $region51: #{tpu_custom_call.1} parent=1 // pred_check_branch
      %4228 = sbr.rel (0) target = $region53
    $region52: #{tpu_custom_call.1} parent=1 // pred_region
      %4230 = dma.done [#allocation3], 32
    $region53: #{tpu_custom_call.1} parent=1 // pred_fallthru
      _
    %4231 = vsyncpa [#allocation3], 1

</llo_original>
